<compile_context>
chip_gen: v5e
topology: v5e:2x2
jax: 0.10.0
libtpu: 0.0.40
codegen_flags: <defaults>
</compile_context>

<pallas_src>
import functools

import jax
import jax.numpy as jnp
from jax.experimental import pallas as pl
from jax.experimental.pallas import tpu as pltpu

N_HEADS = 4
LEAKY_SLOPE = 0.01  # F.leaky_relu default negative_slope


def _gnn_critic_kernel(x_ref, adjbd_ref, wgc1_ref, wgc2_ref, watt_ref, a12_ref,
                       wfc1_ref, small_ref, q_ref, *, exact_softmax=False):
    f32 = jnp.float32
    TB, N, F_in = x_ref.shape
    H = watt_ref.shape[0]
    n_heads = watt_ref.shape[1] // H

    x = x_ref[...].reshape(TB * N, F_in)       # (TB*N, F_in)
    adj_bd = adjbd_ref[...]                    # (TB*N, TB*N) block-diagonal adjacency

    sp = small_ref[...]                        # packed small params, one VMEM tile
    bgc1 = sp[0:1, :]                          # (1, H)
    bgc2 = sp[1:2, :]                          # (1, H)
    bfc1 = sp[2:3, :]                          # (1, H)
    w2row = sp[3:4, :]                         # fc2 weight as a row, (1, H)
    bfc2 = sp[4:5, 0:1]                        # (1, 1)

    # --- GraphConvolution 1: relu(adj @ (x @ W1) + b1), all graphs in ONE matmul ---
    h = jnp.dot(adj_bd,
                jnp.dot(x, wgc1_ref[...], preferred_element_type=f32),
                preferred_element_type=f32) + bgc1
    h = jnp.maximum(h, 0.0)

    # --- GraphConvolution 2 ---
    h2 = jnp.dot(adj_bd,
                 jnp.dot(h, wgc2_ref[...], preferred_element_type=f32),
                 preferred_element_type=f32) + bgc2
    h2 = jnp.maximum(h2, 0.0)                                           # (TB*N, H)

    # --- GraphAttention: all heads fused ---
    # hh_all[:, i*H:(i+1)*H] == h2 @ W_att[i]  (lane-dense: n_heads*H wide)
    hh_all = jnp.dot(h2, watt_ref[...], preferred_element_type=f32)     # (TB*N, nh*H)
    # scores[:, i] = hh_i @ a1_i ; scores[:, nh+i] = hh_i @ a2_i (block-diag a12)
    scores = jnp.dot(hh_all, a12_ref[...], preferred_element_type=f32)  # (TB*N, 2*nh)

    # e[b,h,i,j] = leaky_relu(a1_h.hh[b,i] + a2_h.hh[b,j]) — one broadcasted add
    # over every graph and head in the block (single small (0,2,1) transpose).
    s_t = jnp.transpose(scores.reshape(TB, N, 2 * n_heads), (0, 2, 1))  # (TB, 2nh, N)
    s1 = s_t[:, :n_heads, :].reshape(TB, n_heads, N, 1)
    s2 = s_t[:, n_heads:, :].reshape(TB, n_heads, 1, N)
    e = s1 + s2                                                         # (TB, nh, N, N)
    e = jnp.where(e >= 0.0, e, LEAKY_SLOPE * e)
    e = e - jnp.max(e, axis=-1, keepdims=True)
    p = jnp.exp(e)
    denom = jnp.sum(p, axis=-1, keepdims=True)
    attn = p * pl.reciprocal(denom, approx=not exact_softmax)           # (TB, nh, N, N)
    # TODO(synk): F.dropout(attention, 0.1) omitted (eval-mode / deterministic kernel).

    # --- fc1 on concat([h2, head_0, ..., head_{nh-1}]) without materializing it ---
    wfc1 = wfc1_ref[...]                                                # ((1+nh)*H, H)
    acc = jnp.dot(h2, wfc1[0:H, :], preferred_element_type=f32)         # (TB*N, H)
    for hd in range(n_heads):                                           # 4 static iters
        at_h = attn[:, hd]                                              # (TB, N, N)
        hh_h = hh_all[:, hd * H:(hd + 1) * H].reshape(TB, N, H)         # (TB, N, H)
        hp_h = jnp.einsum('bij,bjd->bid', at_h, hh_h,
                          preferred_element_type=f32)                   # (TB, N, H)
        acc = acc + jnp.dot(hp_h.reshape(TB * N, H),
                            wfc1[H * (1 + hd):H * (2 + hd), :],
                            preferred_element_type=f32)
    z = jnp.maximum(acc + bfc1, 0.0)                                    # (TB*N, H)

    # --- fc2 as a lane-dense row store ---
    q = jnp.sum(z * w2row, axis=-1).reshape(1, TB * N) + bfc2           # (1, TB*N)
    q_ref[0] = q


def init_params(key, state_dim, action_dim, hidden_dim, n_heads=N_HEADS):
    f_in = state_dim + action_dim
    keys = jax.random.split(key, 8)

    def xavier(k, shape, fan_in, fan_out):
        bound = (6.0 / (fan_in + fan_out)) ** 0.5
        return jax.random.uniform(k, shape, jnp.float32, -bound, bound)

    wgc1 = xavier(keys[0], (f_in, hidden_dim), f_in, hidden_dim)
    bgc1 = jnp.zeros((1, hidden_dim), jnp.float32)            # torch: zeros_
    wgc2 = xavier(keys[1], (hidden_dim, hidden_dim), hidden_dim, hidden_dim)
    bgc2 = jnp.zeros((1, hidden_dim), jnp.float32)

    watt = xavier(keys[2], (n_heads, hidden_dim, hidden_dim), hidden_dim, hidden_dim)
    a = xavier(keys[3], (n_heads, 2 * hidden_dim, 1), 2 * hidden_dim, 1)

    # TODO(synk): the torch module declares fc1 = Linear(hidden*2, hidden) but its own
    # forward feeds it hidden*(1+n_heads) features (4-head concat from GraphAttention);
    # fc1 is sized hidden*(1+n_heads) here so the forward pass is actually runnable.
    fc1_in = hidden_dim * (1 + n_heads)
    wfc1 = xavier(keys[4], (fc1_in, hidden_dim), fc1_in, hidden_dim)    # stored (in, out)
    b1 = 1.0 / (fc1_in ** 0.5)
    bfc1 = jax.random.uniform(keys[6], (1, hidden_dim), jnp.float32, -b1, b1)
    wfc2 = xavier(keys[5], (hidden_dim, 1), hidden_dim, 1)
    b2 = 1.0 / (hidden_dim ** 0.5)
    bfc2 = jax.random.uniform(keys[7], (1, 1), jnp.float32, -b2, b2)
    return (wgc1, bgc1, wgc2, bgc2, watt, a, wfc1, bfc1, wfc2, bfc2)


def pack_params(params):
    """Fuse/pack parameters on the host into the kernel's operand layout."""
    (wgc1, bgc1, wgc2, bgc2, watt, a, wfc1, bfc1, wfc2, bfc2) = params
    n_heads, H, _ = watt.shape

    # all attention heads side by side: (H, n_heads*H)
    watt_all = jnp.transpose(watt, (1, 0, 2)).reshape(H, n_heads * H)

    # block-diagonal packing of a1/a2 so one matmul yields every e1/e2 score
    a1 = a[:, :H, 0]
    a2 = a[:, H:, 0]
    a12 = jnp.zeros((n_heads * H, 2 * n_heads), jnp.float32)
    for i in range(n_heads):
        a12 = a12.at[i * H:(i + 1) * H, i].set(a1[i])
        a12 = a12.at[i * H:(i + 1) * H, n_heads + i].set(a2[i])

    # all tiny operands packed into one (8, H) tile
    small = jnp.zeros((8, H), jnp.float32)
    small = small.at[0, :].set(bgc1[0])
    small = small.at[1, :].set(bgc2[0])
    small = small.at[2, :].set(bfc1[0])
    small = small.at[3, :].set(wfc2[:, 0])
    small = small.at[4, 0].set(bfc2[0, 0])

    return (wgc1.astype(jnp.float32), wgc2.astype(jnp.float32),
            watt_all.astype(jnp.float32), a12.astype(jnp.float32),
            wfc1.astype(jnp.float32), small.astype(jnp.float32))


def _pick_tb(B, N, rows_target=256, rows_cap=1024):
    """Pick the batch block so every grid step presents MXU-sized M.

    v5e/v6e have a single TensorCore, so extra grid steps are a serial loop:
    prefer ONE step with as many rows as the cap allows. Keep exactly 2 steps
    (the axis is marked "parallel" for v7x's two TCs) only when each step still
    gets >= rows_target rows. rows_cap bounds adj_bd = (rows, rows) f32 so its
    double-buffered VMEM stays small even on v7x's 64 MiB.
    """
    if B % 2 == 0 and rows_target <= (B // 2) * N <= rows_cap:
        return B // 2
    fitting = [tb for tb in range(1, B + 1) if B % tb == 0 and tb * N <= rows_cap]
    return max(fitting) if fitting else 1


def gnn_critic_pallas(state, action, adj, params, tb=None, exact_softmax=False):
    x = jnp.concatenate([state, action], axis=-1).astype(jnp.float32)
    B, N, F_in = x.shape
    wgc1, wgc2, watt_all, a12, wfc1, small = pack_params(params)

    if tb is None:
        tb = _pick_tb(B, N)
    assert B % tb == 0
    steps = B // tb
    rows = tb * N

    # Block-diagonal adjacency shared by every graph in a batch block: one big
    # (rows, rows) @ (rows, H) matmul replaces TB per-graph micro-matmuls.
    adj_bd = jnp.kron(jnp.eye(tb, dtype=jnp.float32), adj.astype(jnp.float32))

    def rep2(arr):  # replicated 2-D operand: constant index_map, fetched once
        return pl.BlockSpec(arr.shape, lambda b: (0, 0))

    grid_spec = pl.GridSpec(
        grid=(steps,),
        in_specs=[
            pl.BlockSpec((tb, N, F_in), lambda b: (b, 0, 0)),
            rep2(adj_bd), rep2(wgc1), rep2(wgc2), rep2(watt_all), rep2(a12),
            rep2(wfc1), rep2(small),
        ],
        out_specs=pl.BlockSpec((1, 1, rows), lambda b: (b, 0, 0)),
    )
    kernel = functools.partial(_gnn_critic_kernel, exact_softmax=exact_softmax)
    q = pl.pallas_call(
        kernel,
        grid_spec=grid_spec,
        out_shape=jax.ShapeDtypeStruct((steps, 1, rows), jnp.float32),
        compiler_params=pltpu.CompilerParams(dimension_semantics=("parallel",)),
    )(x, adj_bd, wgc1, wgc2, watt_all, a12, wfc1, small)
    return q.reshape(B, N, 1)


def gnn_critic_ref(state, action, adj, params):
    """Pure-JAX reference mirroring the (repaired) torch forward pass."""
    (wgc1, bgc1, wgc2, bgc2, watt, a, wfc1, bfc1, wfc2, bfc2) = params
    n_heads, H, _ = watt.shape
    x = jnp.concatenate([state, action], axis=-1)
    h = jax.nn.relu(jnp.einsum('nm,bmf->bnf', adj, x @ wgc1) + bgc1)
    h2 = jax.nn.relu(jnp.einsum('nm,bmf->bnf', adj, h @ wgc2) + bgc2)
    heads = []
    for i in range(n_heads):
        hh = h2 @ watt[i]                                 # (B, N, H)
        e1 = hh @ a[i, :H, :]                             # (B, N, 1)
        e2 = jnp.swapaxes(hh @ a[i, H:, :], 1, 2)         # (B, 1, N)
        e = jax.nn.leaky_relu(e1 + e2, LEAKY_SLOPE)
        attn = jax.nn.softmax(e, axis=-1)
        heads.append(attn @ hh)
    x_att = jnp.concatenate(heads, axis=-1)
    x_comb = jnp.concatenate([h2, x_att], axis=-1)
    z = jax.nn.relu(x_comb @ wfc1 + bfc1)
    return z @ wfc2 + bfc2


if __name__ == "__main__":
    B, N = 16, 8
    state_dim, action_dim, hidden_dim = 12, 4, 32

    key = jax.random.PRNGKey(0)
    k_s, k_a, k_adj, k_p = jax.random.split(key, 4)
    state = jax.random.normal(k_s, (B, N, state_dim), jnp.float32)
    action = jax.random.normal(k_a, (B, N, action_dim), jnp.float32)

    # deterministic row-normalized adjacency (with self loops)
    raw = (jax.random.uniform(k_adj, (N, N)) > 0.5).astype(jnp.float32)
    adj = raw + jnp.eye(N, dtype=jnp.float32)
    adj = adj / jnp.sum(adj, axis=-1, keepdims=True)

    params = init_params(k_p, state_dim, action_dim, hidden_dim)

    q = gnn_critic_pallas(state, action, adj, params)
    q = jax.block_until_ready(q)

    q_ref = gnn_critic_ref(state, action, adj, params)
    assert q.shape == (B, N, 1)
    # tolerance relaxed slightly vs 1e-4: the softmax denominator uses the EUP
    # approximate reciprocal (pl.reciprocal(..., approx=True)).
    assert jnp.allclose(q, q_ref, atol=2e-3, rtol=2e-3), "mismatch vs reference"

    print("KERNEL_OK")
</pallas_src>

<mosaic_0001>
module attributes {stable_mosaic.version = 11 : i64} {
  func.func @_gnn_critic_kernel(%arg0: i32, %arg1: memref<16x8x16xf32, #tpu.memory_space<vmem>>, %arg2: memref<128x128xf32, #tpu.memory_space<vmem>>, %arg3: memref<16x32xf32, #tpu.memory_space<vmem>>, %arg4: memref<32x32xf32, #tpu.memory_space<vmem>>, %arg5: memref<32x128xf32, #tpu.memory_space<vmem>>, %arg6: memref<128x8xf32, #tpu.memory_space<vmem>>, %arg7: memref<160x32xf32, #tpu.memory_space<vmem>>, %arg8: memref<8x32xf32, #tpu.memory_space<vmem>>, %arg9: memref<1x1x128xf32, #tpu.memory_space<vmem>>) attributes {dimension_semantics = [#tpu.dimension_semantics<parallel>], iteration_bounds = array<i64: 1>, scalar_prefetch = 0 : i64, scratch_operands = 0 : i64, tpu.core_type = #tpu.core_type<tc>, window_params = [{transform_indices = @transform_0, window_bounds = array<i64: 16, 8, 16>}, {pipeline_mode = #tpu.pipeline_mode<synchronous>, transform_indices = @transform_1, window_bounds = array<i64: 128, 128>}, {pipeline_mode = #tpu.pipeline_mode<synchronous>, transform_indices = @transform_2, window_bounds = array<i64: 16, 32>}, {pipeline_mode = #tpu.pipeline_mode<synchronous>, transform_indices = @transform_3, window_bounds = array<i64: 32, 32>}, {pipeline_mode = #tpu.pipeline_mode<synchronous>, transform_indices = @transform_4, window_bounds = array<i64: 32, 128>}, {pipeline_mode = #tpu.pipeline_mode<synchronous>, transform_indices = @transform_5, window_bounds = array<i64: 128, 8>}, {pipeline_mode = #tpu.pipeline_mode<synchronous>, transform_indices = @transform_6, window_bounds = array<i64: 160, 32>}, {pipeline_mode = #tpu.pipeline_mode<synchronous>, transform_indices = @transform_7, window_bounds = array<i64: 8, 32>}, {transform_indices = @transform_8, window_bounds = array<i64: 1, 1, 128>}]} {
    %c0 = arith.constant 0 : index
    %c0_0 = arith.constant 0 : index
    %c0_1 = arith.constant 0 : index
    %0 = vector.load %arg1[%c0, %c0_0, %c0_1] : memref<16x8x16xf32, #tpu.memory_space<vmem>>, vector<16x8x16xf32>
    %1 = vector.shape_cast %0 : vector<16x8x16xf32> to vector<128x16xf32>
    %c0_2 = arith.constant 0 : index
    %c0_3 = arith.constant 0 : index
    %2 = vector.load %arg2[%c0_2, %c0_3] : memref<128x128xf32, #tpu.memory_space<vmem>>, vector<128x128xf32>
    %c0_4 = arith.constant 0 : index
    %c0_5 = arith.constant 0 : index
    %3 = vector.load %arg8[%c0_4, %c0_5] : memref<8x32xf32, #tpu.memory_space<vmem>>, vector<8x32xf32>
    %4 = vector.extract_strided_slice %3 {offsets = [0, 0], sizes = [1, 32], strides = [1, 1]} : vector<8x32xf32> to vector<1x32xf32>
    %5 = vector.extract_strided_slice %3 {offsets = [1, 0], sizes = [1, 32], strides = [1, 1]} : vector<8x32xf32> to vector<1x32xf32>
    %6 = vector.extract_strided_slice %3 {offsets = [2, 0], sizes = [1, 32], strides = [1, 1]} : vector<8x32xf32> to vector<1x32xf32>
    %7 = vector.extract_strided_slice %3 {offsets = [3, 0], sizes = [1, 32], strides = [1, 1]} : vector<8x32xf32> to vector<1x32xf32>
    %8 = vector.extract_strided_slice %3 {offsets = [4, 0], sizes = [1, 1], strides = [1, 1]} : vector<8x32xf32> to vector<1x1xf32>
    %c0_6 = arith.constant 0 : index
    %c0_7 = arith.constant 0 : index
    %9 = vector.load %arg3[%c0_6, %c0_7] : memref<16x32xf32, #tpu.memory_space<vmem>>, vector<16x32xf32>
    %cst = arith.constant dense<0.000000e+00> : vector<128x32xf32>
    %10 = tpu.matmul %1, %9, %cst {dimension_numbers = #tpu.dot_dimension_numbers<[1], [0], [0], [1], [0, 0, 1, 1], [], []>} : vector<128x16xf32>, vector<16x32xf32>, vector<128x32xf32> -> vector<128x32xf32>
    %cst_8 = arith.constant dense<0.000000e+00> : vector<128x32xf32>
    %11 = tpu.matmul %2, %10, %cst_8 {dimension_numbers = #tpu.dot_dimension_numbers<[1], [0], [0], [1], [0, 0, 1, 1], [], []>} : vector<128x128xf32>, vector<128x32xf32>, vector<128x32xf32> -> vector<128x32xf32>
    %12 = vector.broadcast %4 : vector<1x32xf32> to vector<128x32xf32>
    %13 = arith.addf %11, %12 : vector<128x32xf32>
    %cst_9 = arith.constant 0.000000e+00 : f32
    %14 = vector.broadcast %cst_9 : f32 to vector<128x32xf32>
    %15 = arith.maximumf %13, %14 : vector<128x32xf32>
    %c0_10 = arith.constant 0 : index
    %c0_11 = arith.constant 0 : index
    %16 = vector.load %arg4[%c0_10, %c0_11] : memref<32x32xf32, #tpu.memory_space<vmem>>, vector<32x32xf32>
    %cst_12 = arith.constant dense<0.000000e+00> : vector<128x32xf32>
    %17 = tpu.matmul %15, %16, %cst_12 {dimension_numbers = #tpu.dot_dimension_numbers<[1], [0], [0], [1], [0, 0, 1, 1], [], []>} : vector<128x32xf32>, vector<32x32xf32>, vector<128x32xf32> -> vector<128x32xf32>
    %cst_13 = arith.constant dense<0.000000e+00> : vector<128x32xf32>
    %18 = tpu.matmul %2, %17, %cst_13 {dimension_numbers = #tpu.dot_dimension_numbers<[1], [0], [0], [1], [0, 0, 1, 1], [], []>} : vector<128x128xf32>, vector<128x32xf32>, vector<128x32xf32> -> vector<128x32xf32>
    %19 = vector.broadcast %5 : vector<1x32xf32> to vector<128x32xf32>
    %20 = arith.addf %18, %19 : vector<128x32xf32>
    %cst_14 = arith.constant 0.000000e+00 : f32
    %21 = vector.broadcast %cst_14 : f32 to vector<128x32xf32>
    %22 = arith.maximumf %20, %21 : vector<128x32xf32>
    %c0_15 = arith.constant 0 : index
    %c0_16 = arith.constant 0 : index
    %23 = vector.load %arg5[%c0_15, %c0_16] : memref<32x128xf32, #tpu.memory_space<vmem>>, vector<32x128xf32>
    %cst_17 = arith.constant dense<0.000000e+00> : vector<128x128xf32>
    %24 = tpu.matmul %22, %23, %cst_17 {dimension_numbers = #tpu.dot_dimension_numbers<[1], [0], [0], [1], [0, 0, 1, 1], [], []>} : vector<128x32xf32>, vector<32x128xf32>, vector<128x128xf32> -> vector<128x128xf32>
    %c0_18 = arith.constant 0 : index
    %c0_19 = arith.constant 0 : index
    %25 = vector.load %arg6[%c0_18, %c0_19] : memref<128x8xf32, #tpu.memory_space<vmem>>, vector<128x8xf32>
    %cst_20 = arith.constant dense<0.000000e+00> : vector<128x8xf32>
    %26 = tpu.matmul %24, %25, %cst_20 {dimension_numbers = #tpu.dot_dimension_numbers<[1], [0], [0], [1], [0, 0, 1, 1], [], []>} : vector<128x128xf32>, vector<128x8xf32>, vector<128x8xf32> -> vector<128x8xf32>
    %27 = vector.shape_cast %26 : vector<128x8xf32> to vector<16x8x8xf32>
    %28 = tpu.transpose %27, [0, 2, 1] : vector<16x8x8xf32> -> vector<16x8x8xf32>
    %29 = vector.extract_strided_slice %28 {offsets = [0, 0, 0], sizes = [16, 4, 8], strides = [1, 1, 1]} : vector<16x8x8xf32> to vector<16x4x8xf32>
    %30 = vector.shape_cast %29 : vector<16x4x8xf32> to vector<16x4x8x1xf32>
    %31 = vector.extract_strided_slice %28 {offsets = [0, 4, 0], sizes = [16, 4, 8], strides = [1, 1, 1]} : vector<16x8x8xf32> to vector<16x4x8xf32>
    %32 = vector.shape_cast %31 : vector<16x4x8xf32> to vector<16x4x1x8xf32>
    %33 = vector.broadcast %30 : vector<16x4x8x1xf32> to vector<16x4x8x8xf32>
    %34 = vector.broadcast %32 : vector<16x4x1x8xf32> to vector<16x4x8x8xf32>
    %35 = arith.addf %33, %34 : vector<16x4x8x8xf32>
    %cst_21 = arith.constant 0.000000e+00 : f32
    %36 = vector.broadcast %cst_21 : f32 to vector<16x4x8x8xf32>
    %37 = arith.cmpf oge, %35, %36 : vector<16x4x8x8xf32>
    %cst_22 = arith.constant 0.00999999977 : f32
    %38 = vector.broadcast %cst_22 : f32 to vector<16x4x8x8xf32>
    %39 = arith.mulf %38, %35 : vector<16x4x8x8xf32>
    %40 = arith.select %37, %35, %39 : vector<16x4x8x8xi1>, vector<16x4x8x8xf32>
    %cst_23 = arith.constant dense<0xFF800000> : vector<16x4x8xf32>
    %41 = vector.multi_reduction <maximumf>, %40, %cst_23 [3] : vector<16x4x8x8xf32> to vector<16x4x8xf32>
    %42 = vector.shape_cast %41 : vector<16x4x8xf32> to vector<16x4x8x1xf32>
    %43 = vector.broadcast %42 : vector<16x4x8x1xf32> to vector<16x4x8x8xf32>
    %44 = arith.subf %40, %43 : vector<16x4x8x8xf32>
    %45 = math.exp %44 : vector<16x4x8x8xf32>
    %cst_24 = arith.constant dense<0.000000e+00> : vector<16x4x8xf32>
    %46 = vector.multi_reduction <add>, %45, %cst_24 [3] : vector<16x4x8x8xf32> to vector<16x4x8xf32>
    %47 = vector.shape_cast %46 : vector<16x4x8xf32> to vector<16x4x8x1xf32>
    %48 = tpu.reciprocal %47 {approx = true} : vector<16x4x8x1xf32> -> vector<16x4x8x1xf32>
    %49 = vector.broadcast %48 : vector<16x4x8x1xf32> to vector<16x4x8x8xf32>
    %50 = arith.mulf %45, %49 : vector<16x4x8x8xf32>
    %c0_25 = arith.constant 0 : index
    %c0_26 = arith.constant 0 : index
    %51 = vector.load %arg7[%c0_25, %c0_26] : memref<160x32xf32, #tpu.memory_space<vmem>>, vector<160x32xf32>
    %52 = vector.extract_strided_slice %51 {offsets = [0, 0], sizes = [32, 32], strides = [1, 1]} : vector<160x32xf32> to vector<32x32xf32>
    %cst_27 = arith.constant dense<0.000000e+00> : vector<128x32xf32>
    %53 = tpu.matmul %22, %52, %cst_27 {dimension_numbers = #tpu.dot_dimension_numbers<[1], [0], [0], [1], [0, 0, 1, 1], [], []>} : vector<128x32xf32>, vector<32x32xf32>, vector<128x32xf32> -> vector<128x32xf32>
    %54 = vector.extract_strided_slice %50 {offsets = [0, 0, 0, 0], sizes = [16, 1, 8, 8], strides = [1, 1, 1, 1]} : vector<16x4x8x8xf32> to vector<16x1x8x8xf32>
    %55 = vector.shape_cast %54 : vector<16x1x8x8xf32> to vector<16x8x8xf32>
    %56 = vector.extract_strided_slice %24 {offsets = [0, 0], sizes = [128, 32], strides = [1, 1]} : vector<128x128xf32> to vector<128x32xf32>
    %57 = vector.shape_cast %56 : vector<128x32xf32> to vector<16x8x32xf32>
    "tpu.trace_start"() <{level = 10 : i32, message = "bij,bjd->bid"}> : () -> ()
    %cst_28 = arith.constant dense<0.000000e+00> : vector<16x8x32xf32>
    %58 = tpu.matmul %55, %57, %cst_28 {dimension_numbers = #tpu.dot_dimension_numbers<[2], [1], [1], [2], [0, 0, 0, 1, 1, 2], [0], [0]>} : vector<16x8x8xf32>, vector<16x8x32xf32>, vector<16x8x32xf32> -> vector<16x8x32xf32>
    "tpu.trace_stop"() : () -> ()
    %59 = vector.shape_cast %58 : vector<16x8x32xf32> to vector<128x32xf32>
    %60 = vector.extract_strided_slice %51 {offsets = [32, 0], sizes = [32, 32], strides = [1, 1]} : vector<160x32xf32> to vector<32x32xf32>
    %cst_29 = arith.constant dense<0.000000e+00> : vector<128x32xf32>
    %61 = tpu.matmul %59, %60, %cst_29 {dimension_numbers = #tpu.dot_dimension_numbers<[1], [0], [0], [1], [0, 0, 1, 1], [], []>} : vector<128x32xf32>, vector<32x32xf32>, vector<128x32xf32> -> vector<128x32xf32>
    %62 = arith.addf %53, %61 : vector<128x32xf32>
    %63 = vector.extract_strided_slice %50 {offsets = [0, 1, 0, 0], sizes = [16, 1, 8, 8], strides = [1, 1, 1, 1]} : vector<16x4x8x8xf32> to vector<16x1x8x8xf32>
    %64 = vector.shape_cast %63 : vector<16x1x8x8xf32> to vector<16x8x8xf32>
    %65 = vector.extract_strided_slice %24 {offsets = [0, 32], sizes = [128, 32], strides = [1, 1]} : vector<128x128xf32> to vector<128x32xf32>
    %66 = vector.shape_cast %65 : vector<128x32xf32> to vector<16x8x32xf32>
    "tpu.trace_start"() <{level = 10 : i32, message = "bij,bjd->bid"}> : () -> ()
    %cst_30 = arith.constant dense<0.000000e+00> : vector<16x8x32xf32>
    %67 = tpu.matmul %64, %66, %cst_30 {dimension_numbers = #tpu.dot_dimension_numbers<[2], [1], [1], [2], [0, 0, 0, 1, 1, 2], [0], [0]>} : vector<16x8x8xf32>, vector<16x8x32xf32>, vector<16x8x32xf32> -> vector<16x8x32xf32>
    "tpu.trace_stop"() : () -> ()
    %68 = vector.shape_cast %67 : vector<16x8x32xf32> to vector<128x32xf32>
    %69 = vector.extract_strided_slice %51 {offsets = [64, 0], sizes = [32, 32], strides = [1, 1]} : vector<160x32xf32> to vector<32x32xf32>
    %cst_31 = arith.constant dense<0.000000e+00> : vector<128x32xf32>
    %70 = tpu.matmul %68, %69, %cst_31 {dimension_numbers = #tpu.dot_dimension_numbers<[1], [0], [0], [1], [0, 0, 1, 1], [], []>} : vector<128x32xf32>, vector<32x32xf32>, vector<128x32xf32> -> vector<128x32xf32>
    %71 = arith.addf %62, %70 : vector<128x32xf32>
    %72 = vector.extract_strided_slice %50 {offsets = [0, 2, 0, 0], sizes = [16, 1, 8, 8], strides = [1, 1, 1, 1]} : vector<16x4x8x8xf32> to vector<16x1x8x8xf32>
    %73 = vector.shape_cast %72 : vector<16x1x8x8xf32> to vector<16x8x8xf32>
    %74 = vector.extract_strided_slice %24 {offsets = [0, 64], sizes = [128, 32], strides = [1, 1]} : vector<128x128xf32> to vector<128x32xf32>
    %75 = vector.shape_cast %74 : vector<128x32xf32> to vector<16x8x32xf32>
    "tpu.trace_start"() <{level = 10 : i32, message = "bij,bjd->bid"}> : () -> ()
    %cst_32 = arith.constant dense<0.000000e+00> : vector<16x8x32xf32>
    %76 = tpu.matmul %73, %75, %cst_32 {dimension_numbers = #tpu.dot_dimension_numbers<[2], [1], [1], [2], [0, 0, 0, 1, 1, 2], [0], [0]>} : vector<16x8x8xf32>, vector<16x8x32xf32>, vector<16x8x32xf32> -> vector<16x8x32xf32>
    "tpu.trace_stop"() : () -> ()
    %77 = vector.shape_cast %76 : vector<16x8x32xf32> to vector<128x32xf32>
    %78 = vector.extract_strided_slice %51 {offsets = [96, 0], sizes = [32, 32], strides = [1, 1]} : vector<160x32xf32> to vector<32x32xf32>
    %cst_33 = arith.constant dense<0.000000e+00> : vector<128x32xf32>
    %79 = tpu.matmul %77, %78, %cst_33 {dimension_numbers = #tpu.dot_dimension_numbers<[1], [0], [0], [1], [0, 0, 1, 1], [], []>} : vector<128x32xf32>, vector<32x32xf32>, vector<128x32xf32> -> vector<128x32xf32>
    %80 = arith.addf %71, %79 : vector<128x32xf32>
    %81 = vector.extract_strided_slice %50 {offsets = [0, 3, 0, 0], sizes = [16, 1, 8, 8], strides = [1, 1, 1, 1]} : vector<16x4x8x8xf32> to vector<16x1x8x8xf32>
    %82 = vector.shape_cast %81 : vector<16x1x8x8xf32> to vector<16x8x8xf32>
    %83 = vector.extract_strided_slice %24 {offsets = [0, 96], sizes = [128, 32], strides = [1, 1]} : vector<128x128xf32> to vector<128x32xf32>
    %84 = vector.shape_cast %83 : vector<128x32xf32> to vector<16x8x32xf32>
    "tpu.trace_start"() <{level = 10 : i32, message = "bij,bjd->bid"}> : () -> ()
    %cst_34 = arith.constant dense<0.000000e+00> : vector<16x8x32xf32>
    %85 = tpu.matmul %82, %84, %cst_34 {dimension_numbers = #tpu.dot_dimension_numbers<[2], [1], [1], [2], [0, 0, 0, 1, 1, 2], [0], [0]>} : vector<16x8x8xf32>, vector<16x8x32xf32>, vector<16x8x32xf32> -> vector<16x8x32xf32>
    "tpu.trace_stop"() : () -> ()
    %86 = vector.shape_cast %85 : vector<16x8x32xf32> to vector<128x32xf32>
    %87 = vector.extract_strided_slice %51 {offsets = [128, 0], sizes = [32, 32], strides = [1, 1]} : vector<160x32xf32> to vector<32x32xf32>
    %cst_35 = arith.constant dense<0.000000e+00> : vector<128x32xf32>
    %88 = tpu.matmul %86, %87, %cst_35 {dimension_numbers = #tpu.dot_dimension_numbers<[1], [0], [0], [1], [0, 0, 1, 1], [], []>} : vector<128x32xf32>, vector<32x32xf32>, vector<128x32xf32> -> vector<128x32xf32>
    %89 = arith.addf %80, %88 : vector<128x32xf32>
    %90 = vector.broadcast %6 : vector<1x32xf32> to vector<128x32xf32>
    %91 = arith.addf %89, %90 : vector<128x32xf32>
    %cst_36 = arith.constant 0.000000e+00 : f32
    %92 = vector.broadcast %cst_36 : f32 to vector<128x32xf32>
    %93 = arith.maximumf %91, %92 : vector<128x32xf32>
    %94 = vector.broadcast %7 : vector<1x32xf32> to vector<128x32xf32>
    %95 = arith.mulf %93, %94 : vector<128x32xf32>
    %cst_37 = arith.constant dense<0.000000e+00> : vector<128xf32>
    %96 = vector.multi_reduction <add>, %95, %cst_37 [1] : vector<128x32xf32> to vector<128xf32>
    %97 = vector.shape_cast %96 : vector<128xf32> to vector<1x128xf32>
    %98 = vector.broadcast %8 : vector<1x1xf32> to vector<1x128xf32>
    %99 = arith.addf %97, %98 : vector<1x128xf32>
    %c0_38 = arith.constant 0 : index
    %c0_39 = arith.constant 0 : index
    %c0_40 = arith.constant 0 : index
    %100 = vector.load %arg9[%c0_38, %c0_39, %c0_40] : memref<1x1x128xf32, #tpu.memory_space<vmem>>, vector<1x1x128xf32>
    %101 = vector.shape_cast %100 : vector<1x1x128xf32> to vector<1x128xf32>
    %102 = vector.shape_cast %99 : vector<1x128xf32> to vector<1x1x128xf32>
    tpu.vector_store %arg9[%c0_38, %c0_39, %c0_40], %102 {strides = array<i32>} : memref<1x1x128xf32, #tpu.memory_space<vmem>>, vector<1x1x128xf32>,
    return
  }
  func.func @transform_0(%arg0: i32) -> (i32, i32, i32) {
    %c0_i32 = arith.constant 0 : i32
    %c0_i32_0 = arith.constant 0 : i32
    %c0_i32_1 = arith.constant 0 : i32
    return %arg0, %c0_i32, %c0_i32_0 : i32, i32, i32
  }
  func.func @transform_1(%arg0: i32) -> (i32, i32) {
    %c0_i32 = arith.constant 0 : i32
    %c0_i32_0 = arith.constant 0 : i32
    %c0_i32_1 = arith.constant 0 : i32
    return %c0_i32, %c0_i32_0 : i32, i32
  }
  func.func @transform_2(%arg0: i32) -> (i32, i32) {
    %c0_i32 = arith.constant 0 : i32
    %c0_i32_0 = arith.constant 0 : i32
    %c0_i32_1 = arith.constant 0 : i32
    return %c0_i32, %c0_i32_0 : i32, i32
  }
  func.func @transform_3(%arg0: i32) -> (i32, i32) {
    %c0_i32 = arith.constant 0 : i32
    %c0_i32_0 = arith.constant 0 : i32
    %c0_i32_1 = arith.constant 0 : i32
    return %c0_i32, %c0_i32_0 : i32, i32
  }
  func.func @transform_4(%arg0: i32) -> (i32, i32) {
    %c0_i32 = arith.constant 0 : i32
    %c0_i32_0 = arith.constant 0 : i32
    %c0_i32_1 = arith.constant 0 : i32
    return %c0_i32, %c0_i32_0 : i32, i32
  }
  func.func @transform_5(%arg0: i32) -> (i32, i32) {
    %c0_i32 = arith.constant 0 : i32
    %c0_i32_0 = arith.constant 0 : i32
    %c0_i32_1 = arith.constant 0 : i32
    return %c0_i32, %c0_i32_0 : i32, i32
  }
  func.func @transform_6(%arg0: i32) -> (i32, i32) {
    %c0_i32 = arith.constant 0 : i32
    %c0_i32_0 = arith.constant 0 : i32
    %c0_i32_1 = arith.constant 0 : i32
    return %c0_i32, %c0_i32_0 : i32, i32
  }
  func.func @transform_7(%arg0: i32) -> (i32, i32) {
    %c0_i32 = arith.constant 0 : i32
    %c0_i32_0 = arith.constant 0 : i32
    %c0_i32_1 = arith.constant 0 : i32
    return %c0_i32, %c0_i32_0 : i32, i32
  }
  func.func @transform_8(%arg0: i32) -> (i32, i32, i32) {
    %c0_i32 = arith.constant 0 : i32
    %c0_i32_0 = arith.constant 0 : i32
    %c0_i32_1 = arith.constant 0 : i32
    return %arg0, %c0_i32, %c0_i32_0 : i32, i32, i32
  }
}

</mosaic_0001>

<llo_original>
// kernel: tpu_custom_call.1
$region0: #{tpu_custom_call.1}
  #allocation0 [shape = 'u32[]', space=smem, size = 0x4, offset = 0x4, fixed_abs, tag = 'smem constant byte address 0x4 - core index']
  #allocation1 [shape = 'u32[72,128]{1,0:T(1,128)}', space=vmem, size = 0x9000, scoped, tag = 'internal scratch']
  %s0 = inlined_call_operand.vmem [shape: f32[16,8,16], index: 0, kind: input, shape index: {}]
  %s1 = inlined_call_operand.vmem [shape: f32[128,128], index: 1, kind: input, shape index: {}]
  %s2 = inlined_call_operand.hbm [shape: f32[16,32], index: 2, kind: input, shape index: {}]
  %s3 = inlined_call_operand.vmem [shape: f32[32,32], index: 3, kind: input, shape index: {}]
  %s4 = inlined_call_operand.hbm [shape: f32[32,128], index: 4, kind: input, shape index: {}]
  %s5 = inlined_call_operand.vmem [shape: f32[128,8], index: 5, kind: input, shape index: {}]
  %s6 = inlined_call_operand.vmem [shape: f32[160,32], index: 6, kind: input, shape index: {}]
  %s7 = inlined_call_operand.vmem [shape: f32[8,32], index: 7, kind: input, shape index: {}]
  %s8 = inlined_call_operand.hbm [shape: f32[1,1,128], index: 8, kind: output, shape index: {}]
  %s9 = sld [smem:[#allocation0]]
  $region50: #{tpu_custom_call.1} parent=0
    _
  %s11 = ssub.s32 1, %s9
  %s12 = scalar_select 0, %s11, %s9
  $region1: #{tpu_custom_call.1} parent=0
    #allocation2 [shape = 'u8[8192]{0}', space=vmem, size = 0x2000, scoped, tag = 'input window, operand 2, single buffered']
    #allocation3 [shape = 's32[1]{0}', space=sflag, size = 0x4, scoped, tag = 'scoped memory for tpu_custom_call.1']
    #allocation4 [shape = 's32[1]{0}', space=sflag, size = 0x4, scoped, tag = 'scoped memory for tpu_custom_call.1']
    #allocation5 [shape = 'u8[16384]{0}', space=vmem, size = 0x4000, scoped, tag = 'input window, operand 4, single buffered']
    #allocation6 [shape = 's32[1]{0}', space=sflag, size = 0x4, scoped, tag = 'scoped memory for tpu_custom_call.1']
    #allocation7 [shape = 'u8[512]{0}', space=vmem, size = 0x400, scoped, tag = 'output window, operand 0, single buffered']
    %13 = vsyncpa [#allocation3], 0
    %14 = vsyncpa [#allocation6], 0
    %15 = vsyncpa [#allocation4], 0
    // Predicated region
    $region2: #{tpu_custom_call.1} parent=1 // pred_check
      _
    $region3: #{tpu_custom_call.1} parent=1 // pred_check_branch
      %17 = sbr.rel (0) target = $region5
    $region4: #{tpu_custom_call.1} parent=1 // pred_region
      _
    $region5: #{tpu_custom_call.1} parent=1 // pred_fallthru
      _
    // Predicated region
    $region6: #{tpu_custom_call.1} parent=1 // pred_check
      _
    $region7: #{tpu_custom_call.1} parent=1 // pred_check_branch
      %19 = sbr.rel (0) target = $region9
    $region8: #{tpu_custom_call.1} parent=1 // pred_region
      _
    $region9: #{tpu_custom_call.1} parent=1 // pred_fallthru
      _
    // Predicated region
    $region10: #{tpu_custom_call.1} parent=1 // pred_check
      _
    $region11: #{tpu_custom_call.1} parent=1 // pred_check_branch
      %21 = sbr.rel (0) target = $region13
    $region12: #{tpu_custom_call.1} parent=1 // pred_region
      %23 = vsyncadd [#allocation3], 0
      %s24 = sshll.u32 %s2, 4
      %s25 = int_to_ptr.hbm [resolvable:$true] %s24
      %s26 = sshll.u32 [#allocation2], 4
      %s27 = int_to_ptr.vmem [resolvable:$true] %s26
      %32 = dma.hbm_to_vmem [thread:$0]  %s25, 256, %s27, [#allocation3], 128, 128, 8
    $region13: #{tpu_custom_call.1} parent=1 // pred_fallthru
      _
    // Predicated region
    $region14: #{tpu_custom_call.1} parent=1 // pred_check
      _
    $region15: #{tpu_custom_call.1} parent=1 // pred_check_branch
      %34 = sbr.rel (0) target = $region17
    $region16: #{tpu_custom_call.1} parent=1 // pred_region
      _
    $region17: #{tpu_custom_call.1} parent=1 // pred_fallthru
      _
    // Predicated region
    $region18: #{tpu_custom_call.1} parent=1 // pred_check
      _
    $region19: #{tpu_custom_call.1} parent=1 // pred_check_branch
      %36 = sbr.rel (0) target = $region21
    $region20: #{tpu_custom_call.1} parent=1 // pred_region
      %38 = vsyncadd [#allocation6], 0
      %s39 = sshll.u32 %s4, 4
      %s40 = int_to_ptr.hbm [resolvable:$true] %s39
      %s41 = sshll.u32 [#allocation5], 4
      %s42 = int_to_ptr.vmem [resolvable:$true] %s41
      %47 = dma.hbm_to_vmem [thread:$0]  %s40, 512, %s42, [#allocation6], 128, 128, 8
    $region21: #{tpu_custom_call.1} parent=1 // pred_fallthru
      _
    // Predicated region
    $region22: #{tpu_custom_call.1} parent=1 // pred_check
      _
    $region23: #{tpu_custom_call.1} parent=1 // pred_check_branch
      %49 = sbr.rel (0) target = $region25
    $region24: #{tpu_custom_call.1} parent=1 // pred_region
      _
    $region25: #{tpu_custom_call.1} parent=1 // pred_fallthru
      _
    // Predicated region
    $region26: #{tpu_custom_call.1} parent=1 // pred_check
      _
    $region27: #{tpu_custom_call.1} parent=1 // pred_check_branch
      %51 = sbr.rel (0) target = $region29
    $region28: #{tpu_custom_call.1} parent=1 // pred_region
      _
    $region29: #{tpu_custom_call.1} parent=1 // pred_fallthru
      _
    // Predicated region
    $region30: #{tpu_custom_call.1} parent=1 // pred_check
      _
    $region31: #{tpu_custom_call.1} parent=1 // pred_check_branch
      %53 = sbr.rel (0) target = $region33
    $region32: #{tpu_custom_call.1} parent=1 // pred_region
      _
    $region33: #{tpu_custom_call.1} parent=1 // pred_fallthru
      _
    // Predicated region
    $region34: #{tpu_custom_call.1} parent=1 // pred_check
      _
    $region35: #{tpu_custom_call.1} parent=1 // pred_check_branch
      %55 = sbr.rel (0) target = $region37
    $region36: #{tpu_custom_call.1} parent=1 // pred_region
      %57 = dma.done [#allocation3], 256
    $region37: #{tpu_custom_call.1} parent=1 // pred_fallthru
      _
    // Predicated region
    $region38: #{tpu_custom_call.1} parent=1 // pred_check
      _
    $region39: #{tpu_custom_call.1} parent=1 // pred_check_branch
      %59 = sbr.rel (0) target = $region41
    $region40: #{tpu_custom_call.1} parent=1 // pred_region
      %61 = dma.done [#allocation6], 512
    $region41: #{tpu_custom_call.1} parent=1 // pred_fallthru
      _
    %v62 = vld [vmem:[%s0] sm:$0xff]
    %v63 = vld [vmem:[%s0 + $0x8] sm:$0xff]
    %v64 = vld [vmem:[%s0 + $0x10] sm:$0xff]
    %v65 = vld [vmem:[%s0 + $0x18] sm:$0xff]
    %v66 = vld [vmem:[%s0 + $0x20] sm:$0xff]
    %v67 = vld [vmem:[%s0 + $0x28] sm:$0xff]
    %v68 = vld [vmem:[%s0 + $0x30] sm:$0xff]
    %v69 = vld [vmem:[%s0 + $0x38] sm:$0xff]
    %v70 = vld [vmem:[%s0 + $0x40] sm:$0xff]
    %v71 = vld [vmem:[%s0 + $0x48] sm:$0xff]
    %v72 = vld [vmem:[%s0 + $0x50] sm:$0xff]
    %v73 = vld [vmem:[%s0 + $0x58] sm:$0xff]
    %v74 = vld [vmem:[%s0 + $0x60] sm:$0xff]
    %v75 = vld [vmem:[%s0 + $0x68] sm:$0xff]
    %v76 = vld [vmem:[%s0 + $0x70] sm:$0xff]
    %v77 = vld [vmem:[%s0 + $0x78] sm:$0xff]
    %v78 = vld [vmem:[%s1] sm:$0xff]
    %v79 = vld [vmem:[%s1 + $0x8] sm:$0xff]
    %v80 = vld [vmem:[%s1 + $0x10] sm:$0xff]
    %v81 = vld [vmem:[%s1 + $0x18] sm:$0xff]
    %v82 = vld [vmem:[%s1 + $0x20] sm:$0xff]
    %v83 = vld [vmem:[%s1 + $0x28] sm:$0xff]
    %v84 = vld [vmem:[%s1 + $0x30] sm:$0xff]
    %v85 = vld [vmem:[%s1 + $0x38] sm:$0xff]
    %v86 = vld [vmem:[%s1 + $0x40] sm:$0xff]
    %v87 = vld [vmem:[%s1 + $0x48] sm:$0xff]
    %v88 = vld [vmem:[%s1 + $0x50] sm:$0xff]
    %v89 = vld [vmem:[%s1 + $0x58] sm:$0xff]
    %v90 = vld [vmem:[%s1 + $0x60] sm:$0xff]
    %v91 = vld [vmem:[%s1 + $0x68] sm:$0xff]
    %v92 = vld [vmem:[%s1 + $0x70] sm:$0xff]
    %v93 = vld [vmem:[%s1 + $0x78] sm:$0xff]
    %v94 = vld [vmem:[%s7] sm:$0xff]
    %v95 = vld [vmem:[#allocation2] sm:$0xff]
    %v96 = vld [vmem:[#allocation2 + $0x8] sm:$0xff]
    %vm97 = vcmask 130048
    %v99 = vsel %vm97, %v62, 0
    %v102 = vsel %vm97, %v63, 0
    %v105 = vsel %vm97, %v64, 0
    %v108 = vsel %vm97, %v65, 0
    %v111 = vsel %vm97, %v66, 0
    %v114 = vsel %vm97, %v67, 0
    %v117 = vsel %vm97, %v68, 0
    %v120 = vsel %vm97, %v69, 0
    %v123 = vsel %vm97, %v70, 0
    %v126 = vsel %vm97, %v71, 0
    %v129 = vsel %vm97, %v72, 0
    %v132 = vsel %vm97, %v73, 0
    %v135 = vsel %vm97, %v74, 0
    %v138 = vsel %vm97, %v75, 0
    %v141 = vsel %vm97, %v76, 0
    %v144 = vsel %vm97, %v77, 0
    %146 = vmatpush.msra.mxu0 0.0
    %147 = vmatpush.msra.mxu0 0.0
    %148 = vmatpush.msra.mxu0 0.0
    %149 = vmatpush.msra.mxu0 0.0
    %150 = vmatpush.msra.mxu0 0.0
    %151 = vmatpush.msra.mxu0 0.0
    %152 = vmatpush.msra.mxu0 0.0
    %153 = vmatpush.msra.mxu0 0.0
    %154 = vmatpush.msra.mxu0 0.0
    %155 = vmatpush.msra.mxu0 0.0
    %156 = vmatpush.msra.mxu0 0.0
    %157 = vmatpush.msra.mxu0 0.0
    %158 = vmatpush.msra.mxu0 0.0
    %159 = vmatpush.msra.mxu0 0.0
    %160 = vmatpush.msra.mxu0 %v96
    %161 = vmatpush.msra.mxu0 %v95
    %162 = vmatmul.f32.gmra.mxu0 %v99
    %v163 = vpop.f32.mrf.mxu0
    %v164 = vadd.f32 0.0, %v163
    %165 = vmatmul.f32.gmra.mxu0 %v102
    %v166 = vpop.f32.mrf.mxu0
    %v167 = vadd.f32 0.0, %v166
    %168 = vmatmul.f32.gmra.mxu0 %v105
    %v169 = vpop.f32.mrf.mxu0
    %v170 = vadd.f32 0.0, %v169
    %171 = vmatmul.f32.gmra.mxu0 %v108
    %v172 = vpop.f32.mrf.mxu0
    %v173 = vadd.f32 0.0, %v172
    %174 = vmatmul.f32.gmra.mxu0 %v111
    %v175 = vpop.f32.mrf.mxu0
    %v176 = vadd.f32 0.0, %v175
    %177 = vmatmul.f32.gmra.mxu0 %v114
    %v178 = vpop.f32.mrf.mxu0
    %v179 = vadd.f32 0.0, %v178
    %180 = vmatmul.f32.gmra.mxu0 %v117
    %v181 = vpop.f32.mrf.mxu0
    %v182 = vadd.f32 0.0, %v181
    %183 = vmatmul.f32.gmra.mxu0 %v120
    %v184 = vpop.f32.mrf.mxu0
    %v185 = vadd.f32 0.0, %v184
    %186 = vmatmul.f32.gmra.mxu0 %v123
    %v187 = vpop.f32.mrf.mxu0
    %v188 = vadd.f32 0.0, %v187
    %189 = vmatmul.f32.gmra.mxu0 %v126
    %v190 = vpop.f32.mrf.mxu0
    %v191 = vadd.f32 0.0, %v190
    %192 = vmatmul.f32.gmra.mxu0 %v129
    %v193 = vpop.f32.mrf.mxu0
    %v194 = vadd.f32 0.0, %v193
    %195 = vmatmul.f32.gmra.mxu0 %v132
    %v196 = vpop.f32.mrf.mxu0
    %v197 = vadd.f32 0.0, %v196
    %198 = vmatmul.f32.gmra.mxu0 %v135
    %v199 = vpop.f32.mrf.mxu0
    %v200 = vadd.f32 0.0, %v199
    %201 = vmatmul.f32.gmra.mxu0 %v138
    %v202 = vpop.f32.mrf.mxu0
    %v203 = vadd.f32 0.0, %v202
    %204 = vmatmul.f32.gmra.mxu0 %v141
    %v205 = vpop.f32.mrf.mxu0
    %v206 = vadd.f32 0.0, %v205
    %207 = vmatmul.f32.gmra.mxu0 %v144
    %v208 = vpop.f32.mrf.mxu0
    %v209 = vadd.f32 0.0, %v208
    %210 = vdwg.mxu0
    %v211 = vperm.slane %v94, 0
    %212 = vmatpush.msra.mxu0 %v209
    %213 = vmatpush.msra.mxu0 %v206
    %214 = vmatpush.msra.mxu0 %v203
    %215 = vmatpush.msra.mxu0 %v200
    %216 = vmatpush.msra.mxu0 %v197
    %217 = vmatpush.msra.mxu0 %v194
    %218 = vmatpush.msra.mxu0 %v191
    %219 = vmatpush.msra.mxu0 %v188
    %220 = vmatpush.msra.mxu0 %v185
    %221 = vmatpush.msra.mxu0 %v182
    %222 = vmatpush.msra.mxu0 %v179
    %223 = vmatpush.msra.mxu0 %v176
    %224 = vmatpush.msra.mxu0 %v173
    %225 = vmatpush.msra.mxu0 %v170
    %226 = vmatpush.msra.mxu0 %v167
    %227 = vmatpush.msra.mxu0 %v164
    %228 = vmatmul.f32.gmra.mxu0 %v78
    %v229 = vpop.f32.mrf.mxu0
    %v230 = vadd.f32 %v211, %v229
    %231 = vmatmul.f32.gmra.mxu0 %v79
    %v232 = vpop.f32.mrf.mxu0
    %v233 = vadd.f32 %v211, %v232
    %234 = vmatmul.f32.gmra.mxu0 %v80
    %v235 = vpop.f32.mrf.mxu0
    %v236 = vadd.f32 %v211, %v235
    %237 = vmatmul.f32.gmra.mxu0 %v81
    %v238 = vpop.f32.mrf.mxu0
    %v239 = vadd.f32 %v211, %v238
    %240 = vmatmul.f32.gmra.mxu0 %v82
    %v241 = vpop.f32.mrf.mxu0
    %v242 = vadd.f32 %v211, %v241
    %243 = vmatmul.f32.gmra.mxu0 %v83
    %v244 = vpop.f32.mrf.mxu0
    %v245 = vadd.f32 %v211, %v244
    %246 = vmatmul.f32.gmra.mxu0 %v84
    %v247 = vpop.f32.mrf.mxu0
    %v248 = vadd.f32 %v211, %v247
    %249 = vmatmul.f32.gmra.mxu0 %v85
    %v250 = vpop.f32.mrf.mxu0
    %v251 = vadd.f32 %v211, %v250
    %252 = vmatmul.f32.gmra.mxu0 %v86
    %v253 = vpop.f32.mrf.mxu0
    %v254 = vadd.f32 %v211, %v253
    %255 = vmatmul.f32.gmra.mxu0 %v87
    %v256 = vpop.f32.mrf.mxu0
    %v257 = vadd.f32 %v211, %v256
    %258 = vmatmul.f32.gmra.mxu0 %v88
    %v259 = vpop.f32.mrf.mxu0
    %v260 = vadd.f32 %v211, %v259
    %261 = vmatmul.f32.gmra.mxu0 %v89
    %v262 = vpop.f32.mrf.mxu0
    %v263 = vadd.f32 %v211, %v262
    %264 = vmatmul.f32.gmra.mxu0 %v90
    %v265 = vpop.f32.mrf.mxu0
    %v266 = vadd.f32 %v211, %v265
    %267 = vmatmul.f32.gmra.mxu0 %v91
    %v268 = vpop.f32.mrf.mxu0
    %v269 = vadd.f32 %v211, %v268
    %270 = vmatmul.f32.gmra.mxu0 %v92
    %v271 = vpop.f32.mrf.mxu0
    %v272 = vadd.f32 %v211, %v271
    %273 = vmatmul.f32.gmra.mxu0 %v93
    %v274 = vpop.f32.mrf.mxu0
    %v275 = vadd.f32 %v211, %v274
    %276 = vdwg.mxu0
    %v277 = vmax.f32 %v230, 0.0
    %v278 = vmax.f32 %v233, 0.0
    %v279 = vmax.f32 %v236, 0.0
    %v280 = vmax.f32 %v239, 0.0
    %v281 = vmax.f32 %v242, 0.0
    %v282 = vmax.f32 %v245, 0.0
    %v283 = vmax.f32 %v248, 0.0
    %v284 = vmax.f32 %v251, 0.0
    %v285 = vmax.f32 %v254, 0.0
    %v286 = vmax.f32 %v257, 0.0
    %v287 = vmax.f32 %v260, 0.0
    %v288 = vmax.f32 %v263, 0.0
    %v289 = vmax.f32 %v266, 0.0
    %v290 = vmax.f32 %v269, 0.0
    %v291 = vmax.f32 %v272, 0.0
    %v292 = vmax.f32 %v275, 0.0
    %v293 = vld [vmem:[%s3] sm:$0xff]
    %v294 = vld [vmem:[%s3 + $0x8] sm:$0xff]
    %v295 = vld [vmem:[%s3 + $0x10] sm:$0xff]
    %v296 = vld [vmem:[%s3 + $0x18] sm:$0xff]
    %vm297 = vcmask 261120
    %v299 = vsel %vm297, %v277, 0
    %v302 = vsel %vm297, %v278, 0
    %v305 = vsel %vm297, %v279, 0
    %v308 = vsel %vm297, %v280, 0
    %v311 = vsel %vm297, %v281, 0
    %v314 = vsel %vm297, %v282, 0
    %v317 = vsel %vm297, %v283, 0
    %v320 = vsel %vm297, %v284, 0
    %v323 = vsel %vm297, %v285, 0
    %v326 = vsel %vm297, %v286, 0
    %v329 = vsel %vm297, %v287, 0
    %v332 = vsel %vm297, %v288, 0
    %v335 = vsel %vm297, %v289, 0
    %v338 = vsel %vm297, %v290, 0
    %v341 = vsel %vm297, %v291, 0
    %v344 = vsel %vm297, %v292, 0
    %346 = vmatpush.msra.mxu0 0.0
    %347 = vmatpush.msra.mxu0 0.0
    %348 = vmatpush.msra.mxu0 0.0
    %349 = vmatpush.msra.mxu0 0.0
    %350 = vmatpush.msra.mxu0 0.0
    %351 = vmatpush.msra.mxu0 0.0
    %352 = vmatpush.msra.mxu0 0.0
    %353 = vmatpush.msra.mxu0 0.0
    %354 = vmatpush.msra.mxu0 0.0
    %355 = vmatpush.msra.mxu0 0.0
    %356 = vmatpush.msra.mxu0 0.0
    %357 = vmatpush.msra.mxu0 0.0
    %358 = vmatpush.msra.mxu0 %v296
    %359 = vmatpush.msra.mxu0 %v295
    %360 = vmatpush.msra.mxu0 %v294
    %361 = vmatpush.msra.mxu0 %v293
    %362 = vmatmul.f32.gmra.mxu0 %v299
    %v363 = vpop.f32.mrf.mxu0
    %v364 = vadd.f32 0.0, %v363
    %365 = vmatmul.f32.gmra.mxu0 %v302
    %v366 = vpop.f32.mrf.mxu0
    %v367 = vadd.f32 0.0, %v366
    %368 = vmatmul.f32.gmra.mxu0 %v305
    %v369 = vpop.f32.mrf.mxu0
    %v370 = vadd.f32 0.0, %v369
    %371 = vmatmul.f32.gmra.mxu0 %v308
    %v372 = vpop.f32.mrf.mxu0
    %v373 = vadd.f32 0.0, %v372
    %374 = vmatmul.f32.gmra.mxu0 %v311
    %v375 = vpop.f32.mrf.mxu0
    %v376 = vadd.f32 0.0, %v375
    %377 = vmatmul.f32.gmra.mxu0 %v314
    %v378 = vpop.f32.mrf.mxu0
    %v379 = vadd.f32 0.0, %v378
    %380 = vmatmul.f32.gmra.mxu0 %v317
    %v381 = vpop.f32.mrf.mxu0
    %v382 = vadd.f32 0.0, %v381
    %383 = vmatmul.f32.gmra.mxu0 %v320
    %v384 = vpop.f32.mrf.mxu0
    %v385 = vadd.f32 0.0, %v384
    %386 = vmatmul.f32.gmra.mxu0 %v323
    %v387 = vpop.f32.mrf.mxu0
    %v388 = vadd.f32 0.0, %v387
    %389 = vmatmul.f32.gmra.mxu0 %v326
    %v390 = vpop.f32.mrf.mxu0
    %v391 = vadd.f32 0.0, %v390
    %392 = vmatmul.f32.gmra.mxu0 %v329
    %v393 = vpop.f32.mrf.mxu0
    %v394 = vadd.f32 0.0, %v393
    %395 = vmatmul.f32.gmra.mxu0 %v332
    %v396 = vpop.f32.mrf.mxu0
    %v397 = vadd.f32 0.0, %v396
    %398 = vmatmul.f32.gmra.mxu0 %v335
    %v399 = vpop.f32.mrf.mxu0
    %v400 = vadd.f32 0.0, %v399
    %401 = vmatmul.f32.gmra.mxu0 %v338
    %v402 = vpop.f32.mrf.mxu0
    %v403 = vadd.f32 0.0, %v402
    %404 = vmatmul.f32.gmra.mxu0 %v341
    %v405 = vpop.f32.mrf.mxu0
    %v406 = vadd.f32 0.0, %v405
    %407 = vmatmul.f32.gmra.mxu0 %v344
    %v408 = vpop.f32.mrf.mxu0
    %v409 = vadd.f32 0.0, %v408
    %410 = vdwg.mxu0
    %v411 = vperm.slane %v94, 1
    %412 = vmatpush.msra.mxu0 %v409
    %413 = vmatpush.msra.mxu0 %v406
    %414 = vmatpush.msra.mxu0 %v403
    %415 = vmatpush.msra.mxu0 %v400
    %416 = vmatpush.msra.mxu0 %v397
    %417 = vmatpush.msra.mxu0 %v394
    %418 = vmatpush.msra.mxu0 %v391
    %419 = vmatpush.msra.mxu0 %v388
    %420 = vmatpush.msra.mxu0 %v385
    %421 = vmatpush.msra.mxu0 %v382
    %422 = vmatpush.msra.mxu0 %v379
    %423 = vmatpush.msra.mxu0 %v376
    %424 = vmatpush.msra.mxu0 %v373
    %425 = vmatpush.msra.mxu0 %v370
    %426 = vmatpush.msra.mxu0 %v367
    %427 = vmatpush.msra.mxu0 %v364
    %428 = vmatmul.f32.gmra.mxu0 %v78
    %v429 = vpop.f32.mrf.mxu0
    %v430 = vadd.f32 %v411, %v429
    %431 = vmatmul.f32.gmra.mxu0 %v79
    %v432 = vpop.f32.mrf.mxu0
    %v433 = vadd.f32 %v411, %v432
    %434 = vmatmul.f32.gmra.mxu0 %v80
    %v435 = vpop.f32.mrf.mxu0
    %v436 = vadd.f32 %v411, %v435
    %437 = vmatmul.f32.gmra.mxu0 %v81
    %v438 = vpop.f32.mrf.mxu0
    %v439 = vadd.f32 %v411, %v438
    %440 = vmatmul.f32.gmra.mxu0 %v82
    %v441 = vpop.f32.mrf.mxu0
    %v442 = vadd.f32 %v411, %v441
    %443 = vmatmul.f32.gmra.mxu0 %v83
    %v444 = vpop.f32.mrf.mxu0
    %v445 = vadd.f32 %v411, %v444
    %446 = vmatmul.f32.gmra.mxu0 %v84
    %v447 = vpop.f32.mrf.mxu0
    %v448 = vadd.f32 %v411, %v447
    %449 = vmatmul.f32.gmra.mxu0 %v85
    %v450 = vpop.f32.mrf.mxu0
    %v451 = vadd.f32 %v411, %v450
    %452 = vmatmul.f32.gmra.mxu0 %v86
    %v453 = vpop.f32.mrf.mxu0
    %v454 = vadd.f32 %v411, %v453
    %455 = vmatmul.f32.gmra.mxu0 %v87
    %v456 = vpop.f32.mrf.mxu0
    %v457 = vadd.f32 %v411, %v456
    %458 = vmatmul.f32.gmra.mxu0 %v88
    %v459 = vpop.f32.mrf.mxu0
    %v460 = vadd.f32 %v411, %v459
    %461 = vmatmul.f32.gmra.mxu0 %v89
    %v462 = vpop.f32.mrf.mxu0
    %v463 = vadd.f32 %v411, %v462
    %464 = vmatmul.f32.gmra.mxu0 %v90
    %v465 = vpop.f32.mrf.mxu0
    %v466 = vadd.f32 %v411, %v465
    %467 = vmatmul.f32.gmra.mxu0 %v91
    %v468 = vpop.f32.mrf.mxu0
    %v469 = vadd.f32 %v411, %v468
    %470 = vmatmul.f32.gmra.mxu0 %v92
    %v471 = vpop.f32.mrf.mxu0
    %v472 = vadd.f32 %v411, %v471
    %473 = vmatmul.f32.gmra.mxu0 %v93
    %v474 = vpop.f32.mrf.mxu0
    %v475 = vadd.f32 %v411, %v474
    %476 = vdwg.mxu0
    %v477 = vmax.f32 %v430, 0.0
    %v478 = vmax.f32 %v433, 0.0
    %v479 = vmax.f32 %v436, 0.0
    %v480 = vmax.f32 %v439, 0.0
    %v481 = vmax.f32 %v442, 0.0
    %v482 = vmax.f32 %v445, 0.0
    %v483 = vmax.f32 %v448, 0.0
    %v484 = vmax.f32 %v451, 0.0
    %v485 = vmax.f32 %v454, 0.0
    %v486 = vmax.f32 %v457, 0.0
    %v487 = vmax.f32 %v460, 0.0
    %v488 = vmax.f32 %v463, 0.0
    %v489 = vmax.f32 %v466, 0.0
    %v490 = vmax.f32 %v469, 0.0
    %v491 = vmax.f32 %v472, 0.0
    %v492 = vmax.f32 %v475, 0.0
    %v493 = vld [vmem:[#allocation5] sm:$0xff]
    %v494 = vld [vmem:[#allocation5 + $0x8] sm:$0xff]
    %v495 = vld [vmem:[#allocation5 + $0x10] sm:$0xff]
    %v496 = vld [vmem:[#allocation5 + $0x18] sm:$0xff]
    %v498 = vsel %vm297, %v477, 0
    %v501 = vsel %vm297, %v478, 0
    %v504 = vsel %vm297, %v479, 0
    %v507 = vsel %vm297, %v480, 0
    %v510 = vsel %vm297, %v481, 0
    %v513 = vsel %vm297, %v482, 0
    %v516 = vsel %vm297, %v483, 0
    %v519 = vsel %vm297, %v484, 0
    %v522 = vsel %vm297, %v485, 0
    %v525 = vsel %vm297, %v486, 0
    %v528 = vsel %vm297, %v487, 0
    %v531 = vsel %vm297, %v488, 0
    %v534 = vsel %vm297, %v489, 0
    %v537 = vsel %vm297, %v490, 0
    %v540 = vsel %vm297, %v491, 0
    %v543 = vsel %vm297, %v492, 0
    %545 = vmatpush.msra.mxu0 0.0
    %546 = vmatpush.msra.mxu0 0.0
    %547 = vmatpush.msra.mxu0 0.0
    %548 = vmatpush.msra.mxu0 0.0
    %549 = vmatpush.msra.mxu0 0.0
    %550 = vmatpush.msra.mxu0 0.0
    %551 = vmatpush.msra.mxu0 0.0
    %552 = vmatpush.msra.mxu0 0.0
    %553 = vmatpush.msra.mxu0 0.0
    %554 = vmatpush.msra.mxu0 0.0
    %555 = vmatpush.msra.mxu0 0.0
    %556 = vmatpush.msra.mxu0 0.0
    %557 = vmatpush.msra.mxu0 %v496
    %558 = vmatpush.msra.mxu0 %v495
    %559 = vmatpush.msra.mxu0 %v494
    %560 = vmatpush.msra.mxu0 %v493
    %561 = vmatmul.f32.gmra.mxu0 %v498
    %v562 = vpop.f32.mrf.mxu0
    %v563 = vadd.f32 0.0, %v562
    %564 = vmatmul.f32.gmra.mxu0 %v501
    %v565 = vpop.f32.mrf.mxu0
    %v566 = vadd.f32 0.0, %v565
    %567 = vmatmul.f32.gmra.mxu0 %v504
    %v568 = vpop.f32.mrf.mxu0
    %v569 = vadd.f32 0.0, %v568
    %570 = vmatmul.f32.gmra.mxu0 %v507
    %v571 = vpop.f32.mrf.mxu0
    %v572 = vadd.f32 0.0, %v571
    %573 = vmatmul.f32.gmra.mxu0 %v510
    %v574 = vpop.f32.mrf.mxu0
    %v575 = vadd.f32 0.0, %v574
    %576 = vmatmul.f32.gmra.mxu0 %v513
    %v577 = vpop.f32.mrf.mxu0
    %v578 = vadd.f32 0.0, %v577
    %579 = vmatmul.f32.gmra.mxu0 %v516
    %v580 = vpop.f32.mrf.mxu0
    %v581 = vadd.f32 0.0, %v580
    %582 = vmatmul.f32.gmra.mxu0 %v519
    %v583 = vpop.f32.mrf.mxu0
    %v584 = vadd.f32 0.0, %v583
    %585 = vmatmul.f32.gmra.mxu0 %v522
    %v586 = vpop.f32.mrf.mxu0
    %v587 = vadd.f32 0.0, %v586
    %588 = vmatmul.f32.gmra.mxu0 %v525
    %v589 = vpop.f32.mrf.mxu0
    %v590 = vadd.f32 0.0, %v589
    %591 = vmatmul.f32.gmra.mxu0 %v528
    %v592 = vpop.f32.mrf.mxu0
    %v593 = vadd.f32 0.0, %v592
    %594 = vmatmul.f32.gmra.mxu0 %v531
    %v595 = vpop.f32.mrf.mxu0
    %v596 = vadd.f32 0.0, %v595
    %597 = vmatmul.f32.gmra.mxu0 %v534
    %v598 = vpop.f32.mrf.mxu0
    %v599 = vadd.f32 0.0, %v598
    %600 = vmatmul.f32.gmra.mxu0 %v537
    %v601 = vpop.f32.mrf.mxu0
    %v602 = vadd.f32 0.0, %v601
    %603 = vmatmul.f32.gmra.mxu0 %v540
    %v604 = vpop.f32.mrf.mxu0
    %v605 = vadd.f32 0.0, %v604
    %606 = vmatmul.f32.gmra.mxu0 %v543
    %v607 = vpop.f32.mrf.mxu0
    %v608 = vadd.f32 0.0, %v607
    %609 = vdwg.mxu0
    %v610 = vld [vmem:[%s5] sm:$0xff]
    %v611 = vld [vmem:[%s5 + $0x8] sm:$0xff]
    %v612 = vld [vmem:[%s5 + $0x10] sm:$0xff]
    %v613 = vld [vmem:[%s5 + $0x18] sm:$0xff]
    %v614 = vld [vmem:[%s5 + $0x20] sm:$0xff]
    %v615 = vld [vmem:[%s5 + $0x28] sm:$0xff]
    %v616 = vld [vmem:[%s5 + $0x30] sm:$0xff]
    %v617 = vld [vmem:[%s5 + $0x38] sm:$0xff]
    %v618 = vld [vmem:[%s5 + $0x40] sm:$0xff]
    %v619 = vld [vmem:[%s5 + $0x48] sm:$0xff]
    %v620 = vld [vmem:[%s5 + $0x50] sm:$0xff]
    %v621 = vld [vmem:[%s5 + $0x58] sm:$0xff]
    %v622 = vld [vmem:[%s5 + $0x60] sm:$0xff]
    %v623 = vld [vmem:[%s5 + $0x68] sm:$0xff]
    %v624 = vld [vmem:[%s5 + $0x70] sm:$0xff]
    %v625 = vld [vmem:[%s5 + $0x78] sm:$0xff]
    %626 = vmatpush.msra.mxu0 %v625
    %627 = vmatpush.msra.mxu0 %v624
    %628 = vmatpush.msra.mxu0 %v623
    %629 = vmatpush.msra.mxu0 %v622
    %630 = vmatpush.msra.mxu0 %v621
    %631 = vmatpush.msra.mxu0 %v620
    %632 = vmatpush.msra.mxu0 %v619
    %633 = vmatpush.msra.mxu0 %v618
    %634 = vmatpush.msra.mxu0 %v617
    %635 = vmatpush.msra.mxu0 %v616
    %636 = vmatpush.msra.mxu0 %v615
    %637 = vmatpush.msra.mxu0 %v614
    %638 = vmatpush.msra.mxu0 %v613
    %639 = vmatpush.msra.mxu0 %v612
    %640 = vmatpush.msra.mxu0 %v611
    %641 = vmatpush.msra.mxu0 %v610
    %642 = vmatmul.f32.gmra.mxu0 %v563
    %v643 = vpop.f32.mrf.mxu0
    %v644 = vadd.f32 0.0, %v643
    %645 = vmatmul.f32.gmra.mxu0 %v566
    %v646 = vpop.f32.mrf.mxu0
    %v647 = vadd.f32 0.0, %v646
    %648 = vmatmul.f32.gmra.mxu0 %v569
    %v649 = vpop.f32.mrf.mxu0
    %v650 = vadd.f32 0.0, %v649
    %651 = vmatmul.f32.gmra.mxu0 %v572
    %v652 = vpop.f32.mrf.mxu0
    %v653 = vadd.f32 0.0, %v652
    %654 = vmatmul.f32.gmra.mxu0 %v575
    %v655 = vpop.f32.mrf.mxu0
    %v656 = vadd.f32 0.0, %v655
    %657 = vmatmul.f32.gmra.mxu0 %v578
    %v658 = vpop.f32.mrf.mxu0
    %v659 = vadd.f32 0.0, %v658
    %660 = vmatmul.f32.gmra.mxu0 %v581
    %v661 = vpop.f32.mrf.mxu0
    %v662 = vadd.f32 0.0, %v661
    %663 = vmatmul.f32.gmra.mxu0 %v584
    %v664 = vpop.f32.mrf.mxu0
    %v665 = vadd.f32 0.0, %v664
    %666 = vmatmul.f32.gmra.mxu0 %v587
    %v667 = vpop.f32.mrf.mxu0
    %v668 = vadd.f32 0.0, %v667
    %669 = vmatmul.f32.gmra.mxu0 %v590
    %v670 = vpop.f32.mrf.mxu0
    %v671 = vadd.f32 0.0, %v670
    %672 = vmatmul.f32.gmra.mxu0 %v593
    %v673 = vpop.f32.mrf.mxu0
    %v674 = vadd.f32 0.0, %v673
    %675 = vmatmul.f32.gmra.mxu0 %v596
    %v676 = vpop.f32.mrf.mxu0
    %v677 = vadd.f32 0.0, %v676
    %678 = vmatmul.f32.gmra.mxu0 %v599
    %v679 = vpop.f32.mrf.mxu0
    %v680 = vadd.f32 0.0, %v679
    %681 = vmatmul.f32.gmra.mxu0 %v602
    %v682 = vpop.f32.mrf.mxu0
    %v683 = vadd.f32 0.0, %v682
    %684 = vmatmul.f32.gmra.mxu0 %v605
    %v685 = vpop.f32.mrf.mxu0
    %v686 = vadd.f32 0.0, %v685
    %687 = vmatmul.f32.gmra.mxu0 %v608
    %v688 = vpop.f32.mrf.mxu0
    %v689 = vadd.f32 0.0, %v688
    %690 = vdwg.mxu0
    %691 = vxpose.xlu0.b32.start [1/16] %v644, 128
    %692 = vxpose.xlu0.b32.cont [2/16] 0.0, 128
    %693 = vxpose.xlu0.b32.cont [3/16] 0.0, 128
    %694 = vxpose.xlu0.b32.cont [4/16] 0.0, 128
    %695 = vxpose.xlu0.b32.cont [5/16] 0.0, 128
    %696 = vxpose.xlu0.b32.cont [6/16] 0.0, 128
    %697 = vxpose.xlu0.b32.cont [7/16] 0.0, 128
    %698 = vxpose.xlu0.b32.cont [8/16] 0.0, 128
    %699 = vxpose.xlu0.b32.cont [9/16] 0.0, 128
    %700 = vxpose.xlu0.b32.cont [10/16] 0.0, 128
    %701 = vxpose.xlu0.b32.cont [11/16] 0.0, 128
    %702 = vxpose.xlu0.b32.cont [12/16] 0.0, 128
    %703 = vxpose.xlu0.b32.cont [13/16] 0.0, 128
    %704 = vxpose.xlu0.b32.cont [14/16] 0.0, 128
    %705 = vxpose.xlu0.b32.cont [15/16] 0.0, 128
    %706 = vxpose.xlu0.b32.end [16/16] 0.0, 128
    %v707 = vpop.trf.xlu0
    %v708 = vpop.trf.xlu0
    %v709 = vpop.trf.xlu0
    %v710 = vpop.trf.xlu0
    %v711 = vpop.trf.xlu0
    %v712 = vpop.trf.xlu0
    %v713 = vpop.trf.xlu0
    %v714 = vpop.trf.xlu0
    %v715 = vpop.trf.xlu0
    %v716 = vpop.trf.xlu0
    %v717 = vpop.trf.xlu0
    %v718 = vpop.trf.xlu0
    %v719 = vpop.trf.xlu0
    %v720 = vpop.trf.xlu0
    %v721 = vpop.trf.xlu0
    %v722 = vpop.trf.xlu0
    %723 = vxpose.xlu0.b32.start [1/16] %v647, 128
    %724 = vxpose.xlu0.b32.cont [2/16] 0.0, 128
    %725 = vxpose.xlu0.b32.cont [3/16] 0.0, 128
    %726 = vxpose.xlu0.b32.cont [4/16] 0.0, 128
    %727 = vxpose.xlu0.b32.cont [5/16] 0.0, 128
    %728 = vxpose.xlu0.b32.cont [6/16] 0.0, 128
    %729 = vxpose.xlu0.b32.cont [7/16] 0.0, 128
    %730 = vxpose.xlu0.b32.cont [8/16] 0.0, 128
    %731 = vxpose.xlu0.b32.cont [9/16] 0.0, 128
    %732 = vxpose.xlu0.b32.cont [10/16] 0.0, 128
    %733 = vxpose.xlu0.b32.cont [11/16] 0.0, 128
    %734 = vxpose.xlu0.b32.cont [12/16] 0.0, 128
    %735 = vxpose.xlu0.b32.cont [13/16] 0.0, 128
    %736 = vxpose.xlu0.b32.cont [14/16] 0.0, 128
    %737 = vxpose.xlu0.b32.cont [15/16] 0.0, 128
    %738 = vxpose.xlu0.b32.end [16/16] 0.0, 128
    %v739 = vpop.trf.xlu0
    %v740 = vpop.trf.xlu0
    %v741 = vpop.trf.xlu0
    %v742 = vpop.trf.xlu0
    %v743 = vpop.trf.xlu0
    %v744 = vpop.trf.xlu0
    %v745 = vpop.trf.xlu0
    %v746 = vpop.trf.xlu0
    %v747 = vpop.trf.xlu0
    %v748 = vpop.trf.xlu0
    %v749 = vpop.trf.xlu0
    %v750 = vpop.trf.xlu0
    %v751 = vpop.trf.xlu0
    %v752 = vpop.trf.xlu0
    %v753 = vpop.trf.xlu0
    %v754 = vpop.trf.xlu0
    %755 = vxpose.xlu0.b32.start [1/16] %v650, 128
    %756 = vxpose.xlu0.b32.cont [2/16] 0.0, 128
    %757 = vxpose.xlu0.b32.cont [3/16] 0.0, 128
    %758 = vxpose.xlu0.b32.cont [4/16] 0.0, 128
    %759 = vxpose.xlu0.b32.cont [5/16] 0.0, 128
    %760 = vxpose.xlu0.b32.cont [6/16] 0.0, 128
    %761 = vxpose.xlu0.b32.cont [7/16] 0.0, 128
    %762 = vxpose.xlu0.b32.cont [8/16] 0.0, 128
    %763 = vxpose.xlu0.b32.cont [9/16] 0.0, 128
    %764 = vxpose.xlu0.b32.cont [10/16] 0.0, 128
    %765 = vxpose.xlu0.b32.cont [11/16] 0.0, 128
    %766 = vxpose.xlu0.b32.cont [12/16] 0.0, 128
    %767 = vxpose.xlu0.b32.cont [13/16] 0.0, 128
    %768 = vxpose.xlu0.b32.cont [14/16] 0.0, 128
    %769 = vxpose.xlu0.b32.cont [15/16] 0.0, 128
    %770 = vxpose.xlu0.b32.end [16/16] 0.0, 128
    %v771 = vpop.trf.xlu0
    %v772 = vpop.trf.xlu0
    %v773 = vpop.trf.xlu0
    %v774 = vpop.trf.xlu0
    %v775 = vpop.trf.xlu0
    %v776 = vpop.trf.xlu0
    %v777 = vpop.trf.xlu0
    %v778 = vpop.trf.xlu0
    %v779 = vpop.trf.xlu0
    %v780 = vpop.trf.xlu0
    %v781 = vpop.trf.xlu0
    %v782 = vpop.trf.xlu0
    %v783 = vpop.trf.xlu0
    %v784 = vpop.trf.xlu0
    %v785 = vpop.trf.xlu0
    %v786 = vpop.trf.xlu0
    %787 = vxpose.xlu0.b32.start [1/16] %v653, 128
    %788 = vxpose.xlu0.b32.cont [2/16] 0.0, 128
    %789 = vxpose.xlu0.b32.cont [3/16] 0.0, 128
    %790 = vxpose.xlu0.b32.cont [4/16] 0.0, 128
    %791 = vxpose.xlu0.b32.cont [5/16] 0.0, 128
    %792 = vxpose.xlu0.b32.cont [6/16] 0.0, 128
    %793 = vxpose.xlu0.b32.cont [7/16] 0.0, 128
    %794 = vxpose.xlu0.b32.cont [8/16] 0.0, 128
    %795 = vxpose.xlu0.b32.cont [9/16] 0.0, 128
    %796 = vxpose.xlu0.b32.cont [10/16] 0.0, 128
    %797 = vxpose.xlu0.b32.cont [11/16] 0.0, 128
    %798 = vxpose.xlu0.b32.cont [12/16] 0.0, 128
    %799 = vxpose.xlu0.b32.cont [13/16] 0.0, 128
    %800 = vxpose.xlu0.b32.cont [14/16] 0.0, 128
    %801 = vxpose.xlu0.b32.cont [15/16] 0.0, 128
    %802 = vxpose.xlu0.b32.end [16/16] 0.0, 128
    %v803 = vpop.trf.xlu0
    %v804 = vpop.trf.xlu0
    %v805 = vpop.trf.xlu0
    %v806 = vpop.trf.xlu0
    %v807 = vpop.trf.xlu0
    %v808 = vpop.trf.xlu0
    %v809 = vpop.trf.xlu0
    %v810 = vpop.trf.xlu0
    %v811 = vpop.trf.xlu0
    %v812 = vpop.trf.xlu0
    %v813 = vpop.trf.xlu0
    %v814 = vpop.trf.xlu0
    %v815 = vpop.trf.xlu0
    %v816 = vpop.trf.xlu0
    %v817 = vpop.trf.xlu0
    %v818 = vpop.trf.xlu0
    %819 = vxpose.xlu0.b32.start [1/16] %v656, 128
    %820 = vxpose.xlu0.b32.cont [2/16] 0.0, 128
    %821 = vxpose.xlu0.b32.cont [3/16] 0.0, 128
    %822 = vxpose.xlu0.b32.cont [4/16] 0.0, 128
    %823 = vxpose.xlu0.b32.cont [5/16] 0.0, 128
    %824 = vxpose.xlu0.b32.cont [6/16] 0.0, 128
    %825 = vxpose.xlu0.b32.cont [7/16] 0.0, 128
    %826 = vxpose.xlu0.b32.cont [8/16] 0.0, 128
    %827 = vxpose.xlu0.b32.cont [9/16] 0.0, 128
    %828 = vxpose.xlu0.b32.cont [10/16] 0.0, 128
    %829 = vxpose.xlu0.b32.cont [11/16] 0.0, 128
    %830 = vxpose.xlu0.b32.cont [12/16] 0.0, 128
    %831 = vxpose.xlu0.b32.cont [13/16] 0.0, 128
    %832 = vxpose.xlu0.b32.cont [14/16] 0.0, 128
    %833 = vxpose.xlu0.b32.cont [15/16] 0.0, 128
    %834 = vxpose.xlu0.b32.end [16/16] 0.0, 128
    %v835 = vpop.trf.xlu0
    %v836 = vpop.trf.xlu0
    %v837 = vpop.trf.xlu0
    %v838 = vpop.trf.xlu0
    %v839 = vpop.trf.xlu0
    %v840 = vpop.trf.xlu0
    %v841 = vpop.trf.xlu0
    %v842 = vpop.trf.xlu0
    %v843 = vpop.trf.xlu0
    %v844 = vpop.trf.xlu0
    %v845 = vpop.trf.xlu0
    %v846 = vpop.trf.xlu0
    %v847 = vpop.trf.xlu0
    %v848 = vpop.trf.xlu0
    %v849 = vpop.trf.xlu0
    %v850 = vpop.trf.xlu0
    %851 = vxpose.xlu0.b32.start [1/16] %v659, 128
    %852 = vxpose.xlu0.b32.cont [2/16] 0.0, 128
    %853 = vxpose.xlu0.b32.cont [3/16] 0.0, 128
    %854 = vxpose.xlu0.b32.cont [4/16] 0.0, 128
    %855 = vxpose.xlu0.b32.cont [5/16] 0.0, 128
    %856 = vxpose.xlu0.b32.cont [6/16] 0.0, 128
    %857 = vxpose.xlu0.b32.cont [7/16] 0.0, 128
    %858 = vxpose.xlu0.b32.cont [8/16] 0.0, 128
    %859 = vxpose.xlu0.b32.cont [9/16] 0.0, 128
    %860 = vxpose.xlu0.b32.cont [10/16] 0.0, 128
    %861 = vxpose.xlu0.b32.cont [11/16] 0.0, 128
    %862 = vxpose.xlu0.b32.cont [12/16] 0.0, 128
    %863 = vxpose.xlu0.b32.cont [13/16] 0.0, 128
    %864 = vxpose.xlu0.b32.cont [14/16] 0.0, 128
    %865 = vxpose.xlu0.b32.cont [15/16] 0.0, 128
    %866 = vxpose.xlu0.b32.end [16/16] 0.0, 128
    %v867 = vpop.trf.xlu0
    %v868 = vpop.trf.xlu0
    %v869 = vpop.trf.xlu0
    %v870 = vpop.trf.xlu0
    %v871 = vpop.trf.xlu0
    %v872 = vpop.trf.xlu0
    %v873 = vpop.trf.xlu0
    %v874 = vpop.trf.xlu0
    %v875 = vpop.trf.xlu0
    %v876 = vpop.trf.xlu0
    %v877 = vpop.trf.xlu0
    %v878 = vpop.trf.xlu0
    %v879 = vpop.trf.xlu0
    %v880 = vpop.trf.xlu0
    %v881 = vpop.trf.xlu0
    %v882 = vpop.trf.xlu0
    %883 = vxpose.xlu0.b32.start [1/16] %v662, 128
    %884 = vxpose.xlu0.b32.cont [2/16] 0.0, 128
    %885 = vxpose.xlu0.b32.cont [3/16] 0.0, 128
    %886 = vxpose.xlu0.b32.cont [4/16] 0.0, 128
    %887 = vxpose.xlu0.b32.cont [5/16] 0.0, 128
    %888 = vxpose.xlu0.b32.cont [6/16] 0.0, 128
    %889 = vxpose.xlu0.b32.cont [7/16] 0.0, 128
    %890 = vxpose.xlu0.b32.cont [8/16] 0.0, 128
    %891 = vxpose.xlu0.b32.cont [9/16] 0.0, 128
    %892 = vxpose.xlu0.b32.cont [10/16] 0.0, 128
    %893 = vxpose.xlu0.b32.cont [11/16] 0.0, 128
    %894 = vxpose.xlu0.b32.cont [12/16] 0.0, 128
    %895 = vxpose.xlu0.b32.cont [13/16] 0.0, 128
    %896 = vxpose.xlu0.b32.cont [14/16] 0.0, 128
    %897 = vxpose.xlu0.b32.cont [15/16] 0.0, 128
    %898 = vxpose.xlu0.b32.end [16/16] 0.0, 128
    %v899 = vpop.trf.xlu0
    %v900 = vpop.trf.xlu0
    %v901 = vpop.trf.xlu0
    %v902 = vpop.trf.xlu0
    %v903 = vpop.trf.xlu0
    %v904 = vpop.trf.xlu0
    %v905 = vpop.trf.xlu0
    %v906 = vpop.trf.xlu0
    %v907 = vpop.trf.xlu0
    %v908 = vpop.trf.xlu0
    %v909 = vpop.trf.xlu0
    %v910 = vpop.trf.xlu0
    %v911 = vpop.trf.xlu0
    %v912 = vpop.trf.xlu0
    %v913 = vpop.trf.xlu0
    %v914 = vpop.trf.xlu0
    %915 = vxpose.xlu0.b32.start [1/16] %v665, 128
    %916 = vxpose.xlu0.b32.cont [2/16] 0.0, 128
    %917 = vxpose.xlu0.b32.cont [3/16] 0.0, 128
    %918 = vxpose.xlu0.b32.cont [4/16] 0.0, 128
    %919 = vxpose.xlu0.b32.cont [5/16] 0.0, 128
    %920 = vxpose.xlu0.b32.cont [6/16] 0.0, 128
    %921 = vxpose.xlu0.b32.cont [7/16] 0.0, 128
    %922 = vxpose.xlu0.b32.cont [8/16] 0.0, 128
    %923 = vxpose.xlu0.b32.cont [9/16] 0.0, 128
    %924 = vxpose.xlu0.b32.cont [10/16] 0.0, 128
    %925 = vxpose.xlu0.b32.cont [11/16] 0.0, 128
    %926 = vxpose.xlu0.b32.cont [12/16] 0.0, 128
    %927 = vxpose.xlu0.b32.cont [13/16] 0.0, 128
    %928 = vxpose.xlu0.b32.cont [14/16] 0.0, 128
    %929 = vxpose.xlu0.b32.cont [15/16] 0.0, 128
    %930 = vxpose.xlu0.b32.end [16/16] 0.0, 128
    %v931 = vpop.trf.xlu0
    %v932 = vpop.trf.xlu0
    %v933 = vpop.trf.xlu0
    %v934 = vpop.trf.xlu0
    %v935 = vpop.trf.xlu0
    %v936 = vpop.trf.xlu0
    %v937 = vpop.trf.xlu0
    %v938 = vpop.trf.xlu0
    %v939 = vpop.trf.xlu0
    %v940 = vpop.trf.xlu0
    %v941 = vpop.trf.xlu0
    %v942 = vpop.trf.xlu0
    %v943 = vpop.trf.xlu0
    %v944 = vpop.trf.xlu0
    %v945 = vpop.trf.xlu0
    %v946 = vpop.trf.xlu0
    %947 = vxpose.xlu0.b32.start [1/16] %v668, 128
    %948 = vxpose.xlu0.b32.cont [2/16] 0.0, 128
    %949 = vxpose.xlu0.b32.cont [3/16] 0.0, 128
    %950 = vxpose.xlu0.b32.cont [4/16] 0.0, 128
    %951 = vxpose.xlu0.b32.cont [5/16] 0.0, 128
    %952 = vxpose.xlu0.b32.cont [6/16] 0.0, 128
    %953 = vxpose.xlu0.b32.cont [7/16] 0.0, 128
    %954 = vxpose.xlu0.b32.cont [8/16] 0.0, 128
    %955 = vxpose.xlu0.b32.cont [9/16] 0.0, 128
    %956 = vxpose.xlu0.b32.cont [10/16] 0.0, 128
    %957 = vxpose.xlu0.b32.cont [11/16] 0.0, 128
    %958 = vxpose.xlu0.b32.cont [12/16] 0.0, 128
    %959 = vxpose.xlu0.b32.cont [13/16] 0.0, 128
    %960 = vxpose.xlu0.b32.cont [14/16] 0.0, 128
    %961 = vxpose.xlu0.b32.cont [15/16] 0.0, 128
    %962 = vxpose.xlu0.b32.end [16/16] 0.0, 128
    %v963 = vpop.trf.xlu0
    %v964 = vpop.trf.xlu0
    %v965 = vpop.trf.xlu0
    %v966 = vpop.trf.xlu0
    %v967 = vpop.trf.xlu0
    %v968 = vpop.trf.xlu0
    %v969 = vpop.trf.xlu0
    %v970 = vpop.trf.xlu0
    %v971 = vpop.trf.xlu0
    %v972 = vpop.trf.xlu0
    %v973 = vpop.trf.xlu0
    %v974 = vpop.trf.xlu0
    %v975 = vpop.trf.xlu0
    %v976 = vpop.trf.xlu0
    %v977 = vpop.trf.xlu0
    %v978 = vpop.trf.xlu0
    %979 = vxpose.xlu0.b32.start [1/16] %v671, 128
    %980 = vxpose.xlu0.b32.cont [2/16] 0.0, 128
    %981 = vxpose.xlu0.b32.cont [3/16] 0.0, 128
    %982 = vxpose.xlu0.b32.cont [4/16] 0.0, 128
    %983 = vxpose.xlu0.b32.cont [5/16] 0.0, 128
    %984 = vxpose.xlu0.b32.cont [6/16] 0.0, 128
    %985 = vxpose.xlu0.b32.cont [7/16] 0.0, 128
    %986 = vxpose.xlu0.b32.cont [8/16] 0.0, 128
    %987 = vxpose.xlu0.b32.cont [9/16] 0.0, 128
    %988 = vxpose.xlu0.b32.cont [10/16] 0.0, 128
    %989 = vxpose.xlu0.b32.cont [11/16] 0.0, 128
    %990 = vxpose.xlu0.b32.cont [12/16] 0.0, 128
    %991 = vxpose.xlu0.b32.cont [13/16] 0.0, 128
    %992 = vxpose.xlu0.b32.cont [14/16] 0.0, 128
    %993 = vxpose.xlu0.b32.cont [15/16] 0.0, 128
    %994 = vxpose.xlu0.b32.end [16/16] 0.0, 128
    %v995 = vpop.trf.xlu0
    %v996 = vpop.trf.xlu0
    %v997 = vpop.trf.xlu0
    %v998 = vpop.trf.xlu0
    %v999 = vpop.trf.xlu0
    %v1000 = vpop.trf.xlu0
    %v1001 = vpop.trf.xlu0
    %v1002 = vpop.trf.xlu0
    %v1003 = vpop.trf.xlu0
    %v1004 = vpop.trf.xlu0
    %v1005 = vpop.trf.xlu0
    %v1006 = vpop.trf.xlu0
    %v1007 = vpop.trf.xlu0
    %v1008 = vpop.trf.xlu0
    %v1009 = vpop.trf.xlu0
    %v1010 = vpop.trf.xlu0
    %1011 = vxpose.xlu0.b32.start [1/16] %v674, 128
    %1012 = vxpose.xlu0.b32.cont [2/16] 0.0, 128
    %1013 = vxpose.xlu0.b32.cont [3/16] 0.0, 128
    %1014 = vxpose.xlu0.b32.cont [4/16] 0.0, 128
    %1015 = vxpose.xlu0.b32.cont [5/16] 0.0, 128
    %1016 = vxpose.xlu0.b32.cont [6/16] 0.0, 128
    %1017 = vxpose.xlu0.b32.cont [7/16] 0.0, 128
    %1018 = vxpose.xlu0.b32.cont [8/16] 0.0, 128
    %1019 = vxpose.xlu0.b32.cont [9/16] 0.0, 128
    %1020 = vxpose.xlu0.b32.cont [10/16] 0.0, 128
    %1021 = vxpose.xlu0.b32.cont [11/16] 0.0, 128
    %1022 = vxpose.xlu0.b32.cont [12/16] 0.0, 128
    %1023 = vxpose.xlu0.b32.cont [13/16] 0.0, 128
    %1024 = vxpose.xlu0.b32.cont [14/16] 0.0, 128
    %1025 = vxpose.xlu0.b32.cont [15/16] 0.0, 128
    %1026 = vxpose.xlu0.b32.end [16/16] 0.0, 128
    %v1027 = vpop.trf.xlu0
    %v1028 = vpop.trf.xlu0
    %v1029 = vpop.trf.xlu0
    %v1030 = vpop.trf.xlu0
    %v1031 = vpop.trf.xlu0
    %v1032 = vpop.trf.xlu0
    %v1033 = vpop.trf.xlu0
    %v1034 = vpop.trf.xlu0
    %v1035 = vpop.trf.xlu0
    %v1036 = vpop.trf.xlu0
    %v1037 = vpop.trf.xlu0
    %v1038 = vpop.trf.xlu0
    %v1039 = vpop.trf.xlu0
    %v1040 = vpop.trf.xlu0
    %v1041 = vpop.trf.xlu0
    %v1042 = vpop.trf.xlu0
    %1043 = vxpose.xlu0.b32.start [1/16] %v677, 128
    %1044 = vxpose.xlu0.b32.cont [2/16] 0.0, 128
    %1045 = vxpose.xlu0.b32.cont [3/16] 0.0, 128
    %1046 = vxpose.xlu0.b32.cont [4/16] 0.0, 128
    %1047 = vxpose.xlu0.b32.cont [5/16] 0.0, 128
    %1048 = vxpose.xlu0.b32.cont [6/16] 0.0, 128
    %1049 = vxpose.xlu0.b32.cont [7/16] 0.0, 128
    %1050 = vxpose.xlu0.b32.cont [8/16] 0.0, 128
    %1051 = vxpose.xlu0.b32.cont [9/16] 0.0, 128
    %1052 = vxpose.xlu0.b32.cont [10/16] 0.0, 128
    %1053 = vxpose.xlu0.b32.cont [11/16] 0.0, 128
    %1054 = vxpose.xlu0.b32.cont [12/16] 0.0, 128
    %1055 = vxpose.xlu0.b32.cont [13/16] 0.0, 128
    %1056 = vxpose.xlu0.b32.cont [14/16] 0.0, 128
    %1057 = vxpose.xlu0.b32.cont [15/16] 0.0, 128
    %1058 = vxpose.xlu0.b32.end [16/16] 0.0, 128
    %v1059 = vpop.trf.xlu0
    %v1060 = vpop.trf.xlu0
    %v1061 = vpop.trf.xlu0
    %v1062 = vpop.trf.xlu0
    %v1063 = vpop.trf.xlu0
    %v1064 = vpop.trf.xlu0
    %v1065 = vpop.trf.xlu0
    %v1066 = vpop.trf.xlu0
    %v1067 = vpop.trf.xlu0
    %v1068 = vpop.trf.xlu0
    %v1069 = vpop.trf.xlu0
    %v1070 = vpop.trf.xlu0
    %v1071 = vpop.trf.xlu0
    %v1072 = vpop.trf.xlu0
    %v1073 = vpop.trf.xlu0
    %v1074 = vpop.trf.xlu0
    %1075 = vxpose.xlu0.b32.start [1/16] %v680, 128
    %1076 = vxpose.xlu0.b32.cont [2/16] 0.0, 128
    %1077 = vxpose.xlu0.b32.cont [3/16] 0.0, 128
    %1078 = vxpose.xlu0.b32.cont [4/16] 0.0, 128
    %1079 = vxpose.xlu0.b32.cont [5/16] 0.0, 128
    %1080 = vxpose.xlu0.b32.cont [6/16] 0.0, 128
    %1081 = vxpose.xlu0.b32.cont [7/16] 0.0, 128
    %1082 = vxpose.xlu0.b32.cont [8/16] 0.0, 128
    %1083 = vxpose.xlu0.b32.cont [9/16] 0.0, 128
    %1084 = vxpose.xlu0.b32.cont [10/16] 0.0, 128
    %1085 = vxpose.xlu0.b32.cont [11/16] 0.0, 128
    %1086 = vxpose.xlu0.b32.cont [12/16] 0.0, 128
    %1087 = vxpose.xlu0.b32.cont [13/16] 0.0, 128
    %1088 = vxpose.xlu0.b32.cont [14/16] 0.0, 128
    %1089 = vxpose.xlu0.b32.cont [15/16] 0.0, 128
    %1090 = vxpose.xlu0.b32.end [16/16] 0.0, 128
    %v1091 = vpop.trf.xlu0
    %v1092 = vpop.trf.xlu0
    %v1093 = vpop.trf.xlu0
    %v1094 = vpop.trf.xlu0
    %v1095 = vpop.trf.xlu0
    %v1096 = vpop.trf.xlu0
    %v1097 = vpop.trf.xlu0
    %v1098 = vpop.trf.xlu0
    %v1099 = vpop.trf.xlu0
    %v1100 = vpop.trf.xlu0
    %v1101 = vpop.trf.xlu0
    %v1102 = vpop.trf.xlu0
    %v1103 = vpop.trf.xlu0
    %v1104 = vpop.trf.xlu0
    %v1105 = vpop.trf.xlu0
    %v1106 = vpop.trf.xlu0
    %1107 = vxpose.xlu0.b32.start [1/16] %v683, 128
    %1108 = vxpose.xlu0.b32.cont [2/16] 0.0, 128
    %1109 = vxpose.xlu0.b32.cont [3/16] 0.0, 128
    %1110 = vxpose.xlu0.b32.cont [4/16] 0.0, 128
    %1111 = vxpose.xlu0.b32.cont [5/16] 0.0, 128
    %1112 = vxpose.xlu0.b32.cont [6/16] 0.0, 128
    %1113 = vxpose.xlu0.b32.cont [7/16] 0.0, 128
    %1114 = vxpose.xlu0.b32.cont [8/16] 0.0, 128
    %1115 = vxpose.xlu0.b32.cont [9/16] 0.0, 128
    %1116 = vxpose.xlu0.b32.cont [10/16] 0.0, 128
    %1117 = vxpose.xlu0.b32.cont [11/16] 0.0, 128
    %1118 = vxpose.xlu0.b32.cont [12/16] 0.0, 128
    %1119 = vxpose.xlu0.b32.cont [13/16] 0.0, 128
    %1120 = vxpose.xlu0.b32.cont [14/16] 0.0, 128
    %1121 = vxpose.xlu0.b32.cont [15/16] 0.0, 128
    %1122 = vxpose.xlu0.b32.end [16/16] 0.0, 128
    %v1123 = vpop.trf.xlu0
    %v1124 = vpop.trf.xlu0
    %v1125 = vpop.trf.xlu0
    %v1126 = vpop.trf.xlu0
    %v1127 = vpop.trf.xlu0
    %v1128 = vpop.trf.xlu0
    %v1129 = vpop.trf.xlu0
    %v1130 = vpop.trf.xlu0
    %v1131 = vpop.trf.xlu0
    %v1132 = vpop.trf.xlu0
    %v1133 = vpop.trf.xlu0
    %v1134 = vpop.trf.xlu0
    %v1135 = vpop.trf.xlu0
    %v1136 = vpop.trf.xlu0
    %v1137 = vpop.trf.xlu0
    %v1138 = vpop.trf.xlu0
    %1139 = vxpose.xlu0.b32.start [1/16] %v686, 128
    %1140 = vxpose.xlu0.b32.cont [2/16] 0.0, 128
    %1141 = vxpose.xlu0.b32.cont [3/16] 0.0, 128
    %1142 = vxpose.xlu0.b32.cont [4/16] 0.0, 128
    %1143 = vxpose.xlu0.b32.cont [5/16] 0.0, 128
    %1144 = vxpose.xlu0.b32.cont [6/16] 0.0, 128
    %1145 = vxpose.xlu0.b32.cont [7/16] 0.0, 128
    %1146 = vxpose.xlu0.b32.cont [8/16] 0.0, 128
    %1147 = vxpose.xlu0.b32.cont [9/16] 0.0, 128
    %1148 = vxpose.xlu0.b32.cont [10/16] 0.0, 128
    %1149 = vxpose.xlu0.b32.cont [11/16] 0.0, 128
    %1150 = vxpose.xlu0.b32.cont [12/16] 0.0, 128
    %1151 = vxpose.xlu0.b32.cont [13/16] 0.0, 128
    %1152 = vxpose.xlu0.b32.cont [14/16] 0.0, 128
    %1153 = vxpose.xlu0.b32.cont [15/16] 0.0, 128
    %1154 = vxpose.xlu0.b32.end [16/16] 0.0, 128
    %v1155 = vpop.trf.xlu0
    %v1156 = vpop.trf.xlu0
    %v1157 = vpop.trf.xlu0
    %v1158 = vpop.trf.xlu0
    %v1159 = vpop.trf.xlu0
    %v1160 = vpop.trf.xlu0
    %v1161 = vpop.trf.xlu0
    %v1162 = vpop.trf.xlu0
    %v1163 = vpop.trf.xlu0
    %v1164 = vpop.trf.xlu0
    %v1165 = vpop.trf.xlu0
    %v1166 = vpop.trf.xlu0
    %v1167 = vpop.trf.xlu0
    %v1168 = vpop.trf.xlu0
    %v1169 = vpop.trf.xlu0
    %v1170 = vpop.trf.xlu0
    %1171 = vxpose.xlu0.b32.start [1/16] %v689, 128
    %1172 = vxpose.xlu0.b32.cont [2/16] 0.0, 128
    %1173 = vxpose.xlu0.b32.cont [3/16] 0.0, 128
    %1174 = vxpose.xlu0.b32.cont [4/16] 0.0, 128
    %1175 = vxpose.xlu0.b32.cont [5/16] 0.0, 128
    %1176 = vxpose.xlu0.b32.cont [6/16] 0.0, 128
    %1177 = vxpose.xlu0.b32.cont [7/16] 0.0, 128
    %1178 = vxpose.xlu0.b32.cont [8/16] 0.0, 128
    %1179 = vxpose.xlu0.b32.cont [9/16] 0.0, 128
    %1180 = vxpose.xlu0.b32.cont [10/16] 0.0, 128
    %1181 = vxpose.xlu0.b32.cont [11/16] 0.0, 128
    %1182 = vxpose.xlu0.b32.cont [12/16] 0.0, 128
    %1183 = vxpose.xlu0.b32.cont [13/16] 0.0, 128
    %1184 = vxpose.xlu0.b32.cont [14/16] 0.0, 128
    %1185 = vxpose.xlu0.b32.cont [15/16] 0.0, 128
    %1186 = vxpose.xlu0.b32.end [16/16] 0.0, 128
    %v1187 = vpop.trf.xlu0
    %v1188 = vpop.trf.xlu0
    %v1189 = vpop.trf.xlu0
    %v1190 = vpop.trf.xlu0
    %v1191 = vpop.trf.xlu0
    %v1192 = vpop.trf.xlu0
    %v1193 = vpop.trf.xlu0
    %v1194 = vpop.trf.xlu0
    %v1195 = vpop.trf.xlu0
    %v1196 = vpop.trf.xlu0
    %v1197 = vpop.trf.xlu0
    %v1198 = vpop.trf.xlu0
    %v1199 = vpop.trf.xlu0
    %v1200 = vpop.trf.xlu0
    %v1201 = vpop.trf.xlu0
    %v1202 = vpop.trf.xlu0
    %v1203 = vperm.slane %v707, 0
    %v1204 = vlaneseq
    %v1205 = vshrl.u32 %v1204, 7
    %1207 = vset.pattern.permute.xlu0 %v1205
    %1208 = vperm.xlu0 %1207, %v1203
    %v1209 = vpop.permute.xlu0 %1208
    %v1210 = vperm.slane %v707, 1
    %v1211 = vlaneseq
    %v1212 = vshrl.u32 %v1211, 7
    %1214 = vset.pattern.permute.xlu0 %v1212
    %1215 = vperm.xlu0 %1214, %v1210
    %v1216 = vpop.permute.xlu0 %1215
    %v1217 = vperm.slane %v707, 2
    %v1218 = vlaneseq
    %v1219 = vshrl.u32 %v1218, 7
    %1221 = vset.pattern.permute.xlu0 %v1219
    %1222 = vperm.xlu0 %1221, %v1217
    %v1223 = vpop.permute.xlu0 %1222
    %v1224 = vperm.slane %v707, 3
    %v1225 = vlaneseq
    %v1226 = vshrl.u32 %v1225, 7
    %1228 = vset.pattern.permute.xlu0 %v1226
    %1229 = vperm.xlu0 %1228, %v1224
    %v1230 = vpop.permute.xlu0 %1229
    %v1231 = vperm.slane %v739, 0
    %v1232 = vlaneseq
    %v1233 = vshrl.u32 %v1232, 7
    %1235 = vset.pattern.permute.xlu0 %v1233
    %1236 = vperm.xlu0 %1235, %v1231
    %v1237 = vpop.permute.xlu0 %1236
    %v1238 = vperm.slane %v739, 1
    %v1239 = vlaneseq
    %v1240 = vshrl.u32 %v1239, 7
    %1242 = vset.pattern.permute.xlu0 %v1240
    %1243 = vperm.xlu0 %1242, %v1238
    %v1244 = vpop.permute.xlu0 %1243
    %v1245 = vperm.slane %v739, 2
    %v1246 = vlaneseq
    %v1247 = vshrl.u32 %v1246, 7
    %1249 = vset.pattern.permute.xlu0 %v1247
    %1250 = vperm.xlu0 %1249, %v1245
    %v1251 = vpop.permute.xlu0 %1250
    %v1252 = vperm.slane %v739, 3
    %v1253 = vlaneseq
    %v1254 = vshrl.u32 %v1253, 7
    %1256 = vset.pattern.permute.xlu0 %v1254
    %1257 = vperm.xlu0 %1256, %v1252
    %v1258 = vpop.permute.xlu0 %1257
    %v1259 = vperm.slane %v771, 0
    %v1260 = vlaneseq
    %v1261 = vshrl.u32 %v1260, 7
    %1263 = vset.pattern.permute.xlu0 %v1261
    %1264 = vperm.xlu0 %1263, %v1259
    %v1265 = vpop.permute.xlu0 %1264
    %v1266 = vperm.slane %v771, 1
    %v1267 = vlaneseq
    %v1268 = vshrl.u32 %v1267, 7
    %1270 = vset.pattern.permute.xlu0 %v1268
    %1271 = vperm.xlu0 %1270, %v1266
    %v1272 = vpop.permute.xlu0 %1271
    %v1273 = vperm.slane %v771, 2
    %v1274 = vlaneseq
    %v1275 = vshrl.u32 %v1274, 7
    %1277 = vset.pattern.permute.xlu0 %v1275
    %1278 = vperm.xlu0 %1277, %v1273
    %v1279 = vpop.permute.xlu0 %1278
    %v1280 = vperm.slane %v771, 3
    %v1281 = vlaneseq
    %v1282 = vshrl.u32 %v1281, 7
    %1284 = vset.pattern.permute.xlu0 %v1282
    %1285 = vperm.xlu0 %1284, %v1280
    %v1286 = vpop.permute.xlu0 %1285
    %v1287 = vperm.slane %v803, 0
    %v1288 = vlaneseq
    %v1289 = vshrl.u32 %v1288, 7
    %1291 = vset.pattern.permute.xlu0 %v1289
    %1292 = vperm.xlu0 %1291, %v1287
    %v1293 = vpop.permute.xlu0 %1292
    %v1294 = vperm.slane %v803, 1
    %v1295 = vlaneseq
    %v1296 = vshrl.u32 %v1295, 7
    %1298 = vset.pattern.permute.xlu0 %v1296
    %1299 = vperm.xlu0 %1298, %v1294
    %v1300 = vpop.permute.xlu0 %1299
    %v1301 = vperm.slane %v803, 2
    %v1302 = vlaneseq
    %v1303 = vshrl.u32 %v1302, 7
    %1305 = vset.pattern.permute.xlu0 %v1303
    %1306 = vperm.xlu0 %1305, %v1301
    %v1307 = vpop.permute.xlu0 %1306
    %v1308 = vperm.slane %v803, 3
    %v1309 = vlaneseq
    %v1310 = vshrl.u32 %v1309, 7
    %1312 = vset.pattern.permute.xlu0 %v1310
    %1313 = vperm.xlu0 %1312, %v1308
    %v1314 = vpop.permute.xlu0 %1313
    %v1315 = vperm.slane %v835, 0
    %v1316 = vlaneseq
    %v1317 = vshrl.u32 %v1316, 7
    %1319 = vset.pattern.permute.xlu0 %v1317
    %1320 = vperm.xlu0 %1319, %v1315
    %v1321 = vpop.permute.xlu0 %1320
    %v1322 = vperm.slane %v835, 1
    %v1323 = vlaneseq
    %v1324 = vshrl.u32 %v1323, 7
    %1326 = vset.pattern.permute.xlu0 %v1324
    %1327 = vperm.xlu0 %1326, %v1322
    %v1328 = vpop.permute.xlu0 %1327
    %v1329 = vperm.slane %v835, 2
    %v1330 = vlaneseq
    %v1331 = vshrl.u32 %v1330, 7
    %1333 = vset.pattern.permute.xlu0 %v1331
    %1334 = vperm.xlu0 %1333, %v1329
    %v1335 = vpop.permute.xlu0 %1334
    %v1336 = vperm.slane %v835, 3
    %v1337 = vlaneseq
    %v1338 = vshrl.u32 %v1337, 7
    %1340 = vset.pattern.permute.xlu0 %v1338
    %1341 = vperm.xlu0 %1340, %v1336
    %v1342 = vpop.permute.xlu0 %1341
    %v1343 = vperm.slane %v867, 0
    %v1344 = vlaneseq
    %v1345 = vshrl.u32 %v1344, 7
    %1347 = vset.pattern.permute.xlu0 %v1345
    %1348 = vperm.xlu0 %1347, %v1343
    %v1349 = vpop.permute.xlu0 %1348
    %v1350 = vperm.slane %v867, 1
    %v1351 = vlaneseq
    %v1352 = vshrl.u32 %v1351, 7
    %1354 = vset.pattern.permute.xlu0 %v1352
    %1355 = vperm.xlu0 %1354, %v1350
    %v1356 = vpop.permute.xlu0 %1355
    %v1357 = vperm.slane %v867, 2
    %v1358 = vlaneseq
    %v1359 = vshrl.u32 %v1358, 7
    %1361 = vset.pattern.permute.xlu0 %v1359
    %1362 = vperm.xlu0 %1361, %v1357
    %v1363 = vpop.permute.xlu0 %1362
    %v1364 = vperm.slane %v867, 3
    %v1365 = vlaneseq
    %v1366 = vshrl.u32 %v1365, 7
    %1368 = vset.pattern.permute.xlu0 %v1366
    %1369 = vperm.xlu0 %1368, %v1364
    %v1370 = vpop.permute.xlu0 %1369
    %v1371 = vperm.slane %v899, 0
    %v1372 = vlaneseq
    %v1373 = vshrl.u32 %v1372, 7
    %1375 = vset.pattern.permute.xlu0 %v1373
    %1376 = vperm.xlu0 %1375, %v1371
    %v1377 = vpop.permute.xlu0 %1376
    %v1378 = vperm.slane %v899, 1
    %v1379 = vlaneseq
    %v1380 = vshrl.u32 %v1379, 7
    %1382 = vset.pattern.permute.xlu0 %v1380
    %1383 = vperm.xlu0 %1382, %v1378
    %v1384 = vpop.permute.xlu0 %1383
    %v1385 = vperm.slane %v899, 2
    %v1386 = vlaneseq
    %v1387 = vshrl.u32 %v1386, 7
    %1389 = vset.pattern.permute.xlu0 %v1387
    %1390 = vperm.xlu0 %1389, %v1385
    %v1391 = vpop.permute.xlu0 %1390
    %v1392 = vperm.slane %v899, 3
    %v1393 = vlaneseq
    %v1394 = vshrl.u32 %v1393, 7
    %1396 = vset.pattern.permute.xlu0 %v1394
    %1397 = vperm.xlu0 %1396, %v1392
    %v1398 = vpop.permute.xlu0 %1397
    %v1399 = vperm.slane %v931, 0
    %v1400 = vlaneseq
    %v1401 = vshrl.u32 %v1400, 7
    %1403 = vset.pattern.permute.xlu0 %v1401
    %1404 = vperm.xlu0 %1403, %v1399
    %v1405 = vpop.permute.xlu0 %1404
    %v1406 = vperm.slane %v931, 1
    %v1407 = vlaneseq
    %v1408 = vshrl.u32 %v1407, 7
    %1410 = vset.pattern.permute.xlu0 %v1408
    %1411 = vperm.xlu0 %1410, %v1406
    %v1412 = vpop.permute.xlu0 %1411
    %v1413 = vperm.slane %v931, 2
    %v1414 = vlaneseq
    %v1415 = vshrl.u32 %v1414, 7
    %1417 = vset.pattern.permute.xlu0 %v1415
    %1418 = vperm.xlu0 %1417, %v1413
    %v1419 = vpop.permute.xlu0 %1418
    %v1420 = vperm.slane %v931, 3
    %v1421 = vlaneseq
    %v1422 = vshrl.u32 %v1421, 7
    %1424 = vset.pattern.permute.xlu0 %v1422
    %1425 = vperm.xlu0 %1424, %v1420
    %v1426 = vpop.permute.xlu0 %1425
    %v1427 = vperm.slane %v963, 0
    %v1428 = vlaneseq
    %v1429 = vshrl.u32 %v1428, 7
    %1431 = vset.pattern.permute.xlu0 %v1429
    %1432 = vperm.xlu0 %1431, %v1427
    %v1433 = vpop.permute.xlu0 %1432
    %v1434 = vperm.slane %v963, 1
    %v1435 = vlaneseq
    %v1436 = vshrl.u32 %v1435, 7
    %1438 = vset.pattern.permute.xlu0 %v1436
    %1439 = vperm.xlu0 %1438, %v1434
    %v1440 = vpop.permute.xlu0 %1439
    %v1441 = vperm.slane %v963, 2
    %v1442 = vlaneseq
    %v1443 = vshrl.u32 %v1442, 7
    %1445 = vset.pattern.permute.xlu0 %v1443
    %1446 = vperm.xlu0 %1445, %v1441
    %v1447 = vpop.permute.xlu0 %1446
    %v1448 = vperm.slane %v963, 3
    %v1449 = vlaneseq
    %v1450 = vshrl.u32 %v1449, 7
    %1452 = vset.pattern.permute.xlu0 %v1450
    %1453 = vperm.xlu0 %1452, %v1448
    %v1454 = vpop.permute.xlu0 %1453
    %v1455 = vperm.slane %v995, 0
    %v1456 = vlaneseq
    %v1457 = vshrl.u32 %v1456, 7
    %1459 = vset.pattern.permute.xlu0 %v1457
    %1460 = vperm.xlu0 %1459, %v1455
    %v1461 = vpop.permute.xlu0 %1460
    %v1462 = vperm.slane %v995, 1
    %v1463 = vlaneseq
    %v1464 = vshrl.u32 %v1463, 7
    %1466 = vset.pattern.permute.xlu0 %v1464
    %1467 = vperm.xlu0 %1466, %v1462
    %v1468 = vpop.permute.xlu0 %1467
    %v1469 = vperm.slane %v995, 2
    %v1470 = vlaneseq
    %v1471 = vshrl.u32 %v1470, 7
    %1473 = vset.pattern.permute.xlu0 %v1471
    %1474 = vperm.xlu0 %1473, %v1469
    %v1475 = vpop.permute.xlu0 %1474
    %v1476 = vperm.slane %v995, 3
    %v1477 = vlaneseq
    %v1478 = vshrl.u32 %v1477, 7
    %1480 = vset.pattern.permute.xlu0 %v1478
    %1481 = vperm.xlu0 %1480, %v1476
    %v1482 = vpop.permute.xlu0 %1481
    %v1483 = vperm.slane %v1027, 0
    %v1484 = vlaneseq
    %v1485 = vshrl.u32 %v1484, 7
    %1487 = vset.pattern.permute.xlu0 %v1485
    %1488 = vperm.xlu0 %1487, %v1483
    %v1489 = vpop.permute.xlu0 %1488
    %v1490 = vperm.slane %v1027, 1
    %v1491 = vlaneseq
    %v1492 = vshrl.u32 %v1491, 7
    %1494 = vset.pattern.permute.xlu0 %v1492
    %1495 = vperm.xlu0 %1494, %v1490
    %v1496 = vpop.permute.xlu0 %1495
    %v1497 = vperm.slane %v1027, 2
    %v1498 = vlaneseq
    %v1499 = vshrl.u32 %v1498, 7
    %1501 = vset.pattern.permute.xlu0 %v1499
    %1502 = vperm.xlu0 %1501, %v1497
    %v1503 = vpop.permute.xlu0 %1502
    %v1504 = vperm.slane %v1027, 3
    %v1505 = vlaneseq
    %v1506 = vshrl.u32 %v1505, 7
    %1508 = vset.pattern.permute.xlu0 %v1506
    %1509 = vperm.xlu0 %1508, %v1504
    %v1510 = vpop.permute.xlu0 %1509
    %v1511 = vperm.slane %v1059, 0
    %v1512 = vlaneseq
    %v1513 = vshrl.u32 %v1512, 7
    %1515 = vset.pattern.permute.xlu0 %v1513
    %1516 = vperm.xlu0 %1515, %v1511
    %v1517 = vpop.permute.xlu0 %1516
    %v1518 = vperm.slane %v1059, 1
    %v1519 = vlaneseq
    %v1520 = vshrl.u32 %v1519, 7
    %1522 = vset.pattern.permute.xlu0 %v1520
    %1523 = vperm.xlu0 %1522, %v1518
    %v1524 = vpop.permute.xlu0 %1523
    %v1525 = vperm.slane %v1059, 2
    %v1526 = vlaneseq
    %v1527 = vshrl.u32 %v1526, 7
    %1529 = vset.pattern.permute.xlu0 %v1527
    %1530 = vperm.xlu0 %1529, %v1525
    %v1531 = vpop.permute.xlu0 %1530
    %v1532 = vperm.slane %v1059, 3
    %v1533 = vlaneseq
    %v1534 = vshrl.u32 %v1533, 7
    %1536 = vset.pattern.permute.xlu0 %v1534
    %1537 = vperm.xlu0 %1536, %v1532
    %v1538 = vpop.permute.xlu0 %1537
    %v1539 = vperm.slane %v1091, 0
    %v1540 = vlaneseq
    %v1541 = vshrl.u32 %v1540, 7
    %1543 = vset.pattern.permute.xlu0 %v1541
    %1544 = vperm.xlu0 %1543, %v1539
    %v1545 = vpop.permute.xlu0 %1544
    %v1546 = vperm.slane %v1091, 1
    %v1547 = vlaneseq
    %v1548 = vshrl.u32 %v1547, 7
    %1550 = vset.pattern.permute.xlu0 %v1548
    %1551 = vperm.xlu0 %1550, %v1546
    %v1552 = vpop.permute.xlu0 %1551
    %v1553 = vperm.slane %v1091, 2
    %v1554 = vlaneseq
    %v1555 = vshrl.u32 %v1554, 7
    %1557 = vset.pattern.permute.xlu0 %v1555
    %1558 = vperm.xlu0 %1557, %v1553
    %v1559 = vpop.permute.xlu0 %1558
    %v1560 = vperm.slane %v1091, 3
    %v1561 = vlaneseq
    %v1562 = vshrl.u32 %v1561, 7
    %1564 = vset.pattern.permute.xlu0 %v1562
    %1565 = vperm.xlu0 %1564, %v1560
    %v1566 = vpop.permute.xlu0 %1565
    %v1567 = vperm.slane %v1123, 0
    %v1568 = vlaneseq
    %v1569 = vshrl.u32 %v1568, 7
    %1571 = vset.pattern.permute.xlu0 %v1569
    %1572 = vperm.xlu0 %1571, %v1567
    %v1573 = vpop.permute.xlu0 %1572
    %v1574 = vperm.slane %v1123, 1
    %v1575 = vlaneseq
    %v1576 = vshrl.u32 %v1575, 7
    %1578 = vset.pattern.permute.xlu0 %v1576
    %1579 = vperm.xlu0 %1578, %v1574
    %v1580 = vpop.permute.xlu0 %1579
    %v1581 = vperm.slane %v1123, 2
    %v1582 = vlaneseq
    %v1583 = vshrl.u32 %v1582, 7
    %1585 = vset.pattern.permute.xlu0 %v1583
    %1586 = vperm.xlu0 %1585, %v1581
    %v1587 = vpop.permute.xlu0 %1586
    %v1588 = vperm.slane %v1123, 3
    %v1589 = vlaneseq
    %v1590 = vshrl.u32 %v1589, 7
    %1592 = vset.pattern.permute.xlu0 %v1590
    %1593 = vperm.xlu0 %1592, %v1588
    %v1594 = vpop.permute.xlu0 %1593
    %v1595 = vperm.slane %v1155, 0
    %v1596 = vlaneseq
    %v1597 = vshrl.u32 %v1596, 7
    %1599 = vset.pattern.permute.xlu0 %v1597
    %1600 = vperm.xlu0 %1599, %v1595
    %v1601 = vpop.permute.xlu0 %1600
    %v1602 = vperm.slane %v1155, 1
    %v1603 = vlaneseq
    %v1604 = vshrl.u32 %v1603, 7
    %1606 = vset.pattern.permute.xlu0 %v1604
    %1607 = vperm.xlu0 %1606, %v1602
    %v1608 = vpop.permute.xlu0 %1607
    %v1609 = vperm.slane %v1155, 2
    %v1610 = vlaneseq
    %v1611 = vshrl.u32 %v1610, 7
    %1613 = vset.pattern.permute.xlu0 %v1611
    %1614 = vperm.xlu0 %1613, %v1609
    %v1615 = vpop.permute.xlu0 %1614
    %v1616 = vperm.slane %v1155, 3
    %v1617 = vlaneseq
    %v1618 = vshrl.u32 %v1617, 7
    %1620 = vset.pattern.permute.xlu0 %v1618
    %1621 = vperm.xlu0 %1620, %v1616
    %v1622 = vpop.permute.xlu0 %1621
    %v1623 = vperm.slane %v1187, 0
    %v1624 = vlaneseq
    %v1625 = vshrl.u32 %v1624, 7
    %1627 = vset.pattern.permute.xlu0 %v1625
    %1628 = vperm.xlu0 %1627, %v1623
    %v1629 = vpop.permute.xlu0 %1628
    %v1630 = vperm.slane %v1187, 1
    %v1631 = vlaneseq
    %v1632 = vshrl.u32 %v1631, 7
    %1634 = vset.pattern.permute.xlu0 %v1632
    %1635 = vperm.xlu0 %1634, %v1630
    %v1636 = vpop.permute.xlu0 %1635
    %v1637 = vperm.slane %v1187, 2
    %v1638 = vlaneseq
    %v1639 = vshrl.u32 %v1638, 7
    %1641 = vset.pattern.permute.xlu0 %v1639
    %1642 = vperm.xlu0 %1641, %v1637
    %v1643 = vpop.permute.xlu0 %1642
    %v1644 = vperm.slane %v1187, 3
    %v1645 = vlaneseq
    %v1646 = vshrl.u32 %v1645, 7
    %1648 = vset.pattern.permute.xlu0 %v1646
    %1649 = vperm.xlu0 %1648, %v1644
    %v1650 = vpop.permute.xlu0 %1649
    %1667 = vst [vmem:[#allocation1] sm:$0xff] %v707
    %s1668 = scalar_lea.vmem [#allocation1], 4
    %v1669 = vld [vmem:[%s1668] ss:$9 sm:$0xff]
    %s1670 = scalar_lea.vmem [#allocation1], 5
    %v1671 = vld [vmem:[%s1670] ss:$9 sm:$0xff]
    %s1672 = scalar_lea.vmem [#allocation1], 6
    %v1673 = vld [vmem:[%s1672] ss:$9 sm:$0xff]
    %s1674 = scalar_lea.vmem [#allocation1], 7
    %v1675 = vld [vmem:[%s1674] ss:$9 sm:$0xff]
    %1676 = vst [vmem:[#allocation1] sm:$0xff] %v739
    %v1677 = vld [vmem:[%s1668] ss:$9 sm:$0xff]
    %v1678 = vld [vmem:[%s1670] ss:$9 sm:$0xff]
    %v1679 = vld [vmem:[%s1672] ss:$9 sm:$0xff]
    %v1680 = vld [vmem:[%s1674] ss:$9 sm:$0xff]
    %1681 = vst [vmem:[#allocation1] sm:$0xff] %v771
    %v1682 = vld [vmem:[%s1668] ss:$9 sm:$0xff]
    %v1683 = vld [vmem:[%s1670] ss:$9 sm:$0xff]
    %v1684 = vld [vmem:[%s1672] ss:$9 sm:$0xff]
    %v1685 = vld [vmem:[%s1674] ss:$9 sm:$0xff]
    %1686 = vst [vmem:[#allocation1] sm:$0xff] %v803
    %v1687 = vld [vmem:[%s1668] ss:$9 sm:$0xff]
    %v1688 = vld [vmem:[%s1670] ss:$9 sm:$0xff]
    %v1689 = vld [vmem:[%s1672] ss:$9 sm:$0xff]
    %v1690 = vld [vmem:[%s1674] ss:$9 sm:$0xff]
    %1691 = vst [vmem:[#allocation1] sm:$0xff] %v835
    %v1692 = vld [vmem:[%s1668] ss:$9 sm:$0xff]
    %v1693 = vld [vmem:[%s1670] ss:$9 sm:$0xff]
    %v1694 = vld [vmem:[%s1672] ss:$9 sm:$0xff]
    %v1695 = vld [vmem:[%s1674] ss:$9 sm:$0xff]
    %1696 = vst [vmem:[#allocation1] sm:$0xff] %v867
    %v1697 = vld [vmem:[%s1668] ss:$9 sm:$0xff]
    %v1698 = vld [vmem:[%s1670] ss:$9 sm:$0xff]
    %v1699 = vld [vmem:[%s1672] ss:$9 sm:$0xff]
    %v1700 = vld [vmem:[%s1674] ss:$9 sm:$0xff]
    %1701 = vst [vmem:[#allocation1] sm:$0xff] %v899
    %v1702 = vld [vmem:[%s1668] ss:$9 sm:$0xff]
    %v1703 = vld [vmem:[%s1670] ss:$9 sm:$0xff]
    %v1704 = vld [vmem:[%s1672] ss:$9 sm:$0xff]
    %v1705 = vld [vmem:[%s1674] ss:$9 sm:$0xff]
    %1706 = vst [vmem:[#allocation1] sm:$0xff] %v931
    %v1707 = vld [vmem:[%s1668] ss:$9 sm:$0xff]
    %v1708 = vld [vmem:[%s1670] ss:$9 sm:$0xff]
    %v1709 = vld [vmem:[%s1672] ss:$9 sm:$0xff]
    %v1710 = vld [vmem:[%s1674] ss:$9 sm:$0xff]
    %1711 = vst [vmem:[#allocation1] sm:$0xff] %v963
    %v1712 = vld [vmem:[%s1668] ss:$9 sm:$0xff]
    %v1713 = vld [vmem:[%s1670] ss:$9 sm:$0xff]
    %v1714 = vld [vmem:[%s1672] ss:$9 sm:$0xff]
    %v1715 = vld [vmem:[%s1674] ss:$9 sm:$0xff]
    %1716 = vst [vmem:[#allocation1] sm:$0xff] %v995
    %v1717 = vld [vmem:[%s1668] ss:$9 sm:$0xff]
    %v1718 = vld [vmem:[%s1670] ss:$9 sm:$0xff]
    %v1719 = vld [vmem:[%s1672] ss:$9 sm:$0xff]
    %v1720 = vld [vmem:[%s1674] ss:$9 sm:$0xff]
    %1721 = vst [vmem:[#allocation1] sm:$0xff] %v1027
    %v1722 = vld [vmem:[%s1668] ss:$9 sm:$0xff]
    %v1723 = vld [vmem:[%s1670] ss:$9 sm:$0xff]
    %v1724 = vld [vmem:[%s1672] ss:$9 sm:$0xff]
    %v1725 = vld [vmem:[%s1674] ss:$9 sm:$0xff]
    %1726 = vst [vmem:[#allocation1] sm:$0xff] %v1059
    %v1727 = vld [vmem:[%s1668] ss:$9 sm:$0xff]
    %v1728 = vld [vmem:[%s1670] ss:$9 sm:$0xff]
    %v1729 = vld [vmem:[%s1672] ss:$9 sm:$0xff]
    %v1730 = vld [vmem:[%s1674] ss:$9 sm:$0xff]
    %1731 = vst [vmem:[#allocation1] sm:$0xff] %v1091
    %v1732 = vld [vmem:[%s1668] ss:$9 sm:$0xff]
    %v1733 = vld [vmem:[%s1670] ss:$9 sm:$0xff]
    %v1734 = vld [vmem:[%s1672] ss:$9 sm:$0xff]
    %v1735 = vld [vmem:[%s1674] ss:$9 sm:$0xff]
    %1736 = vst [vmem:[#allocation1] sm:$0xff] %v1123
    %v1737 = vld [vmem:[%s1668] ss:$9 sm:$0xff]
    %v1738 = vld [vmem:[%s1670] ss:$9 sm:$0xff]
    %v1739 = vld [vmem:[%s1672] ss:$9 sm:$0xff]
    %v1740 = vld [vmem:[%s1674] ss:$9 sm:$0xff]
    %1741 = vst [vmem:[#allocation1] sm:$0xff] %v1155
    %v1742 = vld [vmem:[%s1668] ss:$9 sm:$0xff]
    %v1743 = vld [vmem:[%s1670] ss:$9 sm:$0xff]
    %v1744 = vld [vmem:[%s1672] ss:$9 sm:$0xff]
    %v1745 = vld [vmem:[%s1674] ss:$9 sm:$0xff]
    %1746 = vst [vmem:[#allocation1] sm:$0xff] %v1187
    %v1747 = vld [vmem:[%s1668] ss:$9 sm:$0xff]
    %v1748 = vld [vmem:[%s1670] ss:$9 sm:$0xff]
    %v1749 = vld [vmem:[%s1672] ss:$9 sm:$0xff]
    %v1750 = vld [vmem:[%s1674] ss:$9 sm:$0xff]
    %v1751 = vperm.slane %v1669, 0
    %v1752 = vperm.slane %v1671, 0
    %v1753 = vperm.slane %v1673, 0
    %v1754 = vperm.slane %v1675, 0
    %v1755 = vperm.slane %v1677, 0
    %v1756 = vperm.slane %v1678, 0
    %v1757 = vperm.slane %v1679, 0
    %v1758 = vperm.slane %v1680, 0
    %v1759 = vperm.slane %v1682, 0
    %v1760 = vperm.slane %v1683, 0
    %v1761 = vperm.slane %v1684, 0
    %v1762 = vperm.slane %v1685, 0
    %v1763 = vperm.slane %v1687, 0
    %v1764 = vperm.slane %v1688, 0
    %v1765 = vperm.slane %v1689, 0
    %v1766 = vperm.slane %v1690, 0
    %v1767 = vperm.slane %v1692, 0
    %v1768 = vperm.slane %v1693, 0
    %v1769 = vperm.slane %v1694, 0
    %v1770 = vperm.slane %v1695, 0
    %v1771 = vperm.slane %v1697, 0
    %v1772 = vperm.slane %v1698, 0
    %v1773 = vperm.slane %v1699, 0
    %v1774 = vperm.slane %v1700, 0
    %v1775 = vperm.slane %v1702, 0
    %v1776 = vperm.slane %v1703, 0
    %v1777 = vperm.slane %v1704, 0
    %v1778 = vperm.slane %v1705, 0
    %v1779 = vperm.slane %v1707, 0
    %v1780 = vperm.slane %v1708, 0
    %v1781 = vperm.slane %v1709, 0
    %v1782 = vperm.slane %v1710, 0
    %v1783 = vperm.slane %v1712, 0
    %v1784 = vperm.slane %v1713, 0
    %v1785 = vperm.slane %v1714, 0
    %v1786 = vperm.slane %v1715, 0
    %v1787 = vperm.slane %v1717, 0
    %v1788 = vperm.slane %v1718, 0
    %v1789 = vperm.slane %v1719, 0
    %v1790 = vperm.slane %v1720, 0
    %v1791 = vperm.slane %v1722, 0
    %v1792 = vperm.slane %v1723, 0
    %v1793 = vperm.slane %v1724, 0
    %v1794 = vperm.slane %v1725, 0
    %v1795 = vperm.slane %v1727, 0
    %v1796 = vperm.slane %v1728, 0
    %v1797 = vperm.slane %v1729, 0
    %v1798 = vperm.slane %v1730, 0
    %v1799 = vperm.slane %v1732, 0
    %v1800 = vperm.slane %v1733, 0
    %v1801 = vperm.slane %v1734, 0
    %v1802 = vperm.slane %v1735, 0
    %v1803 = vperm.slane %v1737, 0
    %v1804 = vperm.slane %v1738, 0
    %v1805 = vperm.slane %v1739, 0
    %v1806 = vperm.slane %v1740, 0
    %v1807 = vperm.slane %v1742, 0
    %v1808 = vperm.slane %v1743, 0
    %v1809 = vperm.slane %v1744, 0
    %v1810 = vperm.slane %v1745, 0
    %v1811 = vperm.slane %v1747, 0
    %v1812 = vperm.slane %v1748, 0
    %v1813 = vperm.slane %v1749, 0
    %v1814 = vperm.slane %v1750, 0
    %v1879 = vadd.f32 %v1209, %v1751
    %v1880 = vadd.f32 %v1216, %v1752
    %v1881 = vadd.f32 %v1223, %v1753
    %v1882 = vadd.f32 %v1230, %v1754
    %v1883 = vadd.f32 %v1237, %v1755
    %v1884 = vadd.f32 %v1244, %v1756
    %v1885 = vadd.f32 %v1251, %v1757
    %v1886 = vadd.f32 %v1258, %v1758
    %v1887 = vadd.f32 %v1265, %v1759
    %v1888 = vadd.f32 %v1272, %v1760
    %v1889 = vadd.f32 %v1279, %v1761
    %v1890 = vadd.f32 %v1286, %v1762
    %v1891 = vadd.f32 %v1293, %v1763
    %v1892 = vadd.f32 %v1300, %v1764
    %v1893 = vadd.f32 %v1307, %v1765
    %v1894 = vadd.f32 %v1314, %v1766
    %v1895 = vadd.f32 %v1321, %v1767
    %v1896 = vadd.f32 %v1328, %v1768
    %v1897 = vadd.f32 %v1335, %v1769
    %v1898 = vadd.f32 %v1342, %v1770
    %v1899 = vadd.f32 %v1349, %v1771
    %v1900 = vadd.f32 %v1356, %v1772
    %v1901 = vadd.f32 %v1363, %v1773
    %v1902 = vadd.f32 %v1370, %v1774
    %v1903 = vadd.f32 %v1377, %v1775
    %v1904 = vadd.f32 %v1384, %v1776
    %v1905 = vadd.f32 %v1391, %v1777
    %v1906 = vadd.f32 %v1398, %v1778
    %v1907 = vadd.f32 %v1405, %v1779
    %v1908 = vadd.f32 %v1412, %v1780
    %v1909 = vadd.f32 %v1419, %v1781
    %v1910 = vadd.f32 %v1426, %v1782
    %v1911 = vadd.f32 %v1433, %v1783
    %v1912 = vadd.f32 %v1440, %v1784
    %v1913 = vadd.f32 %v1447, %v1785
    %v1914 = vadd.f32 %v1454, %v1786
    %v1915 = vadd.f32 %v1461, %v1787
    %v1916 = vadd.f32 %v1468, %v1788
    %v1917 = vadd.f32 %v1475, %v1789
    %v1918 = vadd.f32 %v1482, %v1790
    %v1919 = vadd.f32 %v1489, %v1791
    %v1920 = vadd.f32 %v1496, %v1792
    %v1921 = vadd.f32 %v1503, %v1793
    %v1922 = vadd.f32 %v1510, %v1794
    %v1923 = vadd.f32 %v1517, %v1795
    %v1924 = vadd.f32 %v1524, %v1796
    %v1925 = vadd.f32 %v1531, %v1797
    %v1926 = vadd.f32 %v1538, %v1798
    %v1927 = vadd.f32 %v1545, %v1799
    %v1928 = vadd.f32 %v1552, %v1800
    %v1929 = vadd.f32 %v1559, %v1801
    %v1930 = vadd.f32 %v1566, %v1802
    %v1931 = vadd.f32 %v1573, %v1803
    %v1932 = vadd.f32 %v1580, %v1804
    %v1933 = vadd.f32 %v1587, %v1805
    %v1934 = vadd.f32 %v1594, %v1806
    %v1935 = vadd.f32 %v1601, %v1807
    %v1936 = vadd.f32 %v1608, %v1808
    %v1937 = vadd.f32 %v1615, %v1809
    %v1938 = vadd.f32 %v1622, %v1810
    %v1939 = vadd.f32 %v1629, %v1811
    %v1940 = vadd.f32 %v1636, %v1812
    %v1941 = vadd.f32 %v1643, %v1813
    %v1942 = vadd.f32 %v1650, %v1814
    %vm1943 = vcmp.ge.f32.partialorder %v1879, 0.0
    %vm1944 = vcmp.ge.f32.partialorder %v1880, 0.0
    %vm1945 = vcmp.ge.f32.partialorder %v1881, 0.0
    %vm1946 = vcmp.ge.f32.partialorder %v1882, 0.0
    %vm1947 = vcmp.ge.f32.partialorder %v1883, 0.0
    %vm1948 = vcmp.ge.f32.partialorder %v1884, 0.0
    %vm1949 = vcmp.ge.f32.partialorder %v1885, 0.0
    %vm1950 = vcmp.ge.f32.partialorder %v1886, 0.0
    %vm1951 = vcmp.ge.f32.partialorder %v1887, 0.0
    %vm1952 = vcmp.ge.f32.partialorder %v1888, 0.0
    %vm1953 = vcmp.ge.f32.partialorder %v1889, 0.0
    %vm1954 = vcmp.ge.f32.partialorder %v1890, 0.0
    %vm1955 = vcmp.ge.f32.partialorder %v1891, 0.0
    %vm1956 = vcmp.ge.f32.partialorder %v1892, 0.0
    %vm1957 = vcmp.ge.f32.partialorder %v1893, 0.0
    %vm1958 = vcmp.ge.f32.partialorder %v1894, 0.0
    %vm1959 = vcmp.ge.f32.partialorder %v1895, 0.0
    %vm1960 = vcmp.ge.f32.partialorder %v1896, 0.0
    %vm1961 = vcmp.ge.f32.partialorder %v1897, 0.0
    %vm1962 = vcmp.ge.f32.partialorder %v1898, 0.0
    %vm1963 = vcmp.ge.f32.partialorder %v1899, 0.0
    %vm1964 = vcmp.ge.f32.partialorder %v1900, 0.0
    %vm1965 = vcmp.ge.f32.partialorder %v1901, 0.0
    %vm1966 = vcmp.ge.f32.partialorder %v1902, 0.0
    %vm1967 = vcmp.ge.f32.partialorder %v1903, 0.0
    %vm1968 = vcmp.ge.f32.partialorder %v1904, 0.0
    %vm1969 = vcmp.ge.f32.partialorder %v1905, 0.0
    %vm1970 = vcmp.ge.f32.partialorder %v1906, 0.0
    %vm1971 = vcmp.ge.f32.partialorder %v1907, 0.0
    %vm1972 = vcmp.ge.f32.partialorder %v1908, 0.0
    %vm1973 = vcmp.ge.f32.partialorder %v1909, 0.0
    %vm1974 = vcmp.ge.f32.partialorder %v1910, 0.0
    %vm1975 = vcmp.ge.f32.partialorder %v1911, 0.0
    %vm1976 = vcmp.ge.f32.partialorder %v1912, 0.0
    %vm1977 = vcmp.ge.f32.partialorder %v1913, 0.0
    %vm1978 = vcmp.ge.f32.partialorder %v1914, 0.0
    %vm1979 = vcmp.ge.f32.partialorder %v1915, 0.0
    %vm1980 = vcmp.ge.f32.partialorder %v1916, 0.0
    %vm1981 = vcmp.ge.f32.partialorder %v1917, 0.0
    %vm1982 = vcmp.ge.f32.partialorder %v1918, 0.0
    %vm1983 = vcmp.ge.f32.partialorder %v1919, 0.0
    %vm1984 = vcmp.ge.f32.partialorder %v1920, 0.0
    %vm1985 = vcmp.ge.f32.partialorder %v1921, 0.0
    %vm1986 = vcmp.ge.f32.partialorder %v1922, 0.0
    %vm1987 = vcmp.ge.f32.partialorder %v1923, 0.0
    %vm1988 = vcmp.ge.f32.partialorder %v1924, 0.0
    %vm1989 = vcmp.ge.f32.partialorder %v1925, 0.0
    %vm1990 = vcmp.ge.f32.partialorder %v1926, 0.0
    %vm1991 = vcmp.ge.f32.partialorder %v1927, 0.0
    %vm1992 = vcmp.ge.f32.partialorder %v1928, 0.0
    %vm1993 = vcmp.ge.f32.partialorder %v1929, 0.0
    %vm1994 = vcmp.ge.f32.partialorder %v1930, 0.0
    %vm1995 = vcmp.ge.f32.partialorder %v1931, 0.0
    %vm1996 = vcmp.ge.f32.partialorder %v1932, 0.0
    %vm1997 = vcmp.ge.f32.partialorder %v1933, 0.0
    %vm1998 = vcmp.ge.f32.partialorder %v1934, 0.0
    %vm1999 = vcmp.ge.f32.partialorder %v1935, 0.0
    %vm2000 = vcmp.ge.f32.partialorder %v1936, 0.0
    %vm2001 = vcmp.ge.f32.partialorder %v1937, 0.0
    %vm2002 = vcmp.ge.f32.partialorder %v1938, 0.0
    %vm2003 = vcmp.ge.f32.partialorder %v1939, 0.0
    %vm2004 = vcmp.ge.f32.partialorder %v1940, 0.0
    %vm2005 = vcmp.ge.f32.partialorder %v1941, 0.0
    %vm2006 = vcmp.ge.f32.partialorder %v1942, 0.0
    %v2007 = vmul.f32 %v1879, 0.01
    %v2008 = vmul.f32 %v1880, 0.01
    %v2009 = vmul.f32 %v1881, 0.01
    %v2010 = vmul.f32 %v1882, 0.01
    %v2011 = vmul.f32 %v1883, 0.01
    %v2012 = vmul.f32 %v1884, 0.01
    %v2013 = vmul.f32 %v1885, 0.01
    %v2014 = vmul.f32 %v1886, 0.01
    %v2015 = vmul.f32 %v1887, 0.01
    %v2016 = vmul.f32 %v1888, 0.01
    %v2017 = vmul.f32 %v1889, 0.01
    %v2018 = vmul.f32 %v1890, 0.01
    %v2019 = vmul.f32 %v1891, 0.01
    %v2020 = vmul.f32 %v1892, 0.01
    %v2021 = vmul.f32 %v1893, 0.01
    %v2022 = vmul.f32 %v1894, 0.01
    %v2023 = vmul.f32 %v1895, 0.01
    %v2024 = vmul.f32 %v1896, 0.01
    %v2025 = vmul.f32 %v1897, 0.01
    %v2026 = vmul.f32 %v1898, 0.01
    %v2027 = vmul.f32 %v1899, 0.01
    %v2028 = vmul.f32 %v1900, 0.01
    %v2029 = vmul.f32 %v1901, 0.01
    %v2030 = vmul.f32 %v1902, 0.01
    %v2031 = vmul.f32 %v1903, 0.01
    %v2032 = vmul.f32 %v1904, 0.01
    %v2033 = vmul.f32 %v1905, 0.01
    %v2034 = vmul.f32 %v1906, 0.01
    %v2035 = vmul.f32 %v1907, 0.01
    %v2036 = vmul.f32 %v1908, 0.01
    %v2037 = vmul.f32 %v1909, 0.01
    %v2038 = vmul.f32 %v1910, 0.01
    %v2039 = vmul.f32 %v1911, 0.01
    %v2040 = vmul.f32 %v1912, 0.01
    %v2041 = vmul.f32 %v1913, 0.01
    %v2042 = vmul.f32 %v1914, 0.01
    %v2043 = vmul.f32 %v1915, 0.01
    %v2044 = vmul.f32 %v1916, 0.01
    %v2045 = vmul.f32 %v1917, 0.01
    %v2046 = vmul.f32 %v1918, 0.01
    %v2047 = vmul.f32 %v1919, 0.01
    %v2048 = vmul.f32 %v1920, 0.01
    %v2049 = vmul.f32 %v1921, 0.01
    %v2050 = vmul.f32 %v1922, 0.01
    %v2051 = vmul.f32 %v1923, 0.01
    %v2052 = vmul.f32 %v1924, 0.01
    %v2053 = vmul.f32 %v1925, 0.01
    %v2054 = vmul.f32 %v1926, 0.01
    %v2055 = vmul.f32 %v1927, 0.01
    %v2056 = vmul.f32 %v1928, 0.01
    %v2057 = vmul.f32 %v1929, 0.01
    %v2058 = vmul.f32 %v1930, 0.01
    %v2059 = vmul.f32 %v1931, 0.01
    %v2060 = vmul.f32 %v1932, 0.01
    %v2061 = vmul.f32 %v1933, 0.01
    %v2062 = vmul.f32 %v1934, 0.01
    %v2063 = vmul.f32 %v1935, 0.01
    %v2064 = vmul.f32 %v1936, 0.01
    %v2065 = vmul.f32 %v1937, 0.01
    %v2066 = vmul.f32 %v1938, 0.01
    %v2067 = vmul.f32 %v1939, 0.01
    %v2068 = vmul.f32 %v1940, 0.01
    %v2069 = vmul.f32 %v1941, 0.01
    %v2070 = vmul.f32 %v1942, 0.01
    %v2071 = vsel %vm1943, %v1879, %v2007
    %v2072 = vsel %vm1944, %v1880, %v2008
    %v2073 = vsel %vm1945, %v1881, %v2009
    %v2074 = vsel %vm1946, %v1882, %v2010
    %v2075 = vsel %vm1947, %v1883, %v2011
    %v2076 = vsel %vm1948, %v1884, %v2012
    %v2077 = vsel %vm1949, %v1885, %v2013
    %v2078 = vsel %vm1950, %v1886, %v2014
    %v2079 = vsel %vm1951, %v1887, %v2015
    %v2080 = vsel %vm1952, %v1888, %v2016
    %v2081 = vsel %vm1953, %v1889, %v2017
    %v2082 = vsel %vm1954, %v1890, %v2018
    %v2083 = vsel %vm1955, %v1891, %v2019
    %v2084 = vsel %vm1956, %v1892, %v2020
    %v2085 = vsel %vm1957, %v1893, %v2021
    %v2086 = vsel %vm1958, %v1894, %v2022
    %v2087 = vsel %vm1959, %v1895, %v2023
    %v2088 = vsel %vm1960, %v1896, %v2024
    %v2089 = vsel %vm1961, %v1897, %v2025
    %v2090 = vsel %vm1962, %v1898, %v2026
    %v2091 = vsel %vm1963, %v1899, %v2027
    %v2092 = vsel %vm1964, %v1900, %v2028
    %v2093 = vsel %vm1965, %v1901, %v2029
    %v2094 = vsel %vm1966, %v1902, %v2030
    %v2095 = vsel %vm1967, %v1903, %v2031
    %v2096 = vsel %vm1968, %v1904, %v2032
    %v2097 = vsel %vm1969, %v1905, %v2033
    %v2098 = vsel %vm1970, %v1906, %v2034
    %v2099 = vsel %vm1971, %v1907, %v2035
    %v2100 = vsel %vm1972, %v1908, %v2036
    %v2101 = vsel %vm1973, %v1909, %v2037
    %v2102 = vsel %vm1974, %v1910, %v2038
    %v2103 = vsel %vm1975, %v1911, %v2039
    %v2104 = vsel %vm1976, %v1912, %v2040
    %v2105 = vsel %vm1977, %v1913, %v2041
    %v2106 = vsel %vm1978, %v1914, %v2042
    %v2107 = vsel %vm1979, %v1915, %v2043
    %v2108 = vsel %vm1980, %v1916, %v2044
    %v2109 = vsel %vm1981, %v1917, %v2045
    %v2110 = vsel %vm1982, %v1918, %v2046
    %v2111 = vsel %vm1983, %v1919, %v2047
    %v2112 = vsel %vm1984, %v1920, %v2048
    %v2113 = vsel %vm1985, %v1921, %v2049
    %v2114 = vsel %vm1986, %v1922, %v2050
    %v2115 = vsel %vm1987, %v1923, %v2051
    %v2116 = vsel %vm1988, %v1924, %v2052
    %v2117 = vsel %vm1989, %v1925, %v2053
    %v2118 = vsel %vm1990, %v1926, %v2054
    %v2119 = vsel %vm1991, %v1927, %v2055
    %v2120 = vsel %vm1992, %v1928, %v2056
    %v2121 = vsel %vm1993, %v1929, %v2057
    %v2122 = vsel %vm1994, %v1930, %v2058
    %v2123 = vsel %vm1995, %v1931, %v2059
    %v2124 = vsel %vm1996, %v1932, %v2060
    %v2125 = vsel %vm1997, %v1933, %v2061
    %v2126 = vsel %vm1998, %v1934, %v2062
    %v2127 = vsel %vm1999, %v1935, %v2063
    %v2128 = vsel %vm2000, %v1936, %v2064
    %v2129 = vsel %vm2001, %v1937, %v2065
    %v2130 = vsel %vm2002, %v1938, %v2066
    %v2131 = vsel %vm2003, %v1939, %v2067
    %v2132 = vsel %vm2004, %v1940, %v2068
    %v2133 = vsel %vm2005, %v1941, %v2069
    %v2134 = vsel %vm2006, %v1942, %v2070
    %vm2135 = vcmask 64512
    %v2136 = vsel %vm2135, %v2071, -inf
    %2137 = vmax.xlane.f32.xlu0 %v2136
    %v2138 = vpop.xlane.xlu0 %2137
    %v2139 = vsel %vm2135, %v2072, -inf
    %2140 = vmax.xlane.f32.xlu0 %v2139
    %v2141 = vpop.xlane.xlu0 %2140
    %v2142 = vsel %vm2135, %v2073, -inf
    %2143 = vmax.xlane.f32.xlu0 %v2142
    %v2144 = vpop.xlane.xlu0 %2143
    %v2145 = vsel %vm2135, %v2074, -inf
    %2146 = vmax.xlane.f32.xlu0 %v2145
    %v2147 = vpop.xlane.xlu0 %2146
    %v2148 = vsel %vm2135, %v2075, -inf
    %2149 = vmax.xlane.f32.xlu0 %v2148
    %v2150 = vpop.xlane.xlu0 %2149
    %v2151 = vsel %vm2135, %v2076, -inf
    %2152 = vmax.xlane.f32.xlu0 %v2151
    %v2153 = vpop.xlane.xlu0 %2152
    %v2154 = vsel %vm2135, %v2077, -inf
    %2155 = vmax.xlane.f32.xlu0 %v2154
    %v2156 = vpop.xlane.xlu0 %2155
    %v2157 = vsel %vm2135, %v2078, -inf
    %2158 = vmax.xlane.f32.xlu0 %v2157
    %v2159 = vpop.xlane.xlu0 %2158
    %v2160 = vsel %vm2135, %v2079, -inf
    %2161 = vmax.xlane.f32.xlu0 %v2160
    %v2162 = vpop.xlane.xlu0 %2161
    %v2163 = vsel %vm2135, %v2080, -inf
    %2164 = vmax.xlane.f32.xlu0 %v2163
    %v2165 = vpop.xlane.xlu0 %2164
    %v2166 = vsel %vm2135, %v2081, -inf
    %2167 = vmax.xlane.f32.xlu0 %v2166
    %v2168 = vpop.xlane.xlu0 %2167
    %v2169 = vsel %vm2135, %v2082, -inf
    %2170 = vmax.xlane.f32.xlu0 %v2169
    %v2171 = vpop.xlane.xlu0 %2170
    %v2172 = vsel %vm2135, %v2083, -inf
    %2173 = vmax.xlane.f32.xlu0 %v2172
    %v2174 = vpop.xlane.xlu0 %2173
    %v2175 = vsel %vm2135, %v2084, -inf
    %2176 = vmax.xlane.f32.xlu0 %v2175
    %v2177 = vpop.xlane.xlu0 %2176
    %v2178 = vsel %vm2135, %v2085, -inf
    %2179 = vmax.xlane.f32.xlu0 %v2178
    %v2180 = vpop.xlane.xlu0 %2179
    %v2181 = vsel %vm2135, %v2086, -inf
    %2182 = vmax.xlane.f32.xlu0 %v2181
    %v2183 = vpop.xlane.xlu0 %2182
    %v2184 = vsel %vm2135, %v2087, -inf
    %2185 = vmax.xlane.f32.xlu0 %v2184
    %v2186 = vpop.xlane.xlu0 %2185
    %v2187 = vsel %vm2135, %v2088, -inf
    %2188 = vmax.xlane.f32.xlu0 %v2187
    %v2189 = vpop.xlane.xlu0 %2188
    %v2190 = vsel %vm2135, %v2089, -inf
    %2191 = vmax.xlane.f32.xlu0 %v2190
    %v2192 = vpop.xlane.xlu0 %2191
    %v2193 = vsel %vm2135, %v2090, -inf
    %2194 = vmax.xlane.f32.xlu0 %v2193
    %v2195 = vpop.xlane.xlu0 %2194
    %v2196 = vsel %vm2135, %v2091, -inf
    %2197 = vmax.xlane.f32.xlu0 %v2196
    %v2198 = vpop.xlane.xlu0 %2197
    %v2199 = vsel %vm2135, %v2092, -inf
    %2200 = vmax.xlane.f32.xlu0 %v2199
    %v2201 = vpop.xlane.xlu0 %2200
    %v2202 = vsel %vm2135, %v2093, -inf
    %2203 = vmax.xlane.f32.xlu0 %v2202
    %v2204 = vpop.xlane.xlu0 %2203
    %v2205 = vsel %vm2135, %v2094, -inf
    %2206 = vmax.xlane.f32.xlu0 %v2205
    %v2207 = vpop.xlane.xlu0 %2206
    %v2208 = vsel %vm2135, %v2095, -inf
    %2209 = vmax.xlane.f32.xlu0 %v2208
    %v2210 = vpop.xlane.xlu0 %2209
    %v2211 = vsel %vm2135, %v2096, -inf
    %2212 = vmax.xlane.f32.xlu0 %v2211
    %v2213 = vpop.xlane.xlu0 %2212
    %v2214 = vsel %vm2135, %v2097, -inf
    %2215 = vmax.xlane.f32.xlu0 %v2214
    %v2216 = vpop.xlane.xlu0 %2215
    %v2217 = vsel %vm2135, %v2098, -inf
    %2218 = vmax.xlane.f32.xlu0 %v2217
    %v2219 = vpop.xlane.xlu0 %2218
    %v2220 = vsel %vm2135, %v2099, -inf
    %2221 = vmax.xlane.f32.xlu0 %v2220
    %v2222 = vpop.xlane.xlu0 %2221
    %v2223 = vsel %vm2135, %v2100, -inf
    %2224 = vmax.xlane.f32.xlu0 %v2223
    %v2225 = vpop.xlane.xlu0 %2224
    %v2226 = vsel %vm2135, %v2101, -inf
    %2227 = vmax.xlane.f32.xlu0 %v2226
    %v2228 = vpop.xlane.xlu0 %2227
    %v2229 = vsel %vm2135, %v2102, -inf
    %2230 = vmax.xlane.f32.xlu0 %v2229
    %v2231 = vpop.xlane.xlu0 %2230
    %v2232 = vsel %vm2135, %v2103, -inf
    %2233 = vmax.xlane.f32.xlu0 %v2232
    %v2234 = vpop.xlane.xlu0 %2233
    %v2235 = vsel %vm2135, %v2104, -inf
    %2236 = vmax.xlane.f32.xlu0 %v2235
    %v2237 = vpop.xlane.xlu0 %2236
    %v2238 = vsel %vm2135, %v2105, -inf
    %2239 = vmax.xlane.f32.xlu0 %v2238
    %v2240 = vpop.xlane.xlu0 %2239
    %v2241 = vsel %vm2135, %v2106, -inf
    %2242 = vmax.xlane.f32.xlu0 %v2241
    %v2243 = vpop.xlane.xlu0 %2242
    %v2244 = vsel %vm2135, %v2107, -inf
    %2245 = vmax.xlane.f32.xlu0 %v2244
    %v2246 = vpop.xlane.xlu0 %2245
    %v2247 = vsel %vm2135, %v2108, -inf
    %2248 = vmax.xlane.f32.xlu0 %v2247
    %v2249 = vpop.xlane.xlu0 %2248
    %v2250 = vsel %vm2135, %v2109, -inf
    %2251 = vmax.xlane.f32.xlu0 %v2250
    %v2252 = vpop.xlane.xlu0 %2251
    %v2253 = vsel %vm2135, %v2110, -inf
    %2254 = vmax.xlane.f32.xlu0 %v2253
    %v2255 = vpop.xlane.xlu0 %2254
    %v2256 = vsel %vm2135, %v2111, -inf
    %2257 = vmax.xlane.f32.xlu0 %v2256
    %v2258 = vpop.xlane.xlu0 %2257
    %v2259 = vsel %vm2135, %v2112, -inf
    %2260 = vmax.xlane.f32.xlu0 %v2259
    %v2261 = vpop.xlane.xlu0 %2260
    %v2262 = vsel %vm2135, %v2113, -inf
    %2263 = vmax.xlane.f32.xlu0 %v2262
    %v2264 = vpop.xlane.xlu0 %2263
    %v2265 = vsel %vm2135, %v2114, -inf
    %2266 = vmax.xlane.f32.xlu0 %v2265
    %v2267 = vpop.xlane.xlu0 %2266
    %v2268 = vsel %vm2135, %v2115, -inf
    %2269 = vmax.xlane.f32.xlu0 %v2268
    %v2270 = vpop.xlane.xlu0 %2269
    %v2271 = vsel %vm2135, %v2116, -inf
    %2272 = vmax.xlane.f32.xlu0 %v2271
    %v2273 = vpop.xlane.xlu0 %2272
    %v2274 = vsel %vm2135, %v2117, -inf
    %2275 = vmax.xlane.f32.xlu0 %v2274
    %v2276 = vpop.xlane.xlu0 %2275
    %v2277 = vsel %vm2135, %v2118, -inf
    %2278 = vmax.xlane.f32.xlu0 %v2277
    %v2279 = vpop.xlane.xlu0 %2278
    %v2280 = vsel %vm2135, %v2119, -inf
    %2281 = vmax.xlane.f32.xlu0 %v2280
    %v2282 = vpop.xlane.xlu0 %2281
    %v2283 = vsel %vm2135, %v2120, -inf
    %2284 = vmax.xlane.f32.xlu0 %v2283
    %v2285 = vpop.xlane.xlu0 %2284
    %v2286 = vsel %vm2135, %v2121, -inf
    %2287 = vmax.xlane.f32.xlu0 %v2286
    %v2288 = vpop.xlane.xlu0 %2287
    %v2289 = vsel %vm2135, %v2122, -inf
    %2290 = vmax.xlane.f32.xlu0 %v2289
    %v2291 = vpop.xlane.xlu0 %2290
    %v2292 = vsel %vm2135, %v2123, -inf
    %2293 = vmax.xlane.f32.xlu0 %v2292
    %v2294 = vpop.xlane.xlu0 %2293
    %v2295 = vsel %vm2135, %v2124, -inf
    %2296 = vmax.xlane.f32.xlu0 %v2295
    %v2297 = vpop.xlane.xlu0 %2296
    %v2298 = vsel %vm2135, %v2125, -inf
    %2299 = vmax.xlane.f32.xlu0 %v2298
    %v2300 = vpop.xlane.xlu0 %2299
    %v2301 = vsel %vm2135, %v2126, -inf
    %2302 = vmax.xlane.f32.xlu0 %v2301
    %v2303 = vpop.xlane.xlu0 %2302
    %v2304 = vsel %vm2135, %v2127, -inf
    %2305 = vmax.xlane.f32.xlu0 %v2304
    %v2306 = vpop.xlane.xlu0 %2305
    %v2307 = vsel %vm2135, %v2128, -inf
    %2308 = vmax.xlane.f32.xlu0 %v2307
    %v2309 = vpop.xlane.xlu0 %2308
    %v2310 = vsel %vm2135, %v2129, -inf
    %2311 = vmax.xlane.f32.xlu0 %v2310
    %v2312 = vpop.xlane.xlu0 %2311
    %v2313 = vsel %vm2135, %v2130, -inf
    %2314 = vmax.xlane.f32.xlu0 %v2313
    %v2315 = vpop.xlane.xlu0 %2314
    %v2316 = vsel %vm2135, %v2131, -inf
    %2317 = vmax.xlane.f32.xlu0 %v2316
    %v2318 = vpop.xlane.xlu0 %2317
    %v2319 = vsel %vm2135, %v2132, -inf
    %2320 = vmax.xlane.f32.xlu0 %v2319
    %v2321 = vpop.xlane.xlu0 %2320
    %v2322 = vsel %vm2135, %v2133, -inf
    %2323 = vmax.xlane.f32.xlu0 %v2322
    %v2324 = vpop.xlane.xlu0 %2323
    %v2325 = vsel %vm2135, %v2134, -inf
    %2326 = vmax.xlane.f32.xlu0 %v2325
    %v2327 = vpop.xlane.xlu0 %2326
    %v2328 = vsub.f32 %v2071, %v2138
    %v2329 = vsub.f32 %v2072, %v2141
    %v2330 = vsub.f32 %v2073, %v2144
    %v2331 = vsub.f32 %v2074, %v2147
    %v2332 = vsub.f32 %v2075, %v2150
    %v2333 = vsub.f32 %v2076, %v2153
    %v2334 = vsub.f32 %v2077, %v2156
    %v2335 = vsub.f32 %v2078, %v2159
    %v2336 = vsub.f32 %v2079, %v2162
    %v2337 = vsub.f32 %v2080, %v2165
    %v2338 = vsub.f32 %v2081, %v2168
    %v2339 = vsub.f32 %v2082, %v2171
    %v2340 = vsub.f32 %v2083, %v2174
    %v2341 = vsub.f32 %v2084, %v2177
    %v2342 = vsub.f32 %v2085, %v2180
    %v2343 = vsub.f32 %v2086, %v2183
    %v2344 = vsub.f32 %v2087, %v2186
    %v2345 = vsub.f32 %v2088, %v2189
    %v2346 = vsub.f32 %v2089, %v2192
    %v2347 = vsub.f32 %v2090, %v2195
    %v2348 = vsub.f32 %v2091, %v2198
    %v2349 = vsub.f32 %v2092, %v2201
    %v2350 = vsub.f32 %v2093, %v2204
    %v2351 = vsub.f32 %v2094, %v2207
    %v2352 = vsub.f32 %v2095, %v2210
    %v2353 = vsub.f32 %v2096, %v2213
    %v2354 = vsub.f32 %v2097, %v2216
    %v2355 = vsub.f32 %v2098, %v2219
    %v2356 = vsub.f32 %v2099, %v2222
    %v2357 = vsub.f32 %v2100, %v2225
    %v2358 = vsub.f32 %v2101, %v2228
    %v2359 = vsub.f32 %v2102, %v2231
    %v2360 = vsub.f32 %v2103, %v2234
    %v2361 = vsub.f32 %v2104, %v2237
    %v2362 = vsub.f32 %v2105, %v2240
    %v2363 = vsub.f32 %v2106, %v2243
    %v2364 = vsub.f32 %v2107, %v2246
    %v2365 = vsub.f32 %v2108, %v2249
    %v2366 = vsub.f32 %v2109, %v2252
    %v2367 = vsub.f32 %v2110, %v2255
    %v2368 = vsub.f32 %v2111, %v2258
    %v2369 = vsub.f32 %v2112, %v2261
    %v2370 = vsub.f32 %v2113, %v2264
    %v2371 = vsub.f32 %v2114, %v2267
    %v2372 = vsub.f32 %v2115, %v2270
    %v2373 = vsub.f32 %v2116, %v2273
    %v2374 = vsub.f32 %v2117, %v2276
    %v2375 = vsub.f32 %v2118, %v2279
    %v2376 = vsub.f32 %v2119, %v2282
    %v2377 = vsub.f32 %v2120, %v2285
    %v2378 = vsub.f32 %v2121, %v2288
    %v2379 = vsub.f32 %v2122, %v2291
    %v2380 = vsub.f32 %v2123, %v2294
    %v2381 = vsub.f32 %v2124, %v2297
    %v2382 = vsub.f32 %v2125, %v2300
    %v2383 = vsub.f32 %v2126, %v2303
    %v2384 = vsub.f32 %v2127, %v2306
    %v2385 = vsub.f32 %v2128, %v2309
    %v2386 = vsub.f32 %v2129, %v2312
    %v2387 = vsub.f32 %v2130, %v2315
    %v2388 = vsub.f32 %v2131, %v2318
    %v2389 = vsub.f32 %v2132, %v2321
    %v2390 = vsub.f32 %v2133, %v2324
    %v2391 = vsub.f32 %v2134, %v2327
    %v2392 = vmul.f32 %v2328, 1.442695
    %v2393 = vpow.pop %v2392
    %v2394 = vmul.f32 %v2329, 1.442695
    %v2395 = vpow.pop %v2394
    %v2396 = vmul.f32 %v2330, 1.442695
    %v2397 = vpow.pop %v2396
    %v2398 = vmul.f32 %v2331, 1.442695
    %v2399 = vpow.pop %v2398
    %v2400 = vmul.f32 %v2332, 1.442695
    %v2401 = vpow.pop %v2400
    %v2402 = vmul.f32 %v2333, 1.442695
    %v2403 = vpow.pop %v2402
    %v2404 = vmul.f32 %v2334, 1.442695
    %v2405 = vpow.pop %v2404
    %v2406 = vmul.f32 %v2335, 1.442695
    %v2407 = vpow.pop %v2406
    %v2408 = vmul.f32 %v2336, 1.442695
    %v2409 = vpow.pop %v2408
    %v2410 = vmul.f32 %v2337, 1.442695
    %v2411 = vpow.pop %v2410
    %v2412 = vmul.f32 %v2338, 1.442695
    %v2413 = vpow.pop %v2412
    %v2414 = vmul.f32 %v2339, 1.442695
    %v2415 = vpow.pop %v2414
    %v2416 = vmul.f32 %v2340, 1.442695
    %v2417 = vpow.pop %v2416
    %v2418 = vmul.f32 %v2341, 1.442695
    %v2419 = vpow.pop %v2418
    %v2420 = vmul.f32 %v2342, 1.442695
    %v2421 = vpow.pop %v2420
    %v2422 = vmul.f32 %v2343, 1.442695
    %v2423 = vpow.pop %v2422
    %v2424 = vmul.f32 %v2344, 1.442695
    %v2425 = vpow.pop %v2424
    %v2426 = vmul.f32 %v2345, 1.442695
    %v2427 = vpow.pop %v2426
    %v2428 = vmul.f32 %v2346, 1.442695
    %v2429 = vpow.pop %v2428
    %v2430 = vmul.f32 %v2347, 1.442695
    %v2431 = vpow.pop %v2430
    %v2432 = vmul.f32 %v2348, 1.442695
    %v2433 = vpow.pop %v2432
    %v2434 = vmul.f32 %v2349, 1.442695
    %v2435 = vpow.pop %v2434
    %v2436 = vmul.f32 %v2350, 1.442695
    %v2437 = vpow.pop %v2436
    %v2438 = vmul.f32 %v2351, 1.442695
    %v2439 = vpow.pop %v2438
    %v2440 = vmul.f32 %v2352, 1.442695
    %v2441 = vpow.pop %v2440
    %v2442 = vmul.f32 %v2353, 1.442695
    %v2443 = vpow.pop %v2442
    %v2444 = vmul.f32 %v2354, 1.442695
    %v2445 = vpow.pop %v2444
    %v2446 = vmul.f32 %v2355, 1.442695
    %v2447 = vpow.pop %v2446
    %v2448 = vmul.f32 %v2356, 1.442695
    %v2449 = vpow.pop %v2448
    %v2450 = vmul.f32 %v2357, 1.442695
    %v2451 = vpow.pop %v2450
    %v2452 = vmul.f32 %v2358, 1.442695
    %v2453 = vpow.pop %v2452
    %v2454 = vmul.f32 %v2359, 1.442695
    %v2455 = vpow.pop %v2454
    %v2456 = vmul.f32 %v2360, 1.442695
    %v2457 = vpow.pop %v2456
    %v2458 = vmul.f32 %v2361, 1.442695
    %v2459 = vpow.pop %v2458
    %v2460 = vmul.f32 %v2362, 1.442695
    %v2461 = vpow.pop %v2460
    %v2462 = vmul.f32 %v2363, 1.442695
    %v2463 = vpow.pop %v2462
    %v2464 = vmul.f32 %v2364, 1.442695
    %v2465 = vpow.pop %v2464
    %v2466 = vmul.f32 %v2365, 1.442695
    %v2467 = vpow.pop %v2466
    %v2468 = vmul.f32 %v2366, 1.442695
    %v2469 = vpow.pop %v2468
    %v2470 = vmul.f32 %v2367, 1.442695
    %v2471 = vpow.pop %v2470
    %v2472 = vmul.f32 %v2368, 1.442695
    %v2473 = vpow.pop %v2472
    %v2474 = vmul.f32 %v2369, 1.442695
    %v2475 = vpow.pop %v2474
    %v2476 = vmul.f32 %v2370, 1.442695
    %v2477 = vpow.pop %v2476
    %v2478 = vmul.f32 %v2371, 1.442695
    %v2479 = vpow.pop %v2478
    %v2480 = vmul.f32 %v2372, 1.442695
    %v2481 = vpow.pop %v2480
    %v2482 = vmul.f32 %v2373, 1.442695
    %v2483 = vpow.pop %v2482
    %v2484 = vmul.f32 %v2374, 1.442695
    %v2485 = vpow.pop %v2484
    %v2486 = vmul.f32 %v2375, 1.442695
    %v2487 = vpow.pop %v2486
    %v2488 = vmul.f32 %v2376, 1.442695
    %v2489 = vpow.pop %v2488
    %v2490 = vmul.f32 %v2377, 1.442695
    %v2491 = vpow.pop %v2490
    %v2492 = vmul.f32 %v2378, 1.442695
    %v2493 = vpow.pop %v2492
    %v2494 = vmul.f32 %v2379, 1.442695
    %v2495 = vpow.pop %v2494
    %v2496 = vmul.f32 %v2380, 1.442695
    %v2497 = vpow.pop %v2496
    %v2498 = vmul.f32 %v2381, 1.442695
    %v2499 = vpow.pop %v2498
    %v2500 = vmul.f32 %v2382, 1.442695
    %v2501 = vpow.pop %v2500
    %v2502 = vmul.f32 %v2383, 1.442695
    %v2503 = vpow.pop %v2502
    %v2504 = vmul.f32 %v2384, 1.442695
    %v2505 = vpow.pop %v2504
    %v2506 = vmul.f32 %v2385, 1.442695
    %v2507 = vpow.pop %v2506
    %v2508 = vmul.f32 %v2386, 1.442695
    %v2509 = vpow.pop %v2508
    %v2510 = vmul.f32 %v2387, 1.442695
    %v2511 = vpow.pop %v2510
    %v2512 = vmul.f32 %v2388, 1.442695
    %v2513 = vpow.pop %v2512
    %v2514 = vmul.f32 %v2389, 1.442695
    %v2515 = vpow.pop %v2514
    %v2516 = vmul.f32 %v2390, 1.442695
    %v2517 = vpow.pop %v2516
    %v2518 = vmul.f32 %v2391, 1.442695
    %v2519 = vpow.pop %v2518
    %v2520 = vsel %vm2135, %v2393, 0.0
    %2521 = vadd.xlane.f32.xlu0 %v2520
    %v2522 = vpop.xlane.xlu0 %2521
    %v2523 = vsel %vm2135, %v2395, 0.0
    %2524 = vadd.xlane.f32.xlu0 %v2523
    %v2525 = vpop.xlane.xlu0 %2524
    %v2526 = vsel %vm2135, %v2397, 0.0
    %2527 = vadd.xlane.f32.xlu0 %v2526
    %v2528 = vpop.xlane.xlu0 %2527
    %v2529 = vsel %vm2135, %v2399, 0.0
    %2530 = vadd.xlane.f32.xlu0 %v2529
    %v2531 = vpop.xlane.xlu0 %2530
    %v2532 = vsel %vm2135, %v2401, 0.0
    %2533 = vadd.xlane.f32.xlu0 %v2532
    %v2534 = vpop.xlane.xlu0 %2533
    %v2535 = vsel %vm2135, %v2403, 0.0
    %2536 = vadd.xlane.f32.xlu0 %v2535
    %v2537 = vpop.xlane.xlu0 %2536
    %v2538 = vsel %vm2135, %v2405, 0.0
    %2539 = vadd.xlane.f32.xlu0 %v2538
    %v2540 = vpop.xlane.xlu0 %2539
    %v2541 = vsel %vm2135, %v2407, 0.0
    %2542 = vadd.xlane.f32.xlu0 %v2541
    %v2543 = vpop.xlane.xlu0 %2542
    %v2544 = vsel %vm2135, %v2409, 0.0
    %2545 = vadd.xlane.f32.xlu0 %v2544
    %v2546 = vpop.xlane.xlu0 %2545
    %v2547 = vsel %vm2135, %v2411, 0.0
    %2548 = vadd.xlane.f32.xlu0 %v2547
    %v2549 = vpop.xlane.xlu0 %2548
    %v2550 = vsel %vm2135, %v2413, 0.0
    %2551 = vadd.xlane.f32.xlu0 %v2550
    %v2552 = vpop.xlane.xlu0 %2551
    %v2553 = vsel %vm2135, %v2415, 0.0
    %2554 = vadd.xlane.f32.xlu0 %v2553
    %v2555 = vpop.xlane.xlu0 %2554
    %v2556 = vsel %vm2135, %v2417, 0.0
    %2557 = vadd.xlane.f32.xlu0 %v2556
    %v2558 = vpop.xlane.xlu0 %2557
    %v2559 = vsel %vm2135, %v2419, 0.0
    %2560 = vadd.xlane.f32.xlu0 %v2559
    %v2561 = vpop.xlane.xlu0 %2560
    %v2562 = vsel %vm2135, %v2421, 0.0
    %2563 = vadd.xlane.f32.xlu0 %v2562
    %v2564 = vpop.xlane.xlu0 %2563
    %v2565 = vsel %vm2135, %v2423, 0.0
    %2566 = vadd.xlane.f32.xlu0 %v2565
    %v2567 = vpop.xlane.xlu0 %2566
    %v2568 = vsel %vm2135, %v2425, 0.0
    %2569 = vadd.xlane.f32.xlu0 %v2568
    %v2570 = vpop.xlane.xlu0 %2569
    %v2571 = vsel %vm2135, %v2427, 0.0
    %2572 = vadd.xlane.f32.xlu0 %v2571
    %v2573 = vpop.xlane.xlu0 %2572
    %v2574 = vsel %vm2135, %v2429, 0.0
    %2575 = vadd.xlane.f32.xlu0 %v2574
    %v2576 = vpop.xlane.xlu0 %2575
    %v2577 = vsel %vm2135, %v2431, 0.0
    %2578 = vadd.xlane.f32.xlu0 %v2577
    %v2579 = vpop.xlane.xlu0 %2578
    %v2580 = vsel %vm2135, %v2433, 0.0
    %2581 = vadd.xlane.f32.xlu0 %v2580
    %v2582 = vpop.xlane.xlu0 %2581
    %v2583 = vsel %vm2135, %v2435, 0.0
    %2584 = vadd.xlane.f32.xlu0 %v2583
    %v2585 = vpop.xlane.xlu0 %2584
    %v2586 = vsel %vm2135, %v2437, 0.0
    %2587 = vadd.xlane.f32.xlu0 %v2586
    %v2588 = vpop.xlane.xlu0 %2587
    %v2589 = vsel %vm2135, %v2439, 0.0
    %2590 = vadd.xlane.f32.xlu0 %v2589
    %v2591 = vpop.xlane.xlu0 %2590
    %v2592 = vsel %vm2135, %v2441, 0.0
    %2593 = vadd.xlane.f32.xlu0 %v2592
    %v2594 = vpop.xlane.xlu0 %2593
    %v2595 = vsel %vm2135, %v2443, 0.0
    %2596 = vadd.xlane.f32.xlu0 %v2595
    %v2597 = vpop.xlane.xlu0 %2596
    %v2598 = vsel %vm2135, %v2445, 0.0
    %2599 = vadd.xlane.f32.xlu0 %v2598
    %v2600 = vpop.xlane.xlu0 %2599
    %v2601 = vsel %vm2135, %v2447, 0.0
    %2602 = vadd.xlane.f32.xlu0 %v2601
    %v2603 = vpop.xlane.xlu0 %2602
    %v2604 = vsel %vm2135, %v2449, 0.0
    %2605 = vadd.xlane.f32.xlu0 %v2604
    %v2606 = vpop.xlane.xlu0 %2605
    %v2607 = vsel %vm2135, %v2451, 0.0
    %2608 = vadd.xlane.f32.xlu0 %v2607
    %v2609 = vpop.xlane.xlu0 %2608
    %v2610 = vsel %vm2135, %v2453, 0.0
    %2611 = vadd.xlane.f32.xlu0 %v2610
    %v2612 = vpop.xlane.xlu0 %2611
    %v2613 = vsel %vm2135, %v2455, 0.0
    %2614 = vadd.xlane.f32.xlu0 %v2613
    %v2615 = vpop.xlane.xlu0 %2614
    %v2616 = vsel %vm2135, %v2457, 0.0
    %2617 = vadd.xlane.f32.xlu0 %v2616
    %v2618 = vpop.xlane.xlu0 %2617
    %v2619 = vsel %vm2135, %v2459, 0.0
    %2620 = vadd.xlane.f32.xlu0 %v2619
    %v2621 = vpop.xlane.xlu0 %2620
    %v2622 = vsel %vm2135, %v2461, 0.0
    %2623 = vadd.xlane.f32.xlu0 %v2622
    %v2624 = vpop.xlane.xlu0 %2623
    %v2625 = vsel %vm2135, %v2463, 0.0
    %2626 = vadd.xlane.f32.xlu0 %v2625
    %v2627 = vpop.xlane.xlu0 %2626
    %v2628 = vsel %vm2135, %v2465, 0.0
    %2629 = vadd.xlane.f32.xlu0 %v2628
    %v2630 = vpop.xlane.xlu0 %2629
    %v2631 = vsel %vm2135, %v2467, 0.0
    %2632 = vadd.xlane.f32.xlu0 %v2631
    %v2633 = vpop.xlane.xlu0 %2632
    %v2634 = vsel %vm2135, %v2469, 0.0
    %2635 = vadd.xlane.f32.xlu0 %v2634
    %v2636 = vpop.xlane.xlu0 %2635
    %v2637 = vsel %vm2135, %v2471, 0.0
    %2638 = vadd.xlane.f32.xlu0 %v2637
    %v2639 = vpop.xlane.xlu0 %2638
    %v2640 = vsel %vm2135, %v2473, 0.0
    %2641 = vadd.xlane.f32.xlu0 %v2640
    %v2642 = vpop.xlane.xlu0 %2641
    %v2643 = vsel %vm2135, %v2475, 0.0
    %2644 = vadd.xlane.f32.xlu0 %v2643
    %v2645 = vpop.xlane.xlu0 %2644
    %v2646 = vsel %vm2135, %v2477, 0.0
    %2647 = vadd.xlane.f32.xlu0 %v2646
    %v2648 = vpop.xlane.xlu0 %2647
    %v2649 = vsel %vm2135, %v2479, 0.0
    %2650 = vadd.xlane.f32.xlu0 %v2649
    %v2651 = vpop.xlane.xlu0 %2650
    %v2652 = vsel %vm2135, %v2481, 0.0
    %2653 = vadd.xlane.f32.xlu0 %v2652
    %v2654 = vpop.xlane.xlu0 %2653
    %v2655 = vsel %vm2135, %v2483, 0.0
    %2656 = vadd.xlane.f32.xlu0 %v2655
    %v2657 = vpop.xlane.xlu0 %2656
    %v2658 = vsel %vm2135, %v2485, 0.0
    %2659 = vadd.xlane.f32.xlu0 %v2658
    %v2660 = vpop.xlane.xlu0 %2659
    %v2661 = vsel %vm2135, %v2487, 0.0
    %2662 = vadd.xlane.f32.xlu0 %v2661
    %v2663 = vpop.xlane.xlu0 %2662
    %v2664 = vsel %vm2135, %v2489, 0.0
    %2665 = vadd.xlane.f32.xlu0 %v2664
    %v2666 = vpop.xlane.xlu0 %2665
    %v2667 = vsel %vm2135, %v2491, 0.0
    %2668 = vadd.xlane.f32.xlu0 %v2667
    %v2669 = vpop.xlane.xlu0 %2668
    %v2670 = vsel %vm2135, %v2493, 0.0
    %2671 = vadd.xlane.f32.xlu0 %v2670
    %v2672 = vpop.xlane.xlu0 %2671
    %v2673 = vsel %vm2135, %v2495, 0.0
    %2674 = vadd.xlane.f32.xlu0 %v2673
    %v2675 = vpop.xlane.xlu0 %2674
    %v2676 = vsel %vm2135, %v2497, 0.0
    %2677 = vadd.xlane.f32.xlu0 %v2676
    %v2678 = vpop.xlane.xlu0 %2677
    %v2679 = vsel %vm2135, %v2499, 0.0
    %2680 = vadd.xlane.f32.xlu0 %v2679
    %v2681 = vpop.xlane.xlu0 %2680
    %v2682 = vsel %vm2135, %v2501, 0.0
    %2683 = vadd.xlane.f32.xlu0 %v2682
    %v2684 = vpop.xlane.xlu0 %2683
    %v2685 = vsel %vm2135, %v2503, 0.0
    %2686 = vadd.xlane.f32.xlu0 %v2685
    %v2687 = vpop.xlane.xlu0 %2686
    %v2688 = vsel %vm2135, %v2505, 0.0
    %2689 = vadd.xlane.f32.xlu0 %v2688
    %v2690 = vpop.xlane.xlu0 %2689
    %v2691 = vsel %vm2135, %v2507, 0.0
    %2692 = vadd.xlane.f32.xlu0 %v2691
    %v2693 = vpop.xlane.xlu0 %2692
    %v2694 = vsel %vm2135, %v2509, 0.0
    %2695 = vadd.xlane.f32.xlu0 %v2694
    %v2696 = vpop.xlane.xlu0 %2695
    %v2697 = vsel %vm2135, %v2511, 0.0
    %2698 = vadd.xlane.f32.xlu0 %v2697
    %v2699 = vpop.xlane.xlu0 %2698
    %v2700 = vsel %vm2135, %v2513, 0.0
    %2701 = vadd.xlane.f32.xlu0 %v2700
    %v2702 = vpop.xlane.xlu0 %2701
    %v2703 = vsel %vm2135, %v2515, 0.0
    %2704 = vadd.xlane.f32.xlu0 %v2703
    %v2705 = vpop.xlane.xlu0 %2704
    %v2706 = vsel %vm2135, %v2517, 0.0
    %2707 = vadd.xlane.f32.xlu0 %v2706
    %v2708 = vpop.xlane.xlu0 %2707
    %v2709 = vsel %vm2135, %v2519, 0.0
    %2710 = vadd.xlane.f32.xlu0 %v2709
    %v2711 = vpop.xlane.xlu0 %2710
    %v2712 = vrcp.pop %v2522
    %v2713 = vrcp.pop %v2525
    %v2714 = vrcp.pop %v2528
    %v2715 = vrcp.pop %v2531
    %v2716 = vrcp.pop %v2534
    %v2717 = vrcp.pop %v2537
    %v2718 = vrcp.pop %v2540
    %v2719 = vrcp.pop %v2543
    %v2720 = vrcp.pop %v2546
    %v2721 = vrcp.pop %v2549
    %v2722 = vrcp.pop %v2552
    %v2723 = vrcp.pop %v2555
    %v2724 = vrcp.pop %v2558
    %v2725 = vrcp.pop %v2561
    %v2726 = vrcp.pop %v2564
    %v2727 = vrcp.pop %v2567
    %v2728 = vrcp.pop %v2570
    %v2729 = vrcp.pop %v2573
    %v2730 = vrcp.pop %v2576
    %v2731 = vrcp.pop %v2579
    %v2732 = vrcp.pop %v2582
    %v2733 = vrcp.pop %v2585
    %v2734 = vrcp.pop %v2588
    %v2735 = vrcp.pop %v2591
    %v2736 = vrcp.pop %v2594
    %v2737 = vrcp.pop %v2597
    %v2738 = vrcp.pop %v2600
    %v2739 = vrcp.pop %v2603
    %v2740 = vrcp.pop %v2606
    %v2741 = vrcp.pop %v2609
    %v2742 = vrcp.pop %v2612
    %v2743 = vrcp.pop %v2615
    %v2744 = vrcp.pop %v2618
    %v2745 = vrcp.pop %v2621
    %v2746 = vrcp.pop %v2624
    %v2747 = vrcp.pop %v2627
    %v2748 = vrcp.pop %v2630
    %v2749 = vrcp.pop %v2633
    %v2750 = vrcp.pop %v2636
    %v2751 = vrcp.pop %v2639
    %v2752 = vrcp.pop %v2642
    %v2753 = vrcp.pop %v2645
    %v2754 = vrcp.pop %v2648
    %v2755 = vrcp.pop %v2651
    %v2756 = vrcp.pop %v2654
    %v2757 = vrcp.pop %v2657
    %v2758 = vrcp.pop %v2660
    %v2759 = vrcp.pop %v2663
    %v2760 = vrcp.pop %v2666
    %v2761 = vrcp.pop %v2669
    %v2762 = vrcp.pop %v2672
    %v2763 = vrcp.pop %v2675
    %v2764 = vrcp.pop %v2678
    %v2765 = vrcp.pop %v2681
    %v2766 = vrcp.pop %v2684
    %v2767 = vrcp.pop %v2687
    %v2768 = vrcp.pop %v2690
    %v2769 = vrcp.pop %v2693
    %v2770 = vrcp.pop %v2696
    %v2771 = vrcp.pop %v2699
    %v2772 = vrcp.pop %v2702
    %v2773 = vrcp.pop %v2705
    %v2774 = vrcp.pop %v2708
    %v2775 = vrcp.pop %v2711
    %v2776 = vmul.f32 %v2393, %v2712
    %v2777 = vmul.f32 %v2395, %v2713
    %v2778 = vmul.f32 %v2397, %v2714
    %v2779 = vmul.f32 %v2399, %v2715
    %v2780 = vmul.f32 %v2401, %v2716
    %v2781 = vmul.f32 %v2403, %v2717
    %v2782 = vmul.f32 %v2405, %v2718
    %v2783 = vmul.f32 %v2407, %v2719
    %v2784 = vmul.f32 %v2409, %v2720
    %v2785 = vmul.f32 %v2411, %v2721
    %v2786 = vmul.f32 %v2413, %v2722
    %v2787 = vmul.f32 %v2415, %v2723
    %v2788 = vmul.f32 %v2417, %v2724
    %v2789 = vmul.f32 %v2419, %v2725
    %v2790 = vmul.f32 %v2421, %v2726
    %v2791 = vmul.f32 %v2423, %v2727
    %v2792 = vmul.f32 %v2425, %v2728
    %v2793 = vmul.f32 %v2427, %v2729
    %v2794 = vmul.f32 %v2429, %v2730
    %v2795 = vmul.f32 %v2431, %v2731
    %v2796 = vmul.f32 %v2433, %v2732
    %v2797 = vmul.f32 %v2435, %v2733
    %v2798 = vmul.f32 %v2437, %v2734
    %v2799 = vmul.f32 %v2439, %v2735
    %v2800 = vmul.f32 %v2441, %v2736
    %v2801 = vmul.f32 %v2443, %v2737
    %v2802 = vmul.f32 %v2445, %v2738
    %v2803 = vmul.f32 %v2447, %v2739
    %v2804 = vmul.f32 %v2449, %v2740
    %v2805 = vmul.f32 %v2451, %v2741
    %v2806 = vmul.f32 %v2453, %v2742
    %v2807 = vmul.f32 %v2455, %v2743
    %v2808 = vmul.f32 %v2457, %v2744
    %v2809 = vmul.f32 %v2459, %v2745
    %v2810 = vmul.f32 %v2461, %v2746
    %v2811 = vmul.f32 %v2463, %v2747
    %v2812 = vmul.f32 %v2465, %v2748
    %v2813 = vmul.f32 %v2467, %v2749
    %v2814 = vmul.f32 %v2469, %v2750
    %v2815 = vmul.f32 %v2471, %v2751
    %v2816 = vmul.f32 %v2473, %v2752
    %v2817 = vmul.f32 %v2475, %v2753
    %v2818 = vmul.f32 %v2477, %v2754
    %v2819 = vmul.f32 %v2479, %v2755
    %v2820 = vmul.f32 %v2481, %v2756
    %v2821 = vmul.f32 %v2483, %v2757
    %v2822 = vmul.f32 %v2485, %v2758
    %v2823 = vmul.f32 %v2487, %v2759
    %v2824 = vmul.f32 %v2489, %v2760
    %v2825 = vmul.f32 %v2491, %v2761
    %v2826 = vmul.f32 %v2493, %v2762
    %v2827 = vmul.f32 %v2495, %v2763
    %v2828 = vmul.f32 %v2497, %v2764
    %v2829 = vmul.f32 %v2499, %v2765
    %v2830 = vmul.f32 %v2501, %v2766
    %v2831 = vmul.f32 %v2503, %v2767
    %v2832 = vmul.f32 %v2505, %v2768
    %v2833 = vmul.f32 %v2507, %v2769
    %v2834 = vmul.f32 %v2509, %v2770
    %v2835 = vmul.f32 %v2511, %v2771
    %v2836 = vmul.f32 %v2513, %v2772
    %v2837 = vmul.f32 %v2515, %v2773
    %v2838 = vmul.f32 %v2517, %v2774
    %v2839 = vmul.f32 %v2519, %v2775
    %v2840 = vld [vmem:[%s6] sm:$0xff]
    %v2841 = vld [vmem:[%s6 + $0x8] sm:$0xff]
    %v2842 = vld [vmem:[%s6 + $0x10] sm:$0xff]
    %v2843 = vld [vmem:[%s6 + $0x18] sm:$0xff]
    %v2844 = vld [vmem:[%s6 + $0x20] sm:$0xff]
    %v2845 = vld [vmem:[%s6 + $0x28] sm:$0xff]
    %v2846 = vld [vmem:[%s6 + $0x30] sm:$0xff]
    %v2847 = vld [vmem:[%s6 + $0x38] sm:$0xff]
    %v2848 = vld [vmem:[%s6 + $0x40] sm:$0xff]
    %v2849 = vld [vmem:[%s6 + $0x48] sm:$0xff]
    %v2850 = vld [vmem:[%s6 + $0x50] sm:$0xff]
    %v2851 = vld [vmem:[%s6 + $0x58] sm:$0xff]
    %v2852 = vld [vmem:[%s6 + $0x60] sm:$0xff]
    %v2853 = vld [vmem:[%s6 + $0x68] sm:$0xff]
    %v2854 = vld [vmem:[%s6 + $0x70] sm:$0xff]
    %v2855 = vld [vmem:[%s6 + $0x78] sm:$0xff]
    %v2856 = vld [vmem:[%s6 + $0x80] sm:$0xff]
    %v2857 = vld [vmem:[%s6 + $0x88] sm:$0xff]
    %v2858 = vld [vmem:[%s6 + $0x90] sm:$0xff]
    %v2859 = vld [vmem:[%s6 + $0x98] sm:$0xff]
    %v2861 = vsel %vm2135, %v2776, 0
    %2863 = vmatpush.msra.mxu0 0.0
    %2864 = vmatpush.msra.mxu0 0.0
    %2865 = vmatpush.msra.mxu0 0.0
    %2866 = vmatpush.msra.mxu0 0.0
    %2867 = vmatpush.msra.mxu0 0.0
    %2868 = vmatpush.msra.mxu0 0.0
    %2869 = vmatpush.msra.mxu0 0.0
    %2870 = vmatpush.msra.mxu0 0.0
    %2871 = vmatpush.msra.mxu0 0.0
    %2872 = vmatpush.msra.mxu0 0.0
    %2873 = vmatpush.msra.mxu0 0.0
    %2874 = vmatpush.msra.mxu0 0.0
    %2875 = vmatpush.msra.mxu0 0.0
    %2876 = vmatpush.msra.mxu0 0.0
    %2877 = vmatpush.msra.mxu0 0.0
    %2878 = vmatpush.msra.mxu0 %v563
    %2879 = vmatmul.f32.gmra.mxu0 %v2861
    %v2880 = vpop.f32.mrf.mxu0
    %v2881 = vadd.f32 0.0, %v2880
    %2882 = vdwg.mxu0
    %v2884 = vsel %vm2135, %v2780, 0
    %2886 = vmatpush.msra.mxu0 0.0
    %2887 = vmatpush.msra.mxu0 0.0
    %2888 = vmatpush.msra.mxu0 0.0
    %2889 = vmatpush.msra.mxu0 0.0
    %2890 = vmatpush.msra.mxu0 0.0
    %2891 = vmatpush.msra.mxu0 0.0
    %2892 = vmatpush.msra.mxu0 0.0
    %2893 = vmatpush.msra.mxu0 0.0
    %2894 = vmatpush.msra.mxu0 0.0
    %2895 = vmatpush.msra.mxu0 0.0
    %2896 = vmatpush.msra.mxu0 0.0
    %2897 = vmatpush.msra.mxu0 0.0
    %2898 = vmatpush.msra.mxu0 0.0
    %2899 = vmatpush.msra.mxu0 0.0
    %2900 = vmatpush.msra.mxu0 0.0
    %2901 = vmatpush.msra.mxu0 %v566
    %2902 = vmatmul.f32.gmra.mxu0 %v2884
    %v2903 = vpop.f32.mrf.mxu0
    %v2904 = vadd.f32 0.0, %v2903
    %2905 = vdwg.mxu0
    %v2907 = vsel %vm2135, %v2784, 0
    %2909 = vmatpush.msra.mxu0 0.0
    %2910 = vmatpush.msra.mxu0 0.0
    %2911 = vmatpush.msra.mxu0 0.0
    %2912 = vmatpush.msra.mxu0 0.0
    %2913 = vmatpush.msra.mxu0 0.0
    %2914 = vmatpush.msra.mxu0 0.0
    %2915 = vmatpush.msra.mxu0 0.0
    %2916 = vmatpush.msra.mxu0 0.0
    %2917 = vmatpush.msra.mxu0 0.0
    %2918 = vmatpush.msra.mxu0 0.0
    %2919 = vmatpush.msra.mxu0 0.0
    %2920 = vmatpush.msra.mxu0 0.0
    %2921 = vmatpush.msra.mxu0 0.0
    %2922 = vmatpush.msra.mxu0 0.0
    %2923 = vmatpush.msra.mxu0 0.0
    %2924 = vmatpush.msra.mxu0 %v569
    %2925 = vmatmul.f32.gmra.mxu0 %v2907
    %v2926 = vpop.f32.mrf.mxu0
    %v2927 = vadd.f32 0.0, %v2926
    %2928 = vdwg.mxu0
    %v2930 = vsel %vm2135, %v2788, 0
    %2932 = vmatpush.msra.mxu0 0.0
    %2933 = vmatpush.msra.mxu0 0.0
    %2934 = vmatpush.msra.mxu0 0.0
    %2935 = vmatpush.msra.mxu0 0.0
    %2936 = vmatpush.msra.mxu0 0.0
    %2937 = vmatpush.msra.mxu0 0.0
    %2938 = vmatpush.msra.mxu0 0.0
    %2939 = vmatpush.msra.mxu0 0.0
    %2940 = vmatpush.msra.mxu0 0.0
    %2941 = vmatpush.msra.mxu0 0.0
    %2942 = vmatpush.msra.mxu0 0.0
    %2943 = vmatpush.msra.mxu0 0.0
    %2944 = vmatpush.msra.mxu0 0.0
    %2945 = vmatpush.msra.mxu0 0.0
    %2946 = vmatpush.msra.mxu0 0.0
    %2947 = vmatpush.msra.mxu0 %v572
    %2948 = vmatmul.f32.gmra.mxu0 %v2930
    %v2949 = vpop.f32.mrf.mxu0
    %v2950 = vadd.f32 0.0, %v2949
    %2951 = vdwg.mxu0
    %v2953 = vsel %vm2135, %v2792, 0
    %2955 = vmatpush.msra.mxu0 0.0
    %2956 = vmatpush.msra.mxu0 0.0
    %2957 = vmatpush.msra.mxu0 0.0
    %2958 = vmatpush.msra.mxu0 0.0
    %2959 = vmatpush.msra.mxu0 0.0
    %2960 = vmatpush.msra.mxu0 0.0
    %2961 = vmatpush.msra.mxu0 0.0
    %2962 = vmatpush.msra.mxu0 0.0
    %2963 = vmatpush.msra.mxu0 0.0
    %2964 = vmatpush.msra.mxu0 0.0
    %2965 = vmatpush.msra.mxu0 0.0
    %2966 = vmatpush.msra.mxu0 0.0
    %2967 = vmatpush.msra.mxu0 0.0
    %2968 = vmatpush.msra.mxu0 0.0
    %2969 = vmatpush.msra.mxu0 0.0
    %2970 = vmatpush.msra.mxu0 %v575
    %2971 = vmatmul.f32.gmra.mxu0 %v2953
    %v2972 = vpop.f32.mrf.mxu0
    %v2973 = vadd.f32 0.0, %v2972
    %2974 = vdwg.mxu0
    %v2976 = vsel %vm2135, %v2796, 0
    %2978 = vmatpush.msra.mxu0 0.0
    %2979 = vmatpush.msra.mxu0 0.0
    %2980 = vmatpush.msra.mxu0 0.0
    %2981 = vmatpush.msra.mxu0 0.0
    %2982 = vmatpush.msra.mxu0 0.0
    %2983 = vmatpush.msra.mxu0 0.0
    %2984 = vmatpush.msra.mxu0 0.0
    %2985 = vmatpush.msra.mxu0 0.0
    %2986 = vmatpush.msra.mxu0 0.0
    %2987 = vmatpush.msra.mxu0 0.0
    %2988 = vmatpush.msra.mxu0 0.0
    %2989 = vmatpush.msra.mxu0 0.0
    %2990 = vmatpush.msra.mxu0 0.0
    %2991 = vmatpush.msra.mxu0 0.0
    %2992 = vmatpush.msra.mxu0 0.0
    %2993 = vmatpush.msra.mxu0 %v578
    %2994 = vmatmul.f32.gmra.mxu0 %v2976
    %v2995 = vpop.f32.mrf.mxu0
    %v2996 = vadd.f32 0.0, %v2995
    %2997 = vdwg.mxu0
    %v2999 = vsel %vm2135, %v2800, 0
    %3001 = vmatpush.msra.mxu0 0.0
    %3002 = vmatpush.msra.mxu0 0.0
    %3003 = vmatpush.msra.mxu0 0.0
    %3004 = vmatpush.msra.mxu0 0.0
    %3005 = vmatpush.msra.mxu0 0.0
    %3006 = vmatpush.msra.mxu0 0.0
    %3007 = vmatpush.msra.mxu0 0.0
    %3008 = vmatpush.msra.mxu0 0.0
    %3009 = vmatpush.msra.mxu0 0.0
    %3010 = vmatpush.msra.mxu0 0.0
    %3011 = vmatpush.msra.mxu0 0.0
    %3012 = vmatpush.msra.mxu0 0.0
    %3013 = vmatpush.msra.mxu0 0.0
    %3014 = vmatpush.msra.mxu0 0.0
    %3015 = vmatpush.msra.mxu0 0.0
    %3016 = vmatpush.msra.mxu0 %v581
    %3017 = vmatmul.f32.gmra.mxu0 %v2999
    %v3018 = vpop.f32.mrf.mxu0
    %v3019 = vadd.f32 0.0, %v3018
    %3020 = vdwg.mxu0
    %v3022 = vsel %vm2135, %v2804, 0
    %3024 = vmatpush.msra.mxu0 0.0
    %3025 = vmatpush.msra.mxu0 0.0
    %3026 = vmatpush.msra.mxu0 0.0
    %3027 = vmatpush.msra.mxu0 0.0
    %3028 = vmatpush.msra.mxu0 0.0
    %3029 = vmatpush.msra.mxu0 0.0
    %3030 = vmatpush.msra.mxu0 0.0
    %3031 = vmatpush.msra.mxu0 0.0
    %3032 = vmatpush.msra.mxu0 0.0
    %3033 = vmatpush.msra.mxu0 0.0
    %3034 = vmatpush.msra.mxu0 0.0
    %3035 = vmatpush.msra.mxu0 0.0
    %3036 = vmatpush.msra.mxu0 0.0
    %3037 = vmatpush.msra.mxu0 0.0
    %3038 = vmatpush.msra.mxu0 0.0
    %3039 = vmatpush.msra.mxu0 %v584
    %3040 = vmatmul.f32.gmra.mxu0 %v3022
    %v3041 = vpop.f32.mrf.mxu0
    %v3042 = vadd.f32 0.0, %v3041
    %3043 = vdwg.mxu0
    %v3045 = vsel %vm2135, %v2808, 0
    %3047 = vmatpush.msra.mxu0 0.0
    %3048 = vmatpush.msra.mxu0 0.0
    %3049 = vmatpush.msra.mxu0 0.0
    %3050 = vmatpush.msra.mxu0 0.0
    %3051 = vmatpush.msra.mxu0 0.0
    %3052 = vmatpush.msra.mxu0 0.0
    %3053 = vmatpush.msra.mxu0 0.0
    %3054 = vmatpush.msra.mxu0 0.0
    %3055 = vmatpush.msra.mxu0 0.0
    %3056 = vmatpush.msra.mxu0 0.0
    %3057 = vmatpush.msra.mxu0 0.0
    %3058 = vmatpush.msra.mxu0 0.0
    %3059 = vmatpush.msra.mxu0 0.0
    %3060 = vmatpush.msra.mxu0 0.0
    %3061 = vmatpush.msra.mxu0 0.0
    %3062 = vmatpush.msra.mxu0 %v587
    %3063 = vmatmul.f32.gmra.mxu0 %v3045
    %v3064 = vpop.f32.mrf.mxu0
    %v3065 = vadd.f32 0.0, %v3064
    %3066 = vdwg.mxu0
    %v3068 = vsel %vm2135, %v2812, 0
    %3070 = vmatpush.msra.mxu0 0.0
    %3071 = vmatpush.msra.mxu0 0.0
    %3072 = vmatpush.msra.mxu0 0.0
    %3073 = vmatpush.msra.mxu0 0.0
    %3074 = vmatpush.msra.mxu0 0.0
    %3075 = vmatpush.msra.mxu0 0.0
    %3076 = vmatpush.msra.mxu0 0.0
    %3077 = vmatpush.msra.mxu0 0.0
    %3078 = vmatpush.msra.mxu0 0.0
    %3079 = vmatpush.msra.mxu0 0.0
    %3080 = vmatpush.msra.mxu0 0.0
    %3081 = vmatpush.msra.mxu0 0.0
    %3082 = vmatpush.msra.mxu0 0.0
    %3083 = vmatpush.msra.mxu0 0.0
    %3084 = vmatpush.msra.mxu0 0.0
    %3085 = vmatpush.msra.mxu0 %v590
    %3086 = vmatmul.f32.gmra.mxu0 %v3068
    %v3087 = vpop.f32.mrf.mxu0
    %v3088 = vadd.f32 0.0, %v3087
    %3089 = vdwg.mxu0
    %v3091 = vsel %vm2135, %v2816, 0
    %3093 = vmatpush.msra.mxu0 0.0
    %3094 = vmatpush.msra.mxu0 0.0
    %3095 = vmatpush.msra.mxu0 0.0
    %3096 = vmatpush.msra.mxu0 0.0
    %3097 = vmatpush.msra.mxu0 0.0
    %3098 = vmatpush.msra.mxu0 0.0
    %3099 = vmatpush.msra.mxu0 0.0
    %3100 = vmatpush.msra.mxu0 0.0
    %3101 = vmatpush.msra.mxu0 0.0
    %3102 = vmatpush.msra.mxu0 0.0
    %3103 = vmatpush.msra.mxu0 0.0
    %3104 = vmatpush.msra.mxu0 0.0
    %3105 = vmatpush.msra.mxu0 0.0
    %3106 = vmatpush.msra.mxu0 0.0
    %3107 = vmatpush.msra.mxu0 0.0
    %3108 = vmatpush.msra.mxu0 %v593
    %3109 = vmatmul.f32.gmra.mxu0 %v3091
    %v3110 = vpop.f32.mrf.mxu0
    %v3111 = vadd.f32 0.0, %v3110
    %3112 = vdwg.mxu0
    %v3114 = vsel %vm2135, %v2820, 0
    %3116 = vmatpush.msra.mxu0 0.0
    %3117 = vmatpush.msra.mxu0 0.0
    %3118 = vmatpush.msra.mxu0 0.0
    %3119 = vmatpush.msra.mxu0 0.0
    %3120 = vmatpush.msra.mxu0 0.0
    %3121 = vmatpush.msra.mxu0 0.0
    %3122 = vmatpush.msra.mxu0 0.0
    %3123 = vmatpush.msra.mxu0 0.0
    %3124 = vmatpush.msra.mxu0 0.0
    %3125 = vmatpush.msra.mxu0 0.0
    %3126 = vmatpush.msra.mxu0 0.0
    %3127 = vmatpush.msra.mxu0 0.0
    %3128 = vmatpush.msra.mxu0 0.0
    %3129 = vmatpush.msra.mxu0 0.0
    %3130 = vmatpush.msra.mxu0 0.0
    %3131 = vmatpush.msra.mxu0 %v596
    %3132 = vmatmul.f32.gmra.mxu0 %v3114
    %v3133 = vpop.f32.mrf.mxu0
    %v3134 = vadd.f32 0.0, %v3133
    %3135 = vdwg.mxu0
    %v3137 = vsel %vm2135, %v2824, 0
    %3139 = vmatpush.msra.mxu0 0.0
    %3140 = vmatpush.msra.mxu0 0.0
    %3141 = vmatpush.msra.mxu0 0.0
    %3142 = vmatpush.msra.mxu0 0.0
    %3143 = vmatpush.msra.mxu0 0.0
    %3144 = vmatpush.msra.mxu0 0.0
    %3145 = vmatpush.msra.mxu0 0.0
    %3146 = vmatpush.msra.mxu0 0.0
    %3147 = vmatpush.msra.mxu0 0.0
    %3148 = vmatpush.msra.mxu0 0.0
    %3149 = vmatpush.msra.mxu0 0.0
    %3150 = vmatpush.msra.mxu0 0.0
    %3151 = vmatpush.msra.mxu0 0.0
    %3152 = vmatpush.msra.mxu0 0.0
    %3153 = vmatpush.msra.mxu0 0.0
    %3154 = vmatpush.msra.mxu0 %v599
    %3155 = vmatmul.f32.gmra.mxu0 %v3137
    %v3156 = vpop.f32.mrf.mxu0
    %v3157 = vadd.f32 0.0, %v3156
    %3158 = vdwg.mxu0
    %v3160 = vsel %vm2135, %v2828, 0
    %3162 = vmatpush.msra.mxu0 0.0
    %3163 = vmatpush.msra.mxu0 0.0
    %3164 = vmatpush.msra.mxu0 0.0
    %3165 = vmatpush.msra.mxu0 0.0
    %3166 = vmatpush.msra.mxu0 0.0
    %3167 = vmatpush.msra.mxu0 0.0
    %3168 = vmatpush.msra.mxu0 0.0
    %3169 = vmatpush.msra.mxu0 0.0
    %3170 = vmatpush.msra.mxu0 0.0
    %3171 = vmatpush.msra.mxu0 0.0
    %3172 = vmatpush.msra.mxu0 0.0
    %3173 = vmatpush.msra.mxu0 0.0
    %3174 = vmatpush.msra.mxu0 0.0
    %3175 = vmatpush.msra.mxu0 0.0
    %3176 = vmatpush.msra.mxu0 0.0
    %3177 = vmatpush.msra.mxu0 %v602
    %3178 = vmatmul.f32.gmra.mxu0 %v3160
    %v3179 = vpop.f32.mrf.mxu0
    %v3180 = vadd.f32 0.0, %v3179
    %3181 = vdwg.mxu0
    %v3183 = vsel %vm2135, %v2832, 0
    %3185 = vmatpush.msra.mxu0 0.0
    %3186 = vmatpush.msra.mxu0 0.0
    %3187 = vmatpush.msra.mxu0 0.0
    %3188 = vmatpush.msra.mxu0 0.0
    %3189 = vmatpush.msra.mxu0 0.0
    %3190 = vmatpush.msra.mxu0 0.0
    %3191 = vmatpush.msra.mxu0 0.0
    %3192 = vmatpush.msra.mxu0 0.0
    %3193 = vmatpush.msra.mxu0 0.0
    %3194 = vmatpush.msra.mxu0 0.0
    %3195 = vmatpush.msra.mxu0 0.0
    %3196 = vmatpush.msra.mxu0 0.0
    %3197 = vmatpush.msra.mxu0 0.0
    %3198 = vmatpush.msra.mxu0 0.0
    %3199 = vmatpush.msra.mxu0 0.0
    %3200 = vmatpush.msra.mxu0 %v605
    %3201 = vmatmul.f32.gmra.mxu0 %v3183
    %v3202 = vpop.f32.mrf.mxu0
    %v3203 = vadd.f32 0.0, %v3202
    %3204 = vdwg.mxu0
    %v3206 = vsel %vm2135, %v2836, 0
    %3208 = vmatpush.msra.mxu0 0.0
    %3209 = vmatpush.msra.mxu0 0.0
    %3210 = vmatpush.msra.mxu0 0.0
    %3211 = vmatpush.msra.mxu0 0.0
    %3212 = vmatpush.msra.mxu0 0.0
    %3213 = vmatpush.msra.mxu0 0.0
    %3214 = vmatpush.msra.mxu0 0.0
    %3215 = vmatpush.msra.mxu0 0.0
    %3216 = vmatpush.msra.mxu0 0.0
    %3217 = vmatpush.msra.mxu0 0.0
    %3218 = vmatpush.msra.mxu0 0.0
    %3219 = vmatpush.msra.mxu0 0.0
    %3220 = vmatpush.msra.mxu0 0.0
    %3221 = vmatpush.msra.mxu0 0.0
    %3222 = vmatpush.msra.mxu0 0.0
    %3223 = vmatpush.msra.mxu0 %v608
    %3224 = vmatmul.f32.gmra.mxu0 %v3206
    %v3225 = vpop.f32.mrf.mxu0
    %v3226 = vadd.f32 0.0, %v3225
    %3227 = vdwg.mxu0
    %v3229 = vsel %vm297, %v2881, 0
    %v3232 = vsel %vm297, %v2904, 0
    %v3235 = vsel %vm297, %v2927, 0
    %v3238 = vsel %vm297, %v2950, 0
    %v3241 = vsel %vm297, %v2973, 0
    %v3244 = vsel %vm297, %v2996, 0
    %v3247 = vsel %vm297, %v3019, 0
    %v3250 = vsel %vm297, %v3042, 0
    %v3253 = vsel %vm297, %v3065, 0
    %v3256 = vsel %vm297, %v3088, 0
    %v3259 = vsel %vm297, %v3111, 0
    %v3262 = vsel %vm297, %v3134, 0
    %v3265 = vsel %vm297, %v3157, 0
    %v3268 = vsel %vm297, %v3180, 0
    %v3271 = vsel %vm297, %v3203, 0
    %v3274 = vsel %vm297, %v3226, 0
    %3276 = vmatpush.msra.mxu0 0.0
    %3277 = vmatpush.msra.mxu0 0.0
    %3278 = vmatpush.msra.mxu0 0.0
    %3279 = vmatpush.msra.mxu0 0.0
    %3280 = vmatpush.msra.mxu0 0.0
    %3281 = vmatpush.msra.mxu0 0.0
    %3282 = vmatpush.msra.mxu0 0.0
    %3283 = vmatpush.msra.mxu0 0.0
    %3284 = vmatpush.msra.mxu0 0.0
    %3285 = vmatpush.msra.mxu0 0.0
    %3286 = vmatpush.msra.mxu0 0.0
    %3287 = vmatpush.msra.mxu0 0.0
    %3288 = vmatpush.msra.mxu0 %v2847
    %3289 = vmatpush.msra.mxu0 %v2846
    %3290 = vmatpush.msra.mxu0 %v2845
    %3291 = vmatpush.msra.mxu0 %v2844
    %3292 = vmatmul.f32.gmra.mxu0 %v3229
    %v3293 = vpop.f32.mrf.mxu0
    %v3294 = vadd.f32 0.0, %v3293
    %3295 = vmatmul.f32.gmra.mxu0 %v3232
    %v3296 = vpop.f32.mrf.mxu0
    %v3297 = vadd.f32 0.0, %v3296
    %3298 = vmatmul.f32.gmra.mxu0 %v3235
    %v3299 = vpop.f32.mrf.mxu0
    %v3300 = vadd.f32 0.0, %v3299
    %3301 = vmatmul.f32.gmra.mxu0 %v3238
    %v3302 = vpop.f32.mrf.mxu0
    %v3303 = vadd.f32 0.0, %v3302
    %3304 = vmatmul.f32.gmra.mxu0 %v3241
    %v3305 = vpop.f32.mrf.mxu0
    %v3306 = vadd.f32 0.0, %v3305
    %3307 = vmatmul.f32.gmra.mxu0 %v3244
    %v3308 = vpop.f32.mrf.mxu0
    %v3309 = vadd.f32 0.0, %v3308
    %3310 = vmatmul.f32.gmra.mxu0 %v3247
    %v3311 = vpop.f32.mrf.mxu0
    %v3312 = vadd.f32 0.0, %v3311
    %3313 = vmatmul.f32.gmra.mxu0 %v3250
    %v3314 = vpop.f32.mrf.mxu0
    %v3315 = vadd.f32 0.0, %v3314
    %3316 = vmatmul.f32.gmra.mxu0 %v3253
    %v3317 = vpop.f32.mrf.mxu0
    %v3318 = vadd.f32 0.0, %v3317
    %3319 = vmatmul.f32.gmra.mxu0 %v3256
    %v3320 = vpop.f32.mrf.mxu0
    %v3321 = vadd.f32 0.0, %v3320
    %3322 = vmatmul.f32.gmra.mxu0 %v3259
    %v3323 = vpop.f32.mrf.mxu0
    %v3324 = vadd.f32 0.0, %v3323
    %3325 = vmatmul.f32.gmra.mxu0 %v3262
    %v3326 = vpop.f32.mrf.mxu0
    %v3327 = vadd.f32 0.0, %v3326
    %3328 = vmatmul.f32.gmra.mxu0 %v3265
    %v3329 = vpop.f32.mrf.mxu0
    %v3330 = vadd.f32 0.0, %v3329
    %3331 = vmatmul.f32.gmra.mxu0 %v3268
    %v3332 = vpop.f32.mrf.mxu0
    %v3333 = vadd.f32 0.0, %v3332
    %3334 = vmatmul.f32.gmra.mxu0 %v3271
    %v3335 = vpop.f32.mrf.mxu0
    %v3336 = vadd.f32 0.0, %v3335
    %3337 = vmatmul.f32.gmra.mxu0 %v3274
    %v3338 = vpop.f32.mrf.mxu0
    %v3339 = vadd.f32 0.0, %v3338
    %3340 = vdwg.mxu0
    %3341 = vmatpush.msra.mxu0 0.0
    %3342 = vmatpush.msra.mxu0 0.0
    %3343 = vmatpush.msra.mxu0 0.0
    %3344 = vmatpush.msra.mxu0 0.0
    %3345 = vmatpush.msra.mxu0 0.0
    %3346 = vmatpush.msra.mxu0 0.0
    %3347 = vmatpush.msra.mxu0 0.0
    %3348 = vmatpush.msra.mxu0 0.0
    %3349 = vmatpush.msra.mxu0 0.0
    %3350 = vmatpush.msra.mxu0 0.0
    %3351 = vmatpush.msra.mxu0 0.0
    %3352 = vmatpush.msra.mxu0 0.0
    %3353 = vmatpush.msra.mxu0 %v2843
    %3354 = vmatpush.msra.mxu0 %v2842
    %3355 = vmatpush.msra.mxu0 %v2841
    %3356 = vmatpush.msra.mxu0 %v2840
    %3357 = vmatmul.f32.gmra.mxu0 %v498
    %v3358 = vpop.f32.mrf.mxu0
    %v3359 = vadd.f32 %v3294, %v3358
    %3360 = vmatmul.f32.gmra.mxu0 %v501
    %v3361 = vpop.f32.mrf.mxu0
    %v3362 = vadd.f32 %v3297, %v3361
    %3363 = vmatmul.f32.gmra.mxu0 %v504
    %v3364 = vpop.f32.mrf.mxu0
    %v3365 = vadd.f32 %v3300, %v3364
    %3366 = vmatmul.f32.gmra.mxu0 %v507
    %v3367 = vpop.f32.mrf.mxu0
    %v3368 = vadd.f32 %v3303, %v3367
    %3369 = vmatmul.f32.gmra.mxu0 %v510
    %v3370 = vpop.f32.mrf.mxu0
    %v3371 = vadd.f32 %v3306, %v3370
    %3372 = vmatmul.f32.gmra.mxu0 %v513
    %v3373 = vpop.f32.mrf.mxu0
    %v3374 = vadd.f32 %v3309, %v3373
    %3375 = vmatmul.f32.gmra.mxu0 %v516
    %v3376 = vpop.f32.mrf.mxu0
    %v3377 = vadd.f32 %v3312, %v3376
    %3378 = vmatmul.f32.gmra.mxu0 %v519
    %v3379 = vpop.f32.mrf.mxu0
    %v3380 = vadd.f32 %v3315, %v3379
    %3381 = vmatmul.f32.gmra.mxu0 %v522
    %v3382 = vpop.f32.mrf.mxu0
    %v3383 = vadd.f32 %v3318, %v3382
    %3384 = vmatmul.f32.gmra.mxu0 %v525
    %v3385 = vpop.f32.mrf.mxu0
    %v3386 = vadd.f32 %v3321, %v3385
    %3387 = vmatmul.f32.gmra.mxu0 %v528
    %v3388 = vpop.f32.mrf.mxu0
    %v3389 = vadd.f32 %v3324, %v3388
    %3390 = vmatmul.f32.gmra.mxu0 %v531
    %v3391 = vpop.f32.mrf.mxu0
    %v3392 = vadd.f32 %v3327, %v3391
    %3393 = vmatmul.f32.gmra.mxu0 %v534
    %v3394 = vpop.f32.mrf.mxu0
    %v3395 = vadd.f32 %v3330, %v3394
    %3396 = vmatmul.f32.gmra.mxu0 %v537
    %v3397 = vpop.f32.mrf.mxu0
    %v3398 = vadd.f32 %v3333, %v3397
    %3399 = vmatmul.f32.gmra.mxu0 %v540
    %v3400 = vpop.f32.mrf.mxu0
    %v3401 = vadd.f32 %v3336, %v3400
    %3402 = vmatmul.f32.gmra.mxu0 %v543
    %v3403 = vpop.f32.mrf.mxu0
    %v3404 = vadd.f32 %v3339, %v3403
    %3405 = vdwg.mxu0
    %3407 = vrot.lane.b32.xlu0 %v563, 96
    %v3408 = vpop.permute.xlu0 %3407
    %v3411 = vsel %vm2135, %v2777, 0
    %3413 = vmatpush.msra.mxu0 0.0
    %3414 = vmatpush.msra.mxu0 0.0
    %3415 = vmatpush.msra.mxu0 0.0
    %3416 = vmatpush.msra.mxu0 0.0
    %3417 = vmatpush.msra.mxu0 0.0
    %3418 = vmatpush.msra.mxu0 0.0
    %3419 = vmatpush.msra.mxu0 0.0
    %3420 = vmatpush.msra.mxu0 0.0
    %3421 = vmatpush.msra.mxu0 0.0
    %3422 = vmatpush.msra.mxu0 0.0
    %3423 = vmatpush.msra.mxu0 0.0
    %3424 = vmatpush.msra.mxu0 0.0
    %3425 = vmatpush.msra.mxu0 0.0
    %3426 = vmatpush.msra.mxu0 0.0
    %3427 = vmatpush.msra.mxu0 0.0
    %3428 = vmatpush.msra.mxu0 %v3408
    %3429 = vmatmul.f32.gmra.mxu0 %v3411
    %v3430 = vpop.f32.mrf.mxu0
    %v3431 = vadd.f32 0.0, %v3430
    %3432 = vdwg.mxu0
    %3434 = vrot.lane.b32.xlu0 %v566, 96
    %v3435 = vpop.permute.xlu0 %3434
    %v3438 = vsel %vm2135, %v2781, 0
    %3440 = vmatpush.msra.mxu0 0.0
    %3441 = vmatpush.msra.mxu0 0.0
    %3442 = vmatpush.msra.mxu0 0.0
    %3443 = vmatpush.msra.mxu0 0.0
    %3444 = vmatpush.msra.mxu0 0.0
    %3445 = vmatpush.msra.mxu0 0.0
    %3446 = vmatpush.msra.mxu0 0.0
    %3447 = vmatpush.msra.mxu0 0.0
    %3448 = vmatpush.msra.mxu0 0.0
    %3449 = vmatpush.msra.mxu0 0.0
    %3450 = vmatpush.msra.mxu0 0.0
    %3451 = vmatpush.msra.mxu0 0.0
    %3452 = vmatpush.msra.mxu0 0.0
    %3453 = vmatpush.msra.mxu0 0.0
    %3454 = vmatpush.msra.mxu0 0.0
    %3455 = vmatpush.msra.mxu0 %v3435
    %3456 = vmatmul.f32.gmra.mxu0 %v3438
    %v3457 = vpop.f32.mrf.mxu0
    %v3458 = vadd.f32 0.0, %v3457
    %3459 = vdwg.mxu0
    %3461 = vrot.lane.b32.xlu0 %v569, 96
    %v3462 = vpop.permute.xlu0 %3461
    %v3465 = vsel %vm2135, %v2785, 0
    %3467 = vmatpush.msra.mxu0 0.0
    %3468 = vmatpush.msra.mxu0 0.0
    %3469 = vmatpush.msra.mxu0 0.0
    %3470 = vmatpush.msra.mxu0 0.0
    %3471 = vmatpush.msra.mxu0 0.0
    %3472 = vmatpush.msra.mxu0 0.0
    %3473 = vmatpush.msra.mxu0 0.0
    %3474 = vmatpush.msra.mxu0 0.0
    %3475 = vmatpush.msra.mxu0 0.0
    %3476 = vmatpush.msra.mxu0 0.0
    %3477 = vmatpush.msra.mxu0 0.0
    %3478 = vmatpush.msra.mxu0 0.0
    %3479 = vmatpush.msra.mxu0 0.0
    %3480 = vmatpush.msra.mxu0 0.0
    %3481 = vmatpush.msra.mxu0 0.0
    %3482 = vmatpush.msra.mxu0 %v3462
    %3483 = vmatmul.f32.gmra.mxu0 %v3465
    %v3484 = vpop.f32.mrf.mxu0
    %v3485 = vadd.f32 0.0, %v3484
    %3486 = vdwg.mxu0
    %3488 = vrot.lane.b32.xlu0 %v572, 96
    %v3489 = vpop.permute.xlu0 %3488
    %v3492 = vsel %vm2135, %v2789, 0
    %3494 = vmatpush.msra.mxu0 0.0
    %3495 = vmatpush.msra.mxu0 0.0
    %3496 = vmatpush.msra.mxu0 0.0
    %3497 = vmatpush.msra.mxu0 0.0
    %3498 = vmatpush.msra.mxu0 0.0
    %3499 = vmatpush.msra.mxu0 0.0
    %3500 = vmatpush.msra.mxu0 0.0
    %3501 = vmatpush.msra.mxu0 0.0
    %3502 = vmatpush.msra.mxu0 0.0
    %3503 = vmatpush.msra.mxu0 0.0
    %3504 = vmatpush.msra.mxu0 0.0
    %3505 = vmatpush.msra.mxu0 0.0
    %3506 = vmatpush.msra.mxu0 0.0
    %3507 = vmatpush.msra.mxu0 0.0
    %3508 = vmatpush.msra.mxu0 0.0
    %3509 = vmatpush.msra.mxu0 %v3489
    %3510 = vmatmul.f32.gmra.mxu0 %v3492
    %v3511 = vpop.f32.mrf.mxu0
    %v3512 = vadd.f32 0.0, %v3511
    %3513 = vdwg.mxu0
    %3515 = vrot.lane.b32.xlu0 %v575, 96
    %v3516 = vpop.permute.xlu0 %3515
    %v3519 = vsel %vm2135, %v2793, 0
    %3521 = vmatpush.msra.mxu0 0.0
    %3522 = vmatpush.msra.mxu0 0.0
    %3523 = vmatpush.msra.mxu0 0.0
    %3524 = vmatpush.msra.mxu0 0.0
    %3525 = vmatpush.msra.mxu0 0.0
    %3526 = vmatpush.msra.mxu0 0.0
    %3527 = vmatpush.msra.mxu0 0.0
    %3528 = vmatpush.msra.mxu0 0.0
    %3529 = vmatpush.msra.mxu0 0.0
    %3530 = vmatpush.msra.mxu0 0.0
    %3531 = vmatpush.msra.mxu0 0.0
    %3532 = vmatpush.msra.mxu0 0.0
    %3533 = vmatpush.msra.mxu0 0.0
    %3534 = vmatpush.msra.mxu0 0.0
    %3535 = vmatpush.msra.mxu0 0.0
    %3536 = vmatpush.msra.mxu0 %v3516
    %3537 = vmatmul.f32.gmra.mxu0 %v3519
    %v3538 = vpop.f32.mrf.mxu0
    %v3539 = vadd.f32 0.0, %v3538
    %3540 = vdwg.mxu0
    %3542 = vrot.lane.b32.xlu0 %v578, 96
    %v3543 = vpop.permute.xlu0 %3542
    %v3546 = vsel %vm2135, %v2797, 0
    %3548 = vmatpush.msra.mxu0 0.0
    %3549 = vmatpush.msra.mxu0 0.0
    %3550 = vmatpush.msra.mxu0 0.0
    %3551 = vmatpush.msra.mxu0 0.0
    %3552 = vmatpush.msra.mxu0 0.0
    %3553 = vmatpush.msra.mxu0 0.0
    %3554 = vmatpush.msra.mxu0 0.0
    %3555 = vmatpush.msra.mxu0 0.0
    %3556 = vmatpush.msra.mxu0 0.0
    %3557 = vmatpush.msra.mxu0 0.0
    %3558 = vmatpush.msra.mxu0 0.0
    %3559 = vmatpush.msra.mxu0 0.0
    %3560 = vmatpush.msra.mxu0 0.0
    %3561 = vmatpush.msra.mxu0 0.0
    %3562 = vmatpush.msra.mxu0 0.0
    %3563 = vmatpush.msra.mxu0 %v3543
    %3564 = vmatmul.f32.gmra.mxu0 %v3546
    %v3565 = vpop.f32.mrf.mxu0
    %v3566 = vadd.f32 0.0, %v3565
    %3567 = vdwg.mxu0
    %3569 = vrot.lane.b32.xlu0 %v581, 96
    %v3570 = vpop.permute.xlu0 %3569
    %v3573 = vsel %vm2135, %v2801, 0
    %3575 = vmatpush.msra.mxu0 0.0
    %3576 = vmatpush.msra.mxu0 0.0
    %3577 = vmatpush.msra.mxu0 0.0
    %3578 = vmatpush.msra.mxu0 0.0
    %3579 = vmatpush.msra.mxu0 0.0
    %3580 = vmatpush.msra.mxu0 0.0
    %3581 = vmatpush.msra.mxu0 0.0
    %3582 = vmatpush.msra.mxu0 0.0
    %3583 = vmatpush.msra.mxu0 0.0
    %3584 = vmatpush.msra.mxu0 0.0
    %3585 = vmatpush.msra.mxu0 0.0
    %3586 = vmatpush.msra.mxu0 0.0
    %3587 = vmatpush.msra.mxu0 0.0
    %3588 = vmatpush.msra.mxu0 0.0
    %3589 = vmatpush.msra.mxu0 0.0
    %3590 = vmatpush.msra.mxu0 %v3570
    %3591 = vmatmul.f32.gmra.mxu0 %v3573
    %v3592 = vpop.f32.mrf.mxu0
    %v3593 = vadd.f32 0.0, %v3592
    %3594 = vdwg.mxu0
    %3596 = vrot.lane.b32.xlu0 %v584, 96
    %v3597 = vpop.permute.xlu0 %3596
    %v3600 = vsel %vm2135, %v2805, 0
    %3602 = vmatpush.msra.mxu0 0.0
    %3603 = vmatpush.msra.mxu0 0.0
    %3604 = vmatpush.msra.mxu0 0.0
    %3605 = vmatpush.msra.mxu0 0.0
    %3606 = vmatpush.msra.mxu0 0.0
    %3607 = vmatpush.msra.mxu0 0.0
    %3608 = vmatpush.msra.mxu0 0.0
    %3609 = vmatpush.msra.mxu0 0.0
    %3610 = vmatpush.msra.mxu0 0.0
    %3611 = vmatpush.msra.mxu0 0.0
    %3612 = vmatpush.msra.mxu0 0.0
    %3613 = vmatpush.msra.mxu0 0.0
    %3614 = vmatpush.msra.mxu0 0.0
    %3615 = vmatpush.msra.mxu0 0.0
    %3616 = vmatpush.msra.mxu0 0.0
    %3617 = vmatpush.msra.mxu0 %v3597
    %3618 = vmatmul.f32.gmra.mxu0 %v3600
    %v3619 = vpop.f32.mrf.mxu0
    %v3620 = vadd.f32 0.0, %v3619
    %3621 = vdwg.mxu0
    %3623 = vrot.lane.b32.xlu0 %v587, 96
    %v3624 = vpop.permute.xlu0 %3623
    %v3627 = vsel %vm2135, %v2809, 0
    %3629 = vmatpush.msra.mxu0 0.0
    %3630 = vmatpush.msra.mxu0 0.0
    %3631 = vmatpush.msra.mxu0 0.0
    %3632 = vmatpush.msra.mxu0 0.0
    %3633 = vmatpush.msra.mxu0 0.0
    %3634 = vmatpush.msra.mxu0 0.0
    %3635 = vmatpush.msra.mxu0 0.0
    %3636 = vmatpush.msra.mxu0 0.0
    %3637 = vmatpush.msra.mxu0 0.0
    %3638 = vmatpush.msra.mxu0 0.0
    %3639 = vmatpush.msra.mxu0 0.0
    %3640 = vmatpush.msra.mxu0 0.0
    %3641 = vmatpush.msra.mxu0 0.0
    %3642 = vmatpush.msra.mxu0 0.0
    %3643 = vmatpush.msra.mxu0 0.0
    %3644 = vmatpush.msra.mxu0 %v3624
    %3645 = vmatmul.f32.gmra.mxu0 %v3627
    %v3646 = vpop.f32.mrf.mxu0
    %v3647 = vadd.f32 0.0, %v3646
    %3648 = vdwg.mxu0
    %3650 = vrot.lane.b32.xlu0 %v590, 96
    %v3651 = vpop.permute.xlu0 %3650
    %v3654 = vsel %vm2135, %v2813, 0
    %3656 = vmatpush.msra.mxu0 0.0
    %3657 = vmatpush.msra.mxu0 0.0
    %3658 = vmatpush.msra.mxu0 0.0
    %3659 = vmatpush.msra.mxu0 0.0
    %3660 = vmatpush.msra.mxu0 0.0
    %3661 = vmatpush.msra.mxu0 0.0
    %3662 = vmatpush.msra.mxu0 0.0
    %3663 = vmatpush.msra.mxu0 0.0
    %3664 = vmatpush.msra.mxu0 0.0
    %3665 = vmatpush.msra.mxu0 0.0
    %3666 = vmatpush.msra.mxu0 0.0
    %3667 = vmatpush.msra.mxu0 0.0
    %3668 = vmatpush.msra.mxu0 0.0
    %3669 = vmatpush.msra.mxu0 0.0
    %3670 = vmatpush.msra.mxu0 0.0
    %3671 = vmatpush.msra.mxu0 %v3651
    %3672 = vmatmul.f32.gmra.mxu0 %v3654
    %v3673 = vpop.f32.mrf.mxu0
    %v3674 = vadd.f32 0.0, %v3673
    %3675 = vdwg.mxu0
    %3677 = vrot.lane.b32.xlu0 %v593, 96
    %v3678 = vpop.permute.xlu0 %3677
    %v3681 = vsel %vm2135, %v2817, 0
    %3683 = vmatpush.msra.mxu0 0.0
    %3684 = vmatpush.msra.mxu0 0.0
    %3685 = vmatpush.msra.mxu0 0.0
    %3686 = vmatpush.msra.mxu0 0.0
    %3687 = vmatpush.msra.mxu0 0.0
    %3688 = vmatpush.msra.mxu0 0.0
    %3689 = vmatpush.msra.mxu0 0.0
    %3690 = vmatpush.msra.mxu0 0.0
    %3691 = vmatpush.msra.mxu0 0.0
    %3692 = vmatpush.msra.mxu0 0.0
    %3693 = vmatpush.msra.mxu0 0.0
    %3694 = vmatpush.msra.mxu0 0.0
    %3695 = vmatpush.msra.mxu0 0.0
    %3696 = vmatpush.msra.mxu0 0.0
    %3697 = vmatpush.msra.mxu0 0.0
    %3698 = vmatpush.msra.mxu0 %v3678
    %3699 = vmatmul.f32.gmra.mxu0 %v3681
    %v3700 = vpop.f32.mrf.mxu0
    %v3701 = vadd.f32 0.0, %v3700
    %3702 = vdwg.mxu0
    %3704 = vrot.lane.b32.xlu0 %v596, 96
    %v3705 = vpop.permute.xlu0 %3704
    %v3708 = vsel %vm2135, %v2821, 0
    %3710 = vmatpush.msra.mxu0 0.0
    %3711 = vmatpush.msra.mxu0 0.0
    %3712 = vmatpush.msra.mxu0 0.0
    %3713 = vmatpush.msra.mxu0 0.0
    %3714 = vmatpush.msra.mxu0 0.0
    %3715 = vmatpush.msra.mxu0 0.0
    %3716 = vmatpush.msra.mxu0 0.0
    %3717 = vmatpush.msra.mxu0 0.0
    %3718 = vmatpush.msra.mxu0 0.0
    %3719 = vmatpush.msra.mxu0 0.0
    %3720 = vmatpush.msra.mxu0 0.0
    %3721 = vmatpush.msra.mxu0 0.0
    %3722 = vmatpush.msra.mxu0 0.0
    %3723 = vmatpush.msra.mxu0 0.0
    %3724 = vmatpush.msra.mxu0 0.0
    %3725 = vmatpush.msra.mxu0 %v3705
    %3726 = vmatmul.f32.gmra.mxu0 %v3708
    %v3727 = vpop.f32.mrf.mxu0
    %v3728 = vadd.f32 0.0, %v3727
    %3729 = vdwg.mxu0
    %3731 = vrot.lane.b32.xlu0 %v599, 96
    %v3732 = vpop.permute.xlu0 %3731
    %v3735 = vsel %vm2135, %v2825, 0
    %3737 = vmatpush.msra.mxu0 0.0
    %3738 = vmatpush.msra.mxu0 0.0
    %3739 = vmatpush.msra.mxu0 0.0
    %3740 = vmatpush.msra.mxu0 0.0
    %3741 = vmatpush.msra.mxu0 0.0
    %3742 = vmatpush.msra.mxu0 0.0
    %3743 = vmatpush.msra.mxu0 0.0
    %3744 = vmatpush.msra.mxu0 0.0
    %3745 = vmatpush.msra.mxu0 0.0
    %3746 = vmatpush.msra.mxu0 0.0
    %3747 = vmatpush.msra.mxu0 0.0
    %3748 = vmatpush.msra.mxu0 0.0
    %3749 = vmatpush.msra.mxu0 0.0
    %3750 = vmatpush.msra.mxu0 0.0
    %3751 = vmatpush.msra.mxu0 0.0
    %3752 = vmatpush.msra.mxu0 %v3732
    %3753 = vmatmul.f32.gmra.mxu0 %v3735
    %v3754 = vpop.f32.mrf.mxu0
    %v3755 = vadd.f32 0.0, %v3754
    %3756 = vdwg.mxu0
    %3758 = vrot.lane.b32.xlu0 %v602, 96
    %v3759 = vpop.permute.xlu0 %3758
    %v3762 = vsel %vm2135, %v2829, 0
    %3764 = vmatpush.msra.mxu0 0.0
    %3765 = vmatpush.msra.mxu0 0.0
    %3766 = vmatpush.msra.mxu0 0.0
    %3767 = vmatpush.msra.mxu0 0.0
    %3768 = vmatpush.msra.mxu0 0.0
    %3769 = vmatpush.msra.mxu0 0.0
    %3770 = vmatpush.msra.mxu0 0.0
    %3771 = vmatpush.msra.mxu0 0.0
    %3772 = vmatpush.msra.mxu0 0.0
    %3773 = vmatpush.msra.mxu0 0.0
    %3774 = vmatpush.msra.mxu0 0.0
    %3775 = vmatpush.msra.mxu0 0.0
    %3776 = vmatpush.msra.mxu0 0.0
    %3777 = vmatpush.msra.mxu0 0.0
    %3778 = vmatpush.msra.mxu0 0.0
    %3779 = vmatpush.msra.mxu0 %v3759
    %3780 = vmatmul.f32.gmra.mxu0 %v3762
    %v3781 = vpop.f32.mrf.mxu0
    %v3782 = vadd.f32 0.0, %v3781
    %3783 = vdwg.mxu0
    %3785 = vrot.lane.b32.xlu0 %v605, 96
    %v3786 = vpop.permute.xlu0 %3785
    %v3789 = vsel %vm2135, %v2833, 0
    %3791 = vmatpush.msra.mxu0 0.0
    %3792 = vmatpush.msra.mxu0 0.0
    %3793 = vmatpush.msra.mxu0 0.0
    %3794 = vmatpush.msra.mxu0 0.0
    %3795 = vmatpush.msra.mxu0 0.0
    %3796 = vmatpush.msra.mxu0 0.0
    %3797 = vmatpush.msra.mxu0 0.0
    %3798 = vmatpush.msra.mxu0 0.0
    %3799 = vmatpush.msra.mxu0 0.0
    %3800 = vmatpush.msra.mxu0 0.0
    %3801 = vmatpush.msra.mxu0 0.0
    %3802 = vmatpush.msra.mxu0 0.0
    %3803 = vmatpush.msra.mxu0 0.0
    %3804 = vmatpush.msra.mxu0 0.0
    %3805 = vmatpush.msra.mxu0 0.0
    %3806 = vmatpush.msra.mxu0 %v3786
    %3807 = vmatmul.f32.gmra.mxu0 %v3789
    %v3808 = vpop.f32.mrf.mxu0
    %v3809 = vadd.f32 0.0, %v3808
    %3810 = vdwg.mxu0
    %3812 = vrot.lane.b32.xlu0 %v608, 96
    %v3813 = vpop.permute.xlu0 %3812
    %v3816 = vsel %vm2135, %v2837, 0
    %3818 = vmatpush.msra.mxu0 0.0
    %3819 = vmatpush.msra.mxu0 0.0
    %3820 = vmatpush.msra.mxu0 0.0
    %3821 = vmatpush.msra.mxu0 0.0
    %3822 = vmatpush.msra.mxu0 0.0
    %3823 = vmatpush.msra.mxu0 0.0
    %3824 = vmatpush.msra.mxu0 0.0
    %3825 = vmatpush.msra.mxu0 0.0
    %3826 = vmatpush.msra.mxu0 0.0
    %3827 = vmatpush.msra.mxu0 0.0
    %3828 = vmatpush.msra.mxu0 0.0
    %3829 = vmatpush.msra.mxu0 0.0
    %3830 = vmatpush.msra.mxu0 0.0
    %3831 = vmatpush.msra.mxu0 0.0
    %3832 = vmatpush.msra.mxu0 0.0
    %3833 = vmatpush.msra.mxu0 %v3813
    %3834 = vmatmul.f32.gmra.mxu0 %v3816
    %v3835 = vpop.f32.mrf.mxu0
    %v3836 = vadd.f32 0.0, %v3835
    %3837 = vdwg.mxu0
    %v3839 = vsel %vm297, %v3431, 0
    %v3842 = vsel %vm297, %v3458, 0
    %v3845 = vsel %vm297, %v3485, 0
    %v3848 = vsel %vm297, %v3512, 0
    %v3851 = vsel %vm297, %v3539, 0
    %v3854 = vsel %vm297, %v3566, 0
    %v3857 = vsel %vm297, %v3593, 0
    %v3860 = vsel %vm297, %v3620, 0
    %v3863 = vsel %vm297, %v3647, 0
    %v3866 = vsel %vm297, %v3674, 0
    %v3869 = vsel %vm297, %v3701, 0
    %v3872 = vsel %vm297, %v3728, 0
    %v3875 = vsel %vm297, %v3755, 0
    %v3878 = vsel %vm297, %v3782, 0
    %v3881 = vsel %vm297, %v3809, 0
    %v3884 = vsel %vm297, %v3836, 0
    %3886 = vmatpush.msra.mxu0 0.0
    %3887 = vmatpush.msra.mxu0 0.0
    %3888 = vmatpush.msra.mxu0 0.0
    %3889 = vmatpush.msra.mxu0 0.0
    %3890 = vmatpush.msra.mxu0 0.0
    %3891 = vmatpush.msra.mxu0 0.0
    %3892 = vmatpush.msra.mxu0 0.0
    %3893 = vmatpush.msra.mxu0 0.0
    %3894 = vmatpush.msra.mxu0 0.0
    %3895 = vmatpush.msra.mxu0 0.0
    %3896 = vmatpush.msra.mxu0 0.0
    %3897 = vmatpush.msra.mxu0 0.0
    %3898 = vmatpush.msra.mxu0 %v2851
    %3899 = vmatpush.msra.mxu0 %v2850
    %3900 = vmatpush.msra.mxu0 %v2849
    %3901 = vmatpush.msra.mxu0 %v2848
    %3902 = vmatmul.f32.gmra.mxu0 %v3839
    %v3903 = vpop.f32.mrf.mxu0
    %v3904 = vadd.f32 0.0, %v3903
    %3905 = vmatmul.f32.gmra.mxu0 %v3842
    %v3906 = vpop.f32.mrf.mxu0
    %v3907 = vadd.f32 0.0, %v3906
    %3908 = vmatmul.f32.gmra.mxu0 %v3845
    %v3909 = vpop.f32.mrf.mxu0
    %v3910 = vadd.f32 0.0, %v3909
    %3911 = vmatmul.f32.gmra.mxu0 %v3848
    %v3912 = vpop.f32.mrf.mxu0
    %v3913 = vadd.f32 0.0, %v3912
    %3914 = vmatmul.f32.gmra.mxu0 %v3851
    %v3915 = vpop.f32.mrf.mxu0
    %v3916 = vadd.f32 0.0, %v3915
    %3917 = vmatmul.f32.gmra.mxu0 %v3854
    %v3918 = vpop.f32.mrf.mxu0
    %v3919 = vadd.f32 0.0, %v3918
    %3920 = vmatmul.f32.gmra.mxu0 %v3857
    %v3921 = vpop.f32.mrf.mxu0
    %v3922 = vadd.f32 0.0, %v3921
    %3923 = vmatmul.f32.gmra.mxu0 %v3860
    %v3924 = vpop.f32.mrf.mxu0
    %v3925 = vadd.f32 0.0, %v3924
    %3926 = vmatmul.f32.gmra.mxu0 %v3863
    %v3927 = vpop.f32.mrf.mxu0
    %v3928 = vadd.f32 0.0, %v3927
    %3929 = vmatmul.f32.gmra.mxu0 %v3866
    %v3930 = vpop.f32.mrf.mxu0
    %v3931 = vadd.f32 0.0, %v3930
    %3932 = vmatmul.f32.gmra.mxu0 %v3869
    %v3933 = vpop.f32.mrf.mxu0
    %v3934 = vadd.f32 0.0, %v3933
    %3935 = vmatmul.f32.gmra.mxu0 %v3872
    %v3936 = vpop.f32.mrf.mxu0
    %v3937 = vadd.f32 0.0, %v3936
    %3938 = vmatmul.f32.gmra.mxu0 %v3875
    %v3939 = vpop.f32.mrf.mxu0
    %v3940 = vadd.f32 0.0, %v3939
    %3941 = vmatmul.f32.gmra.mxu0 %v3878
    %v3942 = vpop.f32.mrf.mxu0
    %v3943 = vadd.f32 0.0, %v3942
    %3944 = vmatmul.f32.gmra.mxu0 %v3881
    %v3945 = vpop.f32.mrf.mxu0
    %v3946 = vadd.f32 0.0, %v3945
    %3947 = vmatmul.f32.gmra.mxu0 %v3884
    %v3948 = vpop.f32.mrf.mxu0
    %v3949 = vadd.f32 0.0, %v3948
    %3950 = vdwg.mxu0
    %v3951 = vadd.f32 %v3359, %v3904
    %v3952 = vadd.f32 %v3362, %v3907
    %v3953 = vadd.f32 %v3365, %v3910
    %v3954 = vadd.f32 %v3368, %v3913
    %v3955 = vadd.f32 %v3371, %v3916
    %v3956 = vadd.f32 %v3374, %v3919
    %v3957 = vadd.f32 %v3377, %v3922
    %v3958 = vadd.f32 %v3380, %v3925
    %v3959 = vadd.f32 %v3383, %v3928
    %v3960 = vadd.f32 %v3386, %v3931
    %v3961 = vadd.f32 %v3389, %v3934
    %v3962 = vadd.f32 %v3392, %v3937
    %v3963 = vadd.f32 %v3395, %v3940
    %v3964 = vadd.f32 %v3398, %v3943
    %v3965 = vadd.f32 %v3401, %v3946
    %v3966 = vadd.f32 %v3404, %v3949
    %3967 = vrot.lane.b32.xlu0 %v563, 64
    %v3968 = vpop.permute.xlu0 %3967
    %v3971 = vsel %vm2135, %v2778, 0
    %3973 = vmatpush.msra.mxu0 0.0
    %3974 = vmatpush.msra.mxu0 0.0
    %3975 = vmatpush.msra.mxu0 0.0
    %3976 = vmatpush.msra.mxu0 0.0
    %3977 = vmatpush.msra.mxu0 0.0
    %3978 = vmatpush.msra.mxu0 0.0
    %3979 = vmatpush.msra.mxu0 0.0
    %3980 = vmatpush.msra.mxu0 0.0
    %3981 = vmatpush.msra.mxu0 0.0
    %3982 = vmatpush.msra.mxu0 0.0
    %3983 = vmatpush.msra.mxu0 0.0
    %3984 = vmatpush.msra.mxu0 0.0
    %3985 = vmatpush.msra.mxu0 0.0
    %3986 = vmatpush.msra.mxu0 0.0
    %3987 = vmatpush.msra.mxu0 0.0
    %3988 = vmatpush.msra.mxu0 %v3968
    %3989 = vmatmul.f32.gmra.mxu0 %v3971
    %v3990 = vpop.f32.mrf.mxu0
    %v3991 = vadd.f32 0.0, %v3990
    %3992 = vdwg.mxu0
    %3993 = vrot.lane.b32.xlu0 %v566, 64
    %v3994 = vpop.permute.xlu0 %3993
    %v3997 = vsel %vm2135, %v2782, 0
    %3999 = vmatpush.msra.mxu0 0.0
    %4000 = vmatpush.msra.mxu0 0.0
    %4001 = vmatpush.msra.mxu0 0.0
    %4002 = vmatpush.msra.mxu0 0.0
    %4003 = vmatpush.msra.mxu0 0.0
    %4004 = vmatpush.msra.mxu0 0.0
    %4005 = vmatpush.msra.mxu0 0.0
    %4006 = vmatpush.msra.mxu0 0.0
    %4007 = vmatpush.msra.mxu0 0.0
    %4008 = vmatpush.msra.mxu0 0.0
    %4009 = vmatpush.msra.mxu0 0.0
    %4010 = vmatpush.msra.mxu0 0.0
    %4011 = vmatpush.msra.mxu0 0.0
    %4012 = vmatpush.msra.mxu0 0.0
    %4013 = vmatpush.msra.mxu0 0.0
    %4014 = vmatpush.msra.mxu0 %v3994
    %4015 = vmatmul.f32.gmra.mxu0 %v3997
    %v4016 = vpop.f32.mrf.mxu0
    %v4017 = vadd.f32 0.0, %v4016
    %4018 = vdwg.mxu0
    %4019 = vrot.lane.b32.xlu0 %v569, 64
    %v4020 = vpop.permute.xlu0 %4019
    %v4023 = vsel %vm2135, %v2786, 0
    %4025 = vmatpush.msra.mxu0 0.0
    %4026 = vmatpush.msra.mxu0 0.0
    %4027 = vmatpush.msra.mxu0 0.0
    %4028 = vmatpush.msra.mxu0 0.0
    %4029 = vmatpush.msra.mxu0 0.0
    %4030 = vmatpush.msra.mxu0 0.0
    %4031 = vmatpush.msra.mxu0 0.0
    %4032 = vmatpush.msra.mxu0 0.0
    %4033 = vmatpush.msra.mxu0 0.0
    %4034 = vmatpush.msra.mxu0 0.0
    %4035 = vmatpush.msra.mxu0 0.0
    %4036 = vmatpush.msra.mxu0 0.0
    %4037 = vmatpush.msra.mxu0 0.0
    %4038 = vmatpush.msra.mxu0 0.0
    %4039 = vmatpush.msra.mxu0 0.0
    %4040 = vmatpush.msra.mxu0 %v4020
    %4041 = vmatmul.f32.gmra.mxu0 %v4023
    %v4042 = vpop.f32.mrf.mxu0
    %v4043 = vadd.f32 0.0, %v4042
    %4044 = vdwg.mxu0
    %4045 = vrot.lane.b32.xlu0 %v572, 64
    %v4046 = vpop.permute.xlu0 %4045
    %v4049 = vsel %vm2135, %v2790, 0
    %4051 = vmatpush.msra.mxu0 0.0
    %4052 = vmatpush.msra.mxu0 0.0
    %4053 = vmatpush.msra.mxu0 0.0
    %4054 = vmatpush.msra.mxu0 0.0
    %4055 = vmatpush.msra.mxu0 0.0
    %4056 = vmatpush.msra.mxu0 0.0
    %4057 = vmatpush.msra.mxu0 0.0
    %4058 = vmatpush.msra.mxu0 0.0
    %4059 = vmatpush.msra.mxu0 0.0
    %4060 = vmatpush.msra.mxu0 0.0
    %4061 = vmatpush.msra.mxu0 0.0
    %4062 = vmatpush.msra.mxu0 0.0
    %4063 = vmatpush.msra.mxu0 0.0
    %4064 = vmatpush.msra.mxu0 0.0
    %4065 = vmatpush.msra.mxu0 0.0
    %4066 = vmatpush.msra.mxu0 %v4046
    %4067 = vmatmul.f32.gmra.mxu0 %v4049
    %v4068 = vpop.f32.mrf.mxu0
    %v4069 = vadd.f32 0.0, %v4068
    %4070 = vdwg.mxu0
    %4071 = vrot.lane.b32.xlu0 %v575, 64
    %v4072 = vpop.permute.xlu0 %4071
    %v4075 = vsel %vm2135, %v2794, 0
    %4077 = vmatpush.msra.mxu0 0.0
    %4078 = vmatpush.msra.mxu0 0.0
    %4079 = vmatpush.msra.mxu0 0.0
    %4080 = vmatpush.msra.mxu0 0.0
    %4081 = vmatpush.msra.mxu0 0.0
    %4082 = vmatpush.msra.mxu0 0.0
    %4083 = vmatpush.msra.mxu0 0.0
    %4084 = vmatpush.msra.mxu0 0.0
    %4085 = vmatpush.msra.mxu0 0.0
    %4086 = vmatpush.msra.mxu0 0.0
    %4087 = vmatpush.msra.mxu0 0.0
    %4088 = vmatpush.msra.mxu0 0.0
    %4089 = vmatpush.msra.mxu0 0.0
    %4090 = vmatpush.msra.mxu0 0.0
    %4091 = vmatpush.msra.mxu0 0.0
    %4092 = vmatpush.msra.mxu0 %v4072
    %4093 = vmatmul.f32.gmra.mxu0 %v4075
    %v4094 = vpop.f32.mrf.mxu0
    %v4095 = vadd.f32 0.0, %v4094
    %4096 = vdwg.mxu0
    %4097 = vrot.lane.b32.xlu0 %v578, 64
    %v4098 = vpop.permute.xlu0 %4097
    %v4101 = vsel %vm2135, %v2798, 0
    %4103 = vmatpush.msra.mxu0 0.0
    %4104 = vmatpush.msra.mxu0 0.0
    %4105 = vmatpush.msra.mxu0 0.0
    %4106 = vmatpush.msra.mxu0 0.0
    %4107 = vmatpush.msra.mxu0 0.0
    %4108 = vmatpush.msra.mxu0 0.0
    %4109 = vmatpush.msra.mxu0 0.0
    %4110 = vmatpush.msra.mxu0 0.0
    %4111 = vmatpush.msra.mxu0 0.0
    %4112 = vmatpush.msra.mxu0 0.0
    %4113 = vmatpush.msra.mxu0 0.0
    %4114 = vmatpush.msra.mxu0 0.0
    %4115 = vmatpush.msra.mxu0 0.0
    %4116 = vmatpush.msra.mxu0 0.0
    %4117 = vmatpush.msra.mxu0 0.0
    %4118 = vmatpush.msra.mxu0 %v4098
    %4119 = vmatmul.f32.gmra.mxu0 %v4101
    %v4120 = vpop.f32.mrf.mxu0
    %v4121 = vadd.f32 0.0, %v4120
    %4122 = vdwg.mxu0
    %4123 = vrot.lane.b32.xlu0 %v581, 64
    %v4124 = vpop.permute.xlu0 %4123
    %v4127 = vsel %vm2135, %v2802, 0
    %4129 = vmatpush.msra.mxu0 0.0
    %4130 = vmatpush.msra.mxu0 0.0
    %4131 = vmatpush.msra.mxu0 0.0
    %4132 = vmatpush.msra.mxu0 0.0
    %4133 = vmatpush.msra.mxu0 0.0
    %4134 = vmatpush.msra.mxu0 0.0
    %4135 = vmatpush.msra.mxu0 0.0
    %4136 = vmatpush.msra.mxu0 0.0
    %4137 = vmatpush.msra.mxu0 0.0
    %4138 = vmatpush.msra.mxu0 0.0
    %4139 = vmatpush.msra.mxu0 0.0
    %4140 = vmatpush.msra.mxu0 0.0
    %4141 = vmatpush.msra.mxu0 0.0
    %4142 = vmatpush.msra.mxu0 0.0
    %4143 = vmatpush.msra.mxu0 0.0
    %4144 = vmatpush.msra.mxu0 %v4124
    %4145 = vmatmul.f32.gmra.mxu0 %v4127
    %v4146 = vpop.f32.mrf.mxu0
    %v4147 = vadd.f32 0.0, %v4146
    %4148 = vdwg.mxu0
    %4149 = vrot.lane.b32.xlu0 %v584, 64
    %v4150 = vpop.permute.xlu0 %4149
    %v4153 = vsel %vm2135, %v2806, 0
    %4155 = vmatpush.msra.mxu0 0.0
    %4156 = vmatpush.msra.mxu0 0.0
    %4157 = vmatpush.msra.mxu0 0.0
    %4158 = vmatpush.msra.mxu0 0.0
    %4159 = vmatpush.msra.mxu0 0.0
    %4160 = vmatpush.msra.mxu0 0.0
    %4161 = vmatpush.msra.mxu0 0.0
    %4162 = vmatpush.msra.mxu0 0.0
    %4163 = vmatpush.msra.mxu0 0.0
    %4164 = vmatpush.msra.mxu0 0.0
    %4165 = vmatpush.msra.mxu0 0.0
    %4166 = vmatpush.msra.mxu0 0.0
    %4167 = vmatpush.msra.mxu0 0.0
    %4168 = vmatpush.msra.mxu0 0.0
    %4169 = vmatpush.msra.mxu0 0.0
    %4170 = vmatpush.msra.mxu0 %v4150
    %4171 = vmatmul.f32.gmra.mxu0 %v4153
    %v4172 = vpop.f32.mrf.mxu0
    %v4173 = vadd.f32 0.0, %v4172
    %4174 = vdwg.mxu0
    %4175 = vrot.lane.b32.xlu0 %v587, 64
    %v4176 = vpop.permute.xlu0 %4175
    %v4179 = vsel %vm2135, %v2810, 0
    %4181 = vmatpush.msra.mxu0 0.0
    %4182 = vmatpush.msra.mxu0 0.0
    %4183 = vmatpush.msra.mxu0 0.0
    %4184 = vmatpush.msra.mxu0 0.0
    %4185 = vmatpush.msra.mxu0 0.0
    %4186 = vmatpush.msra.mxu0 0.0
    %4187 = vmatpush.msra.mxu0 0.0
    %4188 = vmatpush.msra.mxu0 0.0
    %4189 = vmatpush.msra.mxu0 0.0
    %4190 = vmatpush.msra.mxu0 0.0
    %4191 = vmatpush.msra.mxu0 0.0
    %4192 = vmatpush.msra.mxu0 0.0
    %4193 = vmatpush.msra.mxu0 0.0
    %4194 = vmatpush.msra.mxu0 0.0
    %4195 = vmatpush.msra.mxu0 0.0
    %4196 = vmatpush.msra.mxu0 %v4176
    %4197 = vmatmul.f32.gmra.mxu0 %v4179
    %v4198 = vpop.f32.mrf.mxu0
    %v4199 = vadd.f32 0.0, %v4198
    %4200 = vdwg.mxu0
    %4201 = vrot.lane.b32.xlu0 %v590, 64
    %v4202 = vpop.permute.xlu0 %4201
    %v4205 = vsel %vm2135, %v2814, 0
    %4207 = vmatpush.msra.mxu0 0.0
    %4208 = vmatpush.msra.mxu0 0.0
    %4209 = vmatpush.msra.mxu0 0.0
    %4210 = vmatpush.msra.mxu0 0.0
    %4211 = vmatpush.msra.mxu0 0.0
    %4212 = vmatpush.msra.mxu0 0.0
    %4213 = vmatpush.msra.mxu0 0.0
    %4214 = vmatpush.msra.mxu0 0.0
    %4215 = vmatpush.msra.mxu0 0.0
    %4216 = vmatpush.msra.mxu0 0.0
    %4217 = vmatpush.msra.mxu0 0.0
    %4218 = vmatpush.msra.mxu0 0.0
    %4219 = vmatpush.msra.mxu0 0.0
    %4220 = vmatpush.msra.mxu0 0.0
    %4221 = vmatpush.msra.mxu0 0.0
    %4222 = vmatpush.msra.mxu0 %v4202
    %4223 = vmatmul.f32.gmra.mxu0 %v4205
    %v4224 = vpop.f32.mrf.mxu0
    %v4225 = vadd.f32 0.0, %v4224
    %4226 = vdwg.mxu0
    %4227 = vrot.lane.b32.xlu0 %v593, 64
    %v4228 = vpop.permute.xlu0 %4227
    %v4231 = vsel %vm2135, %v2818, 0
    %4233 = vmatpush.msra.mxu0 0.0
    %4234 = vmatpush.msra.mxu0 0.0
    %4235 = vmatpush.msra.mxu0 0.0
    %4236 = vmatpush.msra.mxu0 0.0
    %4237 = vmatpush.msra.mxu0 0.0
    %4238 = vmatpush.msra.mxu0 0.0
    %4239 = vmatpush.msra.mxu0 0.0
    %4240 = vmatpush.msra.mxu0 0.0
    %4241 = vmatpush.msra.mxu0 0.0
    %4242 = vmatpush.msra.mxu0 0.0
    %4243 = vmatpush.msra.mxu0 0.0
    %4244 = vmatpush.msra.mxu0 0.0
    %4245 = vmatpush.msra.mxu0 0.0
    %4246 = vmatpush.msra.mxu0 0.0
    %4247 = vmatpush.msra.mxu0 0.0
    %4248 = vmatpush.msra.mxu0 %v4228
    %4249 = vmatmul.f32.gmra.mxu0 %v4231
    %v4250 = vpop.f32.mrf.mxu0
    %v4251 = vadd.f32 0.0, %v4250
    %4252 = vdwg.mxu0
    %4253 = vrot.lane.b32.xlu0 %v596, 64
    %v4254 = vpop.permute.xlu0 %4253
    %v4257 = vsel %vm2135, %v2822, 0
    %4259 = vmatpush.msra.mxu0 0.0
    %4260 = vmatpush.msra.mxu0 0.0
    %4261 = vmatpush.msra.mxu0 0.0
    %4262 = vmatpush.msra.mxu0 0.0
    %4263 = vmatpush.msra.mxu0 0.0
    %4264 = vmatpush.msra.mxu0 0.0
    %4265 = vmatpush.msra.mxu0 0.0
    %4266 = vmatpush.msra.mxu0 0.0
    %4267 = vmatpush.msra.mxu0 0.0
    %4268 = vmatpush.msra.mxu0 0.0
    %4269 = vmatpush.msra.mxu0 0.0
    %4270 = vmatpush.msra.mxu0 0.0
    %4271 = vmatpush.msra.mxu0 0.0
    %4272 = vmatpush.msra.mxu0 0.0
    %4273 = vmatpush.msra.mxu0 0.0
    %4274 = vmatpush.msra.mxu0 %v4254
    %4275 = vmatmul.f32.gmra.mxu0 %v4257
    %v4276 = vpop.f32.mrf.mxu0
    %v4277 = vadd.f32 0.0, %v4276
    %4278 = vdwg.mxu0
    %4279 = vrot.lane.b32.xlu0 %v599, 64
    %v4280 = vpop.permute.xlu0 %4279
    %v4283 = vsel %vm2135, %v2826, 0
    %4285 = vmatpush.msra.mxu0 0.0
    %4286 = vmatpush.msra.mxu0 0.0
    %4287 = vmatpush.msra.mxu0 0.0
    %4288 = vmatpush.msra.mxu0 0.0
    %4289 = vmatpush.msra.mxu0 0.0
    %4290 = vmatpush.msra.mxu0 0.0
    %4291 = vmatpush.msra.mxu0 0.0
    %4292 = vmatpush.msra.mxu0 0.0
    %4293 = vmatpush.msra.mxu0 0.0
    %4294 = vmatpush.msra.mxu0 0.0
    %4295 = vmatpush.msra.mxu0 0.0
    %4296 = vmatpush.msra.mxu0 0.0
    %4297 = vmatpush.msra.mxu0 0.0
    %4298 = vmatpush.msra.mxu0 0.0
    %4299 = vmatpush.msra.mxu0 0.0
    %4300 = vmatpush.msra.mxu0 %v4280
    %4301 = vmatmul.f32.gmra.mxu0 %v4283
    %v4302 = vpop.f32.mrf.mxu0
    %v4303 = vadd.f32 0.0, %v4302
    %4304 = vdwg.mxu0
    %4305 = vrot.lane.b32.xlu0 %v602, 64
    %v4306 = vpop.permute.xlu0 %4305
    %v4309 = vsel %vm2135, %v2830, 0
    %4311 = vmatpush.msra.mxu0 0.0
    %4312 = vmatpush.msra.mxu0 0.0
    %4313 = vmatpush.msra.mxu0 0.0
    %4314 = vmatpush.msra.mxu0 0.0
    %4315 = vmatpush.msra.mxu0 0.0
    %4316 = vmatpush.msra.mxu0 0.0
    %4317 = vmatpush.msra.mxu0 0.0
    %4318 = vmatpush.msra.mxu0 0.0
    %4319 = vmatpush.msra.mxu0 0.0
    %4320 = vmatpush.msra.mxu0 0.0
    %4321 = vmatpush.msra.mxu0 0.0
    %4322 = vmatpush.msra.mxu0 0.0
    %4323 = vmatpush.msra.mxu0 0.0
    %4324 = vmatpush.msra.mxu0 0.0
    %4325 = vmatpush.msra.mxu0 0.0
    %4326 = vmatpush.msra.mxu0 %v4306
    %4327 = vmatmul.f32.gmra.mxu0 %v4309
    %v4328 = vpop.f32.mrf.mxu0
    %v4329 = vadd.f32 0.0, %v4328
    %4330 = vdwg.mxu0
    %4331 = vrot.lane.b32.xlu0 %v605, 64
    %v4332 = vpop.permute.xlu0 %4331
    %v4335 = vsel %vm2135, %v2834, 0
    %4337 = vmatpush.msra.mxu0 0.0
    %4338 = vmatpush.msra.mxu0 0.0
    %4339 = vmatpush.msra.mxu0 0.0
    %4340 = vmatpush.msra.mxu0 0.0
    %4341 = vmatpush.msra.mxu0 0.0
    %4342 = vmatpush.msra.mxu0 0.0
    %4343 = vmatpush.msra.mxu0 0.0
    %4344 = vmatpush.msra.mxu0 0.0
    %4345 = vmatpush.msra.mxu0 0.0
    %4346 = vmatpush.msra.mxu0 0.0
    %4347 = vmatpush.msra.mxu0 0.0
    %4348 = vmatpush.msra.mxu0 0.0
    %4349 = vmatpush.msra.mxu0 0.0
    %4350 = vmatpush.msra.mxu0 0.0
    %4351 = vmatpush.msra.mxu0 0.0
    %4352 = vmatpush.msra.mxu0 %v4332
    %4353 = vmatmul.f32.gmra.mxu0 %v4335
    %v4354 = vpop.f32.mrf.mxu0
    %v4355 = vadd.f32 0.0, %v4354
    %4356 = vdwg.mxu0
    %4357 = vrot.lane.b32.xlu0 %v608, 64
    %v4358 = vpop.permute.xlu0 %4357
    %v4361 = vsel %vm2135, %v2838, 0
    %4363 = vmatpush.msra.mxu0 0.0
    %4364 = vmatpush.msra.mxu0 0.0
    %4365 = vmatpush.msra.mxu0 0.0
    %4366 = vmatpush.msra.mxu0 0.0
    %4367 = vmatpush.msra.mxu0 0.0
    %4368 = vmatpush.msra.mxu0 0.0
    %4369 = vmatpush.msra.mxu0 0.0
    %4370 = vmatpush.msra.mxu0 0.0
    %4371 = vmatpush.msra.mxu0 0.0
    %4372 = vmatpush.msra.mxu0 0.0
    %4373 = vmatpush.msra.mxu0 0.0
    %4374 = vmatpush.msra.mxu0 0.0
    %4375 = vmatpush.msra.mxu0 0.0
    %4376 = vmatpush.msra.mxu0 0.0
    %4377 = vmatpush.msra.mxu0 0.0
    %4378 = vmatpush.msra.mxu0 %v4358
    %4379 = vmatmul.f32.gmra.mxu0 %v4361
    %v4380 = vpop.f32.mrf.mxu0
    %v4381 = vadd.f32 0.0, %v4380
    %4382 = vdwg.mxu0
    %v4384 = vsel %vm297, %v3991, 0
    %v4387 = vsel %vm297, %v4017, 0
    %v4390 = vsel %vm297, %v4043, 0
    %v4393 = vsel %vm297, %v4069, 0
    %v4396 = vsel %vm297, %v4095, 0
    %v4399 = vsel %vm297, %v4121, 0
    %v4402 = vsel %vm297, %v4147, 0
    %v4405 = vsel %vm297, %v4173, 0
    %v4408 = vsel %vm297, %v4199, 0
    %v4411 = vsel %vm297, %v4225, 0
    %v4414 = vsel %vm297, %v4251, 0
    %v4417 = vsel %vm297, %v4277, 0
    %v4420 = vsel %vm297, %v4303, 0
    %v4423 = vsel %vm297, %v4329, 0
    %v4426 = vsel %vm297, %v4355, 0
    %v4429 = vsel %vm297, %v4381, 0
    %4431 = vmatpush.msra.mxu0 0.0
    %4432 = vmatpush.msra.mxu0 0.0
    %4433 = vmatpush.msra.mxu0 0.0
    %4434 = vmatpush.msra.mxu0 0.0
    %4435 = vmatpush.msra.mxu0 0.0
    %4436 = vmatpush.msra.mxu0 0.0
    %4437 = vmatpush.msra.mxu0 0.0
    %4438 = vmatpush.msra.mxu0 0.0
    %4439 = vmatpush.msra.mxu0 0.0
    %4440 = vmatpush.msra.mxu0 0.0
    %4441 = vmatpush.msra.mxu0 0.0
    %4442 = vmatpush.msra.mxu0 0.0
    %4443 = vmatpush.msra.mxu0 %v2855
    %4444 = vmatpush.msra.mxu0 %v2854
    %4445 = vmatpush.msra.mxu0 %v2853
    %4446 = vmatpush.msra.mxu0 %v2852
    %4447 = vmatmul.f32.gmra.mxu0 %v4384
    %v4448 = vpop.f32.mrf.mxu0
    %v4449 = vadd.f32 0.0, %v4448
    %4450 = vmatmul.f32.gmra.mxu0 %v4387
    %v4451 = vpop.f32.mrf.mxu0
    %v4452 = vadd.f32 0.0, %v4451
    %4453 = vmatmul.f32.gmra.mxu0 %v4390
    %v4454 = vpop.f32.mrf.mxu0
    %v4455 = vadd.f32 0.0, %v4454
    %4456 = vmatmul.f32.gmra.mxu0 %v4393
    %v4457 = vpop.f32.mrf.mxu0
    %v4458 = vadd.f32 0.0, %v4457
    %4459 = vmatmul.f32.gmra.mxu0 %v4396
    %v4460 = vpop.f32.mrf.mxu0
    %v4461 = vadd.f32 0.0, %v4460
    %4462 = vmatmul.f32.gmra.mxu0 %v4399
    %v4463 = vpop.f32.mrf.mxu0
    %v4464 = vadd.f32 0.0, %v4463
    %4465 = vmatmul.f32.gmra.mxu0 %v4402
    %v4466 = vpop.f32.mrf.mxu0
    %v4467 = vadd.f32 0.0, %v4466
    %4468 = vmatmul.f32.gmra.mxu0 %v4405
    %v4469 = vpop.f32.mrf.mxu0
    %v4470 = vadd.f32 0.0, %v4469
    %4471 = vmatmul.f32.gmra.mxu0 %v4408
    %v4472 = vpop.f32.mrf.mxu0
    %v4473 = vadd.f32 0.0, %v4472
    %4474 = vmatmul.f32.gmra.mxu0 %v4411
    %v4475 = vpop.f32.mrf.mxu0
    %v4476 = vadd.f32 0.0, %v4475
    %4477 = vmatmul.f32.gmra.mxu0 %v4414
    %v4478 = vpop.f32.mrf.mxu0
    %v4479 = vadd.f32 0.0, %v4478
    %4480 = vmatmul.f32.gmra.mxu0 %v4417
    %v4481 = vpop.f32.mrf.mxu0
    %v4482 = vadd.f32 0.0, %v4481
    %4483 = vmatmul.f32.gmra.mxu0 %v4420
    %v4484 = vpop.f32.mrf.mxu0
    %v4485 = vadd.f32 0.0, %v4484
    %4486 = vmatmul.f32.gmra.mxu0 %v4423
    %v4487 = vpop.f32.mrf.mxu0
    %v4488 = vadd.f32 0.0, %v4487
    %4489 = vmatmul.f32.gmra.mxu0 %v4426
    %v4490 = vpop.f32.mrf.mxu0
    %v4491 = vadd.f32 0.0, %v4490
    %4492 = vmatmul.f32.gmra.mxu0 %v4429
    %v4493 = vpop.f32.mrf.mxu0
    %v4494 = vadd.f32 0.0, %v4493
    %4495 = vdwg.mxu0
    %v4496 = vadd.f32 %v3951, %v4449
    %v4497 = vadd.f32 %v3952, %v4452
    %v4498 = vadd.f32 %v3953, %v4455
    %v4499 = vadd.f32 %v3954, %v4458
    %v4500 = vadd.f32 %v3955, %v4461
    %v4501 = vadd.f32 %v3956, %v4464
    %v4502 = vadd.f32 %v3957, %v4467
    %v4503 = vadd.f32 %v3958, %v4470
    %v4504 = vadd.f32 %v3959, %v4473
    %v4505 = vadd.f32 %v3960, %v4476
    %v4506 = vadd.f32 %v3961, %v4479
    %v4507 = vadd.f32 %v3962, %v4482
    %v4508 = vadd.f32 %v3963, %v4485
    %v4509 = vadd.f32 %v3964, %v4488
    %v4510 = vadd.f32 %v3965, %v4491
    %v4511 = vadd.f32 %v3966, %v4494
    %4512 = vrot.lane.b32.xlu0 %v563, 32
    %v4513 = vpop.permute.xlu0 %4512
    %v4516 = vsel %vm2135, %v2779, 0
    %4518 = vmatpush.msra.mxu0 0.0
    %4519 = vmatpush.msra.mxu0 0.0
    %4520 = vmatpush.msra.mxu0 0.0
    %4521 = vmatpush.msra.mxu0 0.0
    %4522 = vmatpush.msra.mxu0 0.0
    %4523 = vmatpush.msra.mxu0 0.0
    %4524 = vmatpush.msra.mxu0 0.0
    %4525 = vmatpush.msra.mxu0 0.0
    %4526 = vmatpush.msra.mxu0 0.0
    %4527 = vmatpush.msra.mxu0 0.0
    %4528 = vmatpush.msra.mxu0 0.0
    %4529 = vmatpush.msra.mxu0 0.0
    %4530 = vmatpush.msra.mxu0 0.0
    %4531 = vmatpush.msra.mxu0 0.0
    %4532 = vmatpush.msra.mxu0 0.0
    %4533 = vmatpush.msra.mxu0 %v4513
    %4534 = vmatmul.f32.gmra.mxu0 %v4516
    %v4535 = vpop.f32.mrf.mxu0
    %v4536 = vadd.f32 0.0, %v4535
    %4537 = vdwg.mxu0
    %4538 = vrot.lane.b32.xlu0 %v566, 32
    %v4539 = vpop.permute.xlu0 %4538
    %v4542 = vsel %vm2135, %v2783, 0
    %4544 = vmatpush.msra.mxu0 0.0
    %4545 = vmatpush.msra.mxu0 0.0
    %4546 = vmatpush.msra.mxu0 0.0
    %4547 = vmatpush.msra.mxu0 0.0
    %4548 = vmatpush.msra.mxu0 0.0
    %4549 = vmatpush.msra.mxu0 0.0
    %4550 = vmatpush.msra.mxu0 0.0
    %4551 = vmatpush.msra.mxu0 0.0
    %4552 = vmatpush.msra.mxu0 0.0
    %4553 = vmatpush.msra.mxu0 0.0
    %4554 = vmatpush.msra.mxu0 0.0
    %4555 = vmatpush.msra.mxu0 0.0
    %4556 = vmatpush.msra.mxu0 0.0
    %4557 = vmatpush.msra.mxu0 0.0
    %4558 = vmatpush.msra.mxu0 0.0
    %4559 = vmatpush.msra.mxu0 %v4539
    %4560 = vmatmul.f32.gmra.mxu0 %v4542
    %v4561 = vpop.f32.mrf.mxu0
    %v4562 = vadd.f32 0.0, %v4561
    %4563 = vdwg.mxu0
    %4564 = vrot.lane.b32.xlu0 %v569, 32
    %v4565 = vpop.permute.xlu0 %4564
    %v4568 = vsel %vm2135, %v2787, 0
    %4570 = vmatpush.msra.mxu0 0.0
    %4571 = vmatpush.msra.mxu0 0.0
    %4572 = vmatpush.msra.mxu0 0.0
    %4573 = vmatpush.msra.mxu0 0.0
    %4574 = vmatpush.msra.mxu0 0.0
    %4575 = vmatpush.msra.mxu0 0.0
    %4576 = vmatpush.msra.mxu0 0.0
    %4577 = vmatpush.msra.mxu0 0.0
    %4578 = vmatpush.msra.mxu0 0.0
    %4579 = vmatpush.msra.mxu0 0.0
    %4580 = vmatpush.msra.mxu0 0.0
    %4581 = vmatpush.msra.mxu0 0.0
    %4582 = vmatpush.msra.mxu0 0.0
    %4583 = vmatpush.msra.mxu0 0.0
    %4584 = vmatpush.msra.mxu0 0.0
    %4585 = vmatpush.msra.mxu0 %v4565
    %4586 = vmatmul.f32.gmra.mxu0 %v4568
    %v4587 = vpop.f32.mrf.mxu0
    %v4588 = vadd.f32 0.0, %v4587
    %4589 = vdwg.mxu0
    %4590 = vrot.lane.b32.xlu0 %v572, 32
    %v4591 = vpop.permute.xlu0 %4590
    %v4594 = vsel %vm2135, %v2791, 0
    %4596 = vmatpush.msra.mxu0 0.0
    %4597 = vmatpush.msra.mxu0 0.0
    %4598 = vmatpush.msra.mxu0 0.0
    %4599 = vmatpush.msra.mxu0 0.0
    %4600 = vmatpush.msra.mxu0 0.0
    %4601 = vmatpush.msra.mxu0 0.0
    %4602 = vmatpush.msra.mxu0 0.0
    %4603 = vmatpush.msra.mxu0 0.0
    %4604 = vmatpush.msra.mxu0 0.0
    %4605 = vmatpush.msra.mxu0 0.0
    %4606 = vmatpush.msra.mxu0 0.0
    %4607 = vmatpush.msra.mxu0 0.0
    %4608 = vmatpush.msra.mxu0 0.0
    %4609 = vmatpush.msra.mxu0 0.0
    %4610 = vmatpush.msra.mxu0 0.0
    %4611 = vmatpush.msra.mxu0 %v4591
    %4612 = vmatmul.f32.gmra.mxu0 %v4594
    %v4613 = vpop.f32.mrf.mxu0
    %v4614 = vadd.f32 0.0, %v4613
    %4615 = vdwg.mxu0
    %4616 = vrot.lane.b32.xlu0 %v575, 32
    %v4617 = vpop.permute.xlu0 %4616
    %v4620 = vsel %vm2135, %v2795, 0
    %4622 = vmatpush.msra.mxu0 0.0
    %4623 = vmatpush.msra.mxu0 0.0
    %4624 = vmatpush.msra.mxu0 0.0
    %4625 = vmatpush.msra.mxu0 0.0
    %4626 = vmatpush.msra.mxu0 0.0
    %4627 = vmatpush.msra.mxu0 0.0
    %4628 = vmatpush.msra.mxu0 0.0
    %4629 = vmatpush.msra.mxu0 0.0
    %4630 = vmatpush.msra.mxu0 0.0
    %4631 = vmatpush.msra.mxu0 0.0
    %4632 = vmatpush.msra.mxu0 0.0
    %4633 = vmatpush.msra.mxu0 0.0
    %4634 = vmatpush.msra.mxu0 0.0
    %4635 = vmatpush.msra.mxu0 0.0
    %4636 = vmatpush.msra.mxu0 0.0
    %4637 = vmatpush.msra.mxu0 %v4617
    %4638 = vmatmul.f32.gmra.mxu0 %v4620
    %v4639 = vpop.f32.mrf.mxu0
    %v4640 = vadd.f32 0.0, %v4639
    %4641 = vdwg.mxu0
    %4642 = vrot.lane.b32.xlu0 %v578, 32
    %v4643 = vpop.permute.xlu0 %4642
    %v4646 = vsel %vm2135, %v2799, 0
    %4648 = vmatpush.msra.mxu0 0.0
    %4649 = vmatpush.msra.mxu0 0.0
    %4650 = vmatpush.msra.mxu0 0.0
    %4651 = vmatpush.msra.mxu0 0.0
    %4652 = vmatpush.msra.mxu0 0.0
    %4653 = vmatpush.msra.mxu0 0.0
    %4654 = vmatpush.msra.mxu0 0.0
    %4655 = vmatpush.msra.mxu0 0.0
    %4656 = vmatpush.msra.mxu0 0.0
    %4657 = vmatpush.msra.mxu0 0.0
    %4658 = vmatpush.msra.mxu0 0.0
    %4659 = vmatpush.msra.mxu0 0.0
    %4660 = vmatpush.msra.mxu0 0.0
    %4661 = vmatpush.msra.mxu0 0.0
    %4662 = vmatpush.msra.mxu0 0.0
    %4663 = vmatpush.msra.mxu0 %v4643
    %4664 = vmatmul.f32.gmra.mxu0 %v4646
    %v4665 = vpop.f32.mrf.mxu0
    %v4666 = vadd.f32 0.0, %v4665
    %4667 = vdwg.mxu0
    %4668 = vrot.lane.b32.xlu0 %v581, 32
    %v4669 = vpop.permute.xlu0 %4668
    %v4672 = vsel %vm2135, %v2803, 0
    %4674 = vmatpush.msra.mxu0 0.0
    %4675 = vmatpush.msra.mxu0 0.0
    %4676 = vmatpush.msra.mxu0 0.0
    %4677 = vmatpush.msra.mxu0 0.0
    %4678 = vmatpush.msra.mxu0 0.0
    %4679 = vmatpush.msra.mxu0 0.0
    %4680 = vmatpush.msra.mxu0 0.0
    %4681 = vmatpush.msra.mxu0 0.0
    %4682 = vmatpush.msra.mxu0 0.0
    %4683 = vmatpush.msra.mxu0 0.0
    %4684 = vmatpush.msra.mxu0 0.0
    %4685 = vmatpush.msra.mxu0 0.0
    %4686 = vmatpush.msra.mxu0 0.0
    %4687 = vmatpush.msra.mxu0 0.0
    %4688 = vmatpush.msra.mxu0 0.0
    %4689 = vmatpush.msra.mxu0 %v4669
    %4690 = vmatmul.f32.gmra.mxu0 %v4672
    %v4691 = vpop.f32.mrf.mxu0
    %v4692 = vadd.f32 0.0, %v4691
    %4693 = vdwg.mxu0
    %4694 = vrot.lane.b32.xlu0 %v584, 32
    %v4695 = vpop.permute.xlu0 %4694
    %v4698 = vsel %vm2135, %v2807, 0
    %4700 = vmatpush.msra.mxu0 0.0
    %4701 = vmatpush.msra.mxu0 0.0
    %4702 = vmatpush.msra.mxu0 0.0
    %4703 = vmatpush.msra.mxu0 0.0
    %4704 = vmatpush.msra.mxu0 0.0
    %4705 = vmatpush.msra.mxu0 0.0
    %4706 = vmatpush.msra.mxu0 0.0
    %4707 = vmatpush.msra.mxu0 0.0
    %4708 = vmatpush.msra.mxu0 0.0
    %4709 = vmatpush.msra.mxu0 0.0
    %4710 = vmatpush.msra.mxu0 0.0
    %4711 = vmatpush.msra.mxu0 0.0
    %4712 = vmatpush.msra.mxu0 0.0
    %4713 = vmatpush.msra.mxu0 0.0
    %4714 = vmatpush.msra.mxu0 0.0
    %4715 = vmatpush.msra.mxu0 %v4695
    %4716 = vmatmul.f32.gmra.mxu0 %v4698
    %v4717 = vpop.f32.mrf.mxu0
    %v4718 = vadd.f32 0.0, %v4717
    %4719 = vdwg.mxu0
    %4720 = vrot.lane.b32.xlu0 %v587, 32
    %v4721 = vpop.permute.xlu0 %4720
    %v4724 = vsel %vm2135, %v2811, 0
    %4726 = vmatpush.msra.mxu0 0.0
    %4727 = vmatpush.msra.mxu0 0.0
    %4728 = vmatpush.msra.mxu0 0.0
    %4729 = vmatpush.msra.mxu0 0.0
    %4730 = vmatpush.msra.mxu0 0.0
    %4731 = vmatpush.msra.mxu0 0.0
    %4732 = vmatpush.msra.mxu0 0.0
    %4733 = vmatpush.msra.mxu0 0.0
    %4734 = vmatpush.msra.mxu0 0.0
    %4735 = vmatpush.msra.mxu0 0.0
    %4736 = vmatpush.msra.mxu0 0.0
    %4737 = vmatpush.msra.mxu0 0.0
    %4738 = vmatpush.msra.mxu0 0.0
    %4739 = vmatpush.msra.mxu0 0.0
    %4740 = vmatpush.msra.mxu0 0.0
    %4741 = vmatpush.msra.mxu0 %v4721
    %4742 = vmatmul.f32.gmra.mxu0 %v4724
    %v4743 = vpop.f32.mrf.mxu0
    %v4744 = vadd.f32 0.0, %v4743
    %4745 = vdwg.mxu0
    %4746 = vrot.lane.b32.xlu0 %v590, 32
    %v4747 = vpop.permute.xlu0 %4746
    %v4750 = vsel %vm2135, %v2815, 0
    %4752 = vmatpush.msra.mxu0 0.0
    %4753 = vmatpush.msra.mxu0 0.0
    %4754 = vmatpush.msra.mxu0 0.0
    %4755 = vmatpush.msra.mxu0 0.0
    %4756 = vmatpush.msra.mxu0 0.0
    %4757 = vmatpush.msra.mxu0 0.0
    %4758 = vmatpush.msra.mxu0 0.0
    %4759 = vmatpush.msra.mxu0 0.0
    %4760 = vmatpush.msra.mxu0 0.0
    %4761 = vmatpush.msra.mxu0 0.0
    %4762 = vmatpush.msra.mxu0 0.0
    %4763 = vmatpush.msra.mxu0 0.0
    %4764 = vmatpush.msra.mxu0 0.0
    %4765 = vmatpush.msra.mxu0 0.0
    %4766 = vmatpush.msra.mxu0 0.0
    %4767 = vmatpush.msra.mxu0 %v4747
    %4768 = vmatmul.f32.gmra.mxu0 %v4750
    %v4769 = vpop.f32.mrf.mxu0
    %v4770 = vadd.f32 0.0, %v4769
    %4771 = vdwg.mxu0
    %4772 = vrot.lane.b32.xlu0 %v593, 32
    %v4773 = vpop.permute.xlu0 %4772
    %v4776 = vsel %vm2135, %v2819, 0
    %4778 = vmatpush.msra.mxu0 0.0
    %4779 = vmatpush.msra.mxu0 0.0
    %4780 = vmatpush.msra.mxu0 0.0
    %4781 = vmatpush.msra.mxu0 0.0
    %4782 = vmatpush.msra.mxu0 0.0
    %4783 = vmatpush.msra.mxu0 0.0
    %4784 = vmatpush.msra.mxu0 0.0
    %4785 = vmatpush.msra.mxu0 0.0
    %4786 = vmatpush.msra.mxu0 0.0
    %4787 = vmatpush.msra.mxu0 0.0
    %4788 = vmatpush.msra.mxu0 0.0
    %4789 = vmatpush.msra.mxu0 0.0
    %4790 = vmatpush.msra.mxu0 0.0
    %4791 = vmatpush.msra.mxu0 0.0
    %4792 = vmatpush.msra.mxu0 0.0
    %4793 = vmatpush.msra.mxu0 %v4773
    %4794 = vmatmul.f32.gmra.mxu0 %v4776
    %v4795 = vpop.f32.mrf.mxu0
    %v4796 = vadd.f32 0.0, %v4795
    %4797 = vdwg.mxu0
    %4798 = vrot.lane.b32.xlu0 %v596, 32
    %v4799 = vpop.permute.xlu0 %4798
    %v4802 = vsel %vm2135, %v2823, 0
    %4804 = vmatpush.msra.mxu0 0.0
    %4805 = vmatpush.msra.mxu0 0.0
    %4806 = vmatpush.msra.mxu0 0.0
    %4807 = vmatpush.msra.mxu0 0.0
    %4808 = vmatpush.msra.mxu0 0.0
    %4809 = vmatpush.msra.mxu0 0.0
    %4810 = vmatpush.msra.mxu0 0.0
    %4811 = vmatpush.msra.mxu0 0.0
    %4812 = vmatpush.msra.mxu0 0.0
    %4813 = vmatpush.msra.mxu0 0.0
    %4814 = vmatpush.msra.mxu0 0.0
    %4815 = vmatpush.msra.mxu0 0.0
    %4816 = vmatpush.msra.mxu0 0.0
    %4817 = vmatpush.msra.mxu0 0.0
    %4818 = vmatpush.msra.mxu0 0.0
    %4819 = vmatpush.msra.mxu0 %v4799
    %4820 = vmatmul.f32.gmra.mxu0 %v4802
    %v4821 = vpop.f32.mrf.mxu0
    %v4822 = vadd.f32 0.0, %v4821
    %4823 = vdwg.mxu0
    %4824 = vrot.lane.b32.xlu0 %v599, 32
    %v4825 = vpop.permute.xlu0 %4824
    %v4828 = vsel %vm2135, %v2827, 0
    %4830 = vmatpush.msra.mxu0 0.0
    %4831 = vmatpush.msra.mxu0 0.0
    %4832 = vmatpush.msra.mxu0 0.0
    %4833 = vmatpush.msra.mxu0 0.0
    %4834 = vmatpush.msra.mxu0 0.0
    %4835 = vmatpush.msra.mxu0 0.0
    %4836 = vmatpush.msra.mxu0 0.0
    %4837 = vmatpush.msra.mxu0 0.0
    %4838 = vmatpush.msra.mxu0 0.0
    %4839 = vmatpush.msra.mxu0 0.0
    %4840 = vmatpush.msra.mxu0 0.0
    %4841 = vmatpush.msra.mxu0 0.0
    %4842 = vmatpush.msra.mxu0 0.0
    %4843 = vmatpush.msra.mxu0 0.0
    %4844 = vmatpush.msra.mxu0 0.0
    %4845 = vmatpush.msra.mxu0 %v4825
    %4846 = vmatmul.f32.gmra.mxu0 %v4828
    %v4847 = vpop.f32.mrf.mxu0
    %v4848 = vadd.f32 0.0, %v4847
    %4849 = vdwg.mxu0
    %4850 = vrot.lane.b32.xlu0 %v602, 32
    %v4851 = vpop.permute.xlu0 %4850
    %v4854 = vsel %vm2135, %v2831, 0
    %4856 = vmatpush.msra.mxu0 0.0
    %4857 = vmatpush.msra.mxu0 0.0
    %4858 = vmatpush.msra.mxu0 0.0
    %4859 = vmatpush.msra.mxu0 0.0
    %4860 = vmatpush.msra.mxu0 0.0
    %4861 = vmatpush.msra.mxu0 0.0
    %4862 = vmatpush.msra.mxu0 0.0
    %4863 = vmatpush.msra.mxu0 0.0
    %4864 = vmatpush.msra.mxu0 0.0
    %4865 = vmatpush.msra.mxu0 0.0
    %4866 = vmatpush.msra.mxu0 0.0
    %4867 = vmatpush.msra.mxu0 0.0
    %4868 = vmatpush.msra.mxu0 0.0
    %4869 = vmatpush.msra.mxu0 0.0
    %4870 = vmatpush.msra.mxu0 0.0
    %4871 = vmatpush.msra.mxu0 %v4851
    %4872 = vmatmul.f32.gmra.mxu0 %v4854
    %v4873 = vpop.f32.mrf.mxu0
    %v4874 = vadd.f32 0.0, %v4873
    %4875 = vdwg.mxu0
    %4876 = vrot.lane.b32.xlu0 %v605, 32
    %v4877 = vpop.permute.xlu0 %4876
    %v4880 = vsel %vm2135, %v2835, 0
    %4882 = vmatpush.msra.mxu0 0.0
    %4883 = vmatpush.msra.mxu0 0.0
    %4884 = vmatpush.msra.mxu0 0.0
    %4885 = vmatpush.msra.mxu0 0.0
    %4886 = vmatpush.msra.mxu0 0.0
    %4887 = vmatpush.msra.mxu0 0.0
    %4888 = vmatpush.msra.mxu0 0.0
    %4889 = vmatpush.msra.mxu0 0.0
    %4890 = vmatpush.msra.mxu0 0.0
    %4891 = vmatpush.msra.mxu0 0.0
    %4892 = vmatpush.msra.mxu0 0.0
    %4893 = vmatpush.msra.mxu0 0.0
    %4894 = vmatpush.msra.mxu0 0.0
    %4895 = vmatpush.msra.mxu0 0.0
    %4896 = vmatpush.msra.mxu0 0.0
    %4897 = vmatpush.msra.mxu0 %v4877
    %4898 = vmatmul.f32.gmra.mxu0 %v4880
    %v4899 = vpop.f32.mrf.mxu0
    %v4900 = vadd.f32 0.0, %v4899
    %4901 = vdwg.mxu0
    %4902 = vrot.lane.b32.xlu0 %v608, 32
    %v4903 = vpop.permute.xlu0 %4902
    %v4906 = vsel %vm2135, %v2839, 0
    %4908 = vmatpush.msra.mxu0 0.0
    %4909 = vmatpush.msra.mxu0 0.0
    %4910 = vmatpush.msra.mxu0 0.0
    %4911 = vmatpush.msra.mxu0 0.0
    %4912 = vmatpush.msra.mxu0 0.0
    %4913 = vmatpush.msra.mxu0 0.0
    %4914 = vmatpush.msra.mxu0 0.0
    %4915 = vmatpush.msra.mxu0 0.0
    %4916 = vmatpush.msra.mxu0 0.0
    %4917 = vmatpush.msra.mxu0 0.0
    %4918 = vmatpush.msra.mxu0 0.0
    %4919 = vmatpush.msra.mxu0 0.0
    %4920 = vmatpush.msra.mxu0 0.0
    %4921 = vmatpush.msra.mxu0 0.0
    %4922 = vmatpush.msra.mxu0 0.0
    %4923 = vmatpush.msra.mxu0 %v4903
    %4924 = vmatmul.f32.gmra.mxu0 %v4906
    %v4925 = vpop.f32.mrf.mxu0
    %v4926 = vadd.f32 0.0, %v4925
    %4927 = vdwg.mxu0
    %v4929 = vsel %vm297, %v4536, 0
    %v4932 = vsel %vm297, %v4562, 0
    %v4935 = vsel %vm297, %v4588, 0
    %v4938 = vsel %vm297, %v4614, 0
    %v4941 = vsel %vm297, %v4640, 0
    %v4944 = vsel %vm297, %v4666, 0
    %v4947 = vsel %vm297, %v4692, 0
    %v4950 = vsel %vm297, %v4718, 0
    %v4953 = vsel %vm297, %v4744, 0
    %v4956 = vsel %vm297, %v4770, 0
    %v4959 = vsel %vm297, %v4796, 0
    %v4962 = vsel %vm297, %v4822, 0
    %v4965 = vsel %vm297, %v4848, 0
    %v4968 = vsel %vm297, %v4874, 0
    %v4971 = vsel %vm297, %v4900, 0
    %v4974 = vsel %vm297, %v4926, 0
    %4976 = vmatpush.msra.mxu0 0.0
    %4977 = vmatpush.msra.mxu0 0.0
    %4978 = vmatpush.msra.mxu0 0.0
    %4979 = vmatpush.msra.mxu0 0.0
    %4980 = vmatpush.msra.mxu0 0.0
    %4981 = vmatpush.msra.mxu0 0.0
    %4982 = vmatpush.msra.mxu0 0.0
    %4983 = vmatpush.msra.mxu0 0.0
    %4984 = vmatpush.msra.mxu0 0.0
    %4985 = vmatpush.msra.mxu0 0.0
    %4986 = vmatpush.msra.mxu0 0.0
    %4987 = vmatpush.msra.mxu0 0.0
    %4988 = vmatpush.msra.mxu0 %v2859
    %4989 = vmatpush.msra.mxu0 %v2858
    %4990 = vmatpush.msra.mxu0 %v2857
    %4991 = vmatpush.msra.mxu0 %v2856
    %4992 = vmatmul.f32.gmra.mxu0 %v4929
    %v4993 = vpop.f32.mrf.mxu0
    %v4994 = vadd.f32 0.0, %v4993
    %4995 = vmatmul.f32.gmra.mxu0 %v4932
    %v4996 = vpop.f32.mrf.mxu0
    %v4997 = vadd.f32 0.0, %v4996
    %4998 = vmatmul.f32.gmra.mxu0 %v4935
    %v4999 = vpop.f32.mrf.mxu0
    %v5000 = vadd.f32 0.0, %v4999
    %5001 = vmatmul.f32.gmra.mxu0 %v4938
    %v5002 = vpop.f32.mrf.mxu0
    %v5003 = vadd.f32 0.0, %v5002
    %5004 = vmatmul.f32.gmra.mxu0 %v4941
    %v5005 = vpop.f32.mrf.mxu0
    %v5006 = vadd.f32 0.0, %v5005
    %5007 = vmatmul.f32.gmra.mxu0 %v4944
    %v5008 = vpop.f32.mrf.mxu0
    %v5009 = vadd.f32 0.0, %v5008
    %5010 = vmatmul.f32.gmra.mxu0 %v4947
    %v5011 = vpop.f32.mrf.mxu0
    %v5012 = vadd.f32 0.0, %v5011
    %5013 = vmatmul.f32.gmra.mxu0 %v4950
    %v5014 = vpop.f32.mrf.mxu0
    %v5015 = vadd.f32 0.0, %v5014
    %5016 = vmatmul.f32.gmra.mxu0 %v4953
    %v5017 = vpop.f32.mrf.mxu0
    %v5018 = vadd.f32 0.0, %v5017
    %5019 = vmatmul.f32.gmra.mxu0 %v4956
    %v5020 = vpop.f32.mrf.mxu0
    %v5021 = vadd.f32 0.0, %v5020
    %5022 = vmatmul.f32.gmra.mxu0 %v4959
    %v5023 = vpop.f32.mrf.mxu0
    %v5024 = vadd.f32 0.0, %v5023
    %5025 = vmatmul.f32.gmra.mxu0 %v4962
    %v5026 = vpop.f32.mrf.mxu0
    %v5027 = vadd.f32 0.0, %v5026
    %5028 = vmatmul.f32.gmra.mxu0 %v4965
    %v5029 = vpop.f32.mrf.mxu0
    %v5030 = vadd.f32 0.0, %v5029
    %5031 = vmatmul.f32.gmra.mxu0 %v4968
    %v5032 = vpop.f32.mrf.mxu0
    %v5033 = vadd.f32 0.0, %v5032
    %5034 = vmatmul.f32.gmra.mxu0 %v4971
    %v5035 = vpop.f32.mrf.mxu0
    %v5036 = vadd.f32 0.0, %v5035
    %5037 = vmatmul.f32.gmra.mxu0 %v4974
    %v5038 = vpop.f32.mrf.mxu0
    %v5039 = vadd.f32 0.0, %v5038
    %5040 = vdwg.mxu0
    %v5041 = vadd.f32 %v4496, %v4994
    %v5042 = vadd.f32 %v4497, %v4997
    %v5043 = vadd.f32 %v4498, %v5000
    %v5044 = vadd.f32 %v4499, %v5003
    %v5045 = vadd.f32 %v4500, %v5006
    %v5046 = vadd.f32 %v4501, %v5009
    %v5047 = vadd.f32 %v4502, %v5012
    %v5048 = vadd.f32 %v4503, %v5015
    %v5049 = vadd.f32 %v4504, %v5018
    %v5050 = vadd.f32 %v4505, %v5021
    %v5051 = vadd.f32 %v4506, %v5024
    %v5052 = vadd.f32 %v4507, %v5027
    %v5053 = vadd.f32 %v4508, %v5030
    %v5054 = vadd.f32 %v4509, %v5033
    %v5055 = vadd.f32 %v4510, %v5036
    %v5056 = vadd.f32 %v4511, %v5039
    %v5057 = vperm.slane %v94, 2
    %v5058 = vadd.f32 %v5041, %v5057
    %v5059 = vadd.f32 %v5042, %v5057
    %v5060 = vadd.f32 %v5043, %v5057
    %v5061 = vadd.f32 %v5044, %v5057
    %v5062 = vadd.f32 %v5045, %v5057
    %v5063 = vadd.f32 %v5046, %v5057
    %v5064 = vadd.f32 %v5047, %v5057
    %v5065 = vadd.f32 %v5048, %v5057
    %v5066 = vadd.f32 %v5049, %v5057
    %v5067 = vadd.f32 %v5050, %v5057
    %v5068 = vadd.f32 %v5051, %v5057
    %v5069 = vadd.f32 %v5052, %v5057
    %v5070 = vadd.f32 %v5053, %v5057
    %v5071 = vadd.f32 %v5054, %v5057
    %v5072 = vadd.f32 %v5055, %v5057
    %v5073 = vadd.f32 %v5056, %v5057
    %v5074 = vmax.f32 %v5058, 0.0
    %v5075 = vmax.f32 %v5059, 0.0
    %v5076 = vmax.f32 %v5060, 0.0
    %v5077 = vmax.f32 %v5061, 0.0
    %v5078 = vmax.f32 %v5062, 0.0
    %v5079 = vmax.f32 %v5063, 0.0
    %v5080 = vmax.f32 %v5064, 0.0
    %v5081 = vmax.f32 %v5065, 0.0
    %v5082 = vmax.f32 %v5066, 0.0
    %v5083 = vmax.f32 %v5067, 0.0
    %v5084 = vmax.f32 %v5068, 0.0
    %v5085 = vmax.f32 %v5069, 0.0
    %v5086 = vmax.f32 %v5070, 0.0
    %v5087 = vmax.f32 %v5071, 0.0
    %v5088 = vmax.f32 %v5072, 0.0
    %v5089 = vmax.f32 %v5073, 0.0
    %v5090 = vperm.slane %v94, 3
    %v5091 = vmul.f32 %v5074, %v5090
    %v5092 = vmul.f32 %v5075, %v5090
    %v5093 = vmul.f32 %v5076, %v5090
    %v5094 = vmul.f32 %v5077, %v5090
    %v5095 = vmul.f32 %v5078, %v5090
    %v5096 = vmul.f32 %v5079, %v5090
    %v5097 = vmul.f32 %v5080, %v5090
    %v5098 = vmul.f32 %v5081, %v5090
    %v5099 = vmul.f32 %v5082, %v5090
    %v5100 = vmul.f32 %v5083, %v5090
    %v5101 = vmul.f32 %v5084, %v5090
    %v5102 = vmul.f32 %v5085, %v5090
    %v5103 = vmul.f32 %v5086, %v5090
    %v5104 = vmul.f32 %v5087, %v5090
    %v5105 = vmul.f32 %v5088, %v5090
    %v5106 = vmul.f32 %v5089, %v5090
    %v5107 = vsel %vm297, %v5091, 0.0
    %5108 = vadd.xlane.f32.xlu0 %v5107
    %v5109 = vpop.xlane.xlu0 %5108
    %v5110 = vsel %vm297, %v5092, 0.0
    %5111 = vadd.xlane.f32.xlu0 %v5110
    %v5112 = vpop.xlane.xlu0 %5111
    %v5113 = vsel %vm297, %v5093, 0.0
    %5114 = vadd.xlane.f32.xlu0 %v5113
    %v5115 = vpop.xlane.xlu0 %5114
    %v5116 = vsel %vm297, %v5094, 0.0
    %5117 = vadd.xlane.f32.xlu0 %v5116
    %v5118 = vpop.xlane.xlu0 %5117
    %v5119 = vsel %vm297, %v5095, 0.0
    %5120 = vadd.xlane.f32.xlu0 %v5119
    %v5121 = vpop.xlane.xlu0 %5120
    %v5122 = vsel %vm297, %v5096, 0.0
    %5123 = vadd.xlane.f32.xlu0 %v5122
    %v5124 = vpop.xlane.xlu0 %5123
    %v5125 = vsel %vm297, %v5097, 0.0
    %5126 = vadd.xlane.f32.xlu0 %v5125
    %v5127 = vpop.xlane.xlu0 %5126
    %v5128 = vsel %vm297, %v5098, 0.0
    %5129 = vadd.xlane.f32.xlu0 %v5128
    %v5130 = vpop.xlane.xlu0 %5129
    %v5131 = vsel %vm297, %v5099, 0.0
    %5132 = vadd.xlane.f32.xlu0 %v5131
    %v5133 = vpop.xlane.xlu0 %5132
    %v5134 = vsel %vm297, %v5100, 0.0
    %5135 = vadd.xlane.f32.xlu0 %v5134
    %v5136 = vpop.xlane.xlu0 %5135
    %v5137 = vsel %vm297, %v5101, 0.0
    %5138 = vadd.xlane.f32.xlu0 %v5137
    %v5139 = vpop.xlane.xlu0 %5138
    %v5140 = vsel %vm297, %v5102, 0.0
    %5141 = vadd.xlane.f32.xlu0 %v5140
    %v5142 = vpop.xlane.xlu0 %5141
    %v5143 = vsel %vm297, %v5103, 0.0
    %5144 = vadd.xlane.f32.xlu0 %v5143
    %v5145 = vpop.xlane.xlu0 %5144
    %v5146 = vsel %vm297, %v5104, 0.0
    %5147 = vadd.xlane.f32.xlu0 %v5146
    %v5148 = vpop.xlane.xlu0 %5147
    %v5149 = vsel %vm297, %v5105, 0.0
    %5150 = vadd.xlane.f32.xlu0 %v5149
    %v5151 = vpop.xlane.xlu0 %5150
    %v5152 = vsel %vm297, %v5106, 0.0
    %5153 = vadd.xlane.f32.xlu0 %v5152
    %v5154 = vpop.xlane.xlu0 %5153
    %5156 = vset.pattern.permute.xlu0 0
    %5157 = vperm.xlu0 %5156, %v94
    %v5158 = vpop.permute.xlu0 %5157
    %v5159 = vperm.slane %v5158, 4
    %v5161 = vadd.f32 %v5109, %v5159
    %v5162 = vadd.f32 %v5112, %v5159
    %v5163 = vadd.f32 %v5115, %v5159
    %v5164 = vadd.f32 %v5118, %v5159
    %v5165 = vadd.f32 %v5121, %v5159
    %v5166 = vadd.f32 %v5124, %v5159
    %v5167 = vadd.f32 %v5127, %v5159
    %v5168 = vadd.f32 %v5130, %v5159
    %v5169 = vadd.f32 %v5133, %v5159
    %v5170 = vadd.f32 %v5136, %v5159
    %v5171 = vadd.f32 %v5139, %v5159
    %v5172 = vadd.f32 %v5142, %v5159
    %v5173 = vadd.f32 %v5145, %v5159
    %v5174 = vadd.f32 %v5148, %v5159
    %v5175 = vadd.f32 %v5151, %v5159
    %v5176 = vadd.f32 %v5154, %v5159
    %5193 = vset.pattern.permute.xlu0 0
    %5194 = vperm.xlu0 %5193, %v5161
    %v5195 = vpop.permute.xlu0 %5194
    %5196 = vset.pattern.permute.xlu0 0
    %5197 = vperm.xlu0 %5196, %v5162
    %v5198 = vpop.permute.xlu0 %5197
    %5199 = vset.pattern.permute.xlu0 0
    %5200 = vperm.xlu0 %5199, %v5163
    %v5201 = vpop.permute.xlu0 %5200
    %5202 = vset.pattern.permute.xlu0 0
    %5203 = vperm.xlu0 %5202, %v5164
    %v5204 = vpop.permute.xlu0 %5203
    %5205 = vset.pattern.permute.xlu0 0
    %5206 = vperm.xlu0 %5205, %v5165
    %v5207 = vpop.permute.xlu0 %5206
    %5208 = vset.pattern.permute.xlu0 0
    %5209 = vperm.xlu0 %5208, %v5166
    %v5210 = vpop.permute.xlu0 %5209
    %5211 = vset.pattern.permute.xlu0 0
    %5212 = vperm.xlu0 %5211, %v5167
    %v5213 = vpop.permute.xlu0 %5212
    %5214 = vset.pattern.permute.xlu0 0
    %5215 = vperm.xlu0 %5214, %v5168
    %v5216 = vpop.permute.xlu0 %5215
    %5217 = vset.pattern.permute.xlu0 0
    %5218 = vperm.xlu0 %5217, %v5169
    %v5219 = vpop.permute.xlu0 %5218
    %5220 = vset.pattern.permute.xlu0 0
    %5221 = vperm.xlu0 %5220, %v5170
    %v5222 = vpop.permute.xlu0 %5221
    %5223 = vset.pattern.permute.xlu0 0
    %5224 = vperm.xlu0 %5223, %v5171
    %v5225 = vpop.permute.xlu0 %5224
    %5226 = vset.pattern.permute.xlu0 0
    %5227 = vperm.xlu0 %5226, %v5172
    %v5228 = vpop.permute.xlu0 %5227
    %5229 = vset.pattern.permute.xlu0 0
    %5230 = vperm.xlu0 %5229, %v5173
    %v5231 = vpop.permute.xlu0 %5230
    %5232 = vset.pattern.permute.xlu0 0
    %5233 = vperm.xlu0 %5232, %v5174
    %v5234 = vpop.permute.xlu0 %5233
    %5235 = vset.pattern.permute.xlu0 0
    %5236 = vperm.xlu0 %5235, %v5175
    %v5237 = vpop.permute.xlu0 %5236
    %5238 = vset.pattern.permute.xlu0 0
    %5239 = vperm.xlu0 %5238, %v5176
    %v5240 = vpop.permute.xlu0 %5239
    %v5241 = vlaneseq
    %v5242 = vand.u32 %v5241, 127
    %v5243 = vperm.slane %v5195, %v5242
    %v5244 = vadd.s32 %v5242, 4294967288
    %v5245 = vperm.slane %v5198, %v5244
    %vm5246 = vcmask 130112
    %v5247 = vsel %vm5246, %v5245, %v5243
    %v5248 = vadd.s32 %v5242, 4294967280
    %v5249 = vperm.slane %v5201, %v5248
    %vm5250 = vcmask 195712
    %v5251 = vsel %vm5250, %v5249, %v5247
    %v5252 = vadd.s32 %v5242, 4294967272
    %v5253 = vperm.slane %v5204, %v5252
    %vm5254 = vcmask 261312
    %v5255 = vsel %vm5254, %v5253, %v5251
    %v5256 = vadd.s32 %v5242, 4294967264
    %v5257 = vperm.slane %v5207, %v5256
    %vm5258 = vcmask 326912
    %v5259 = vsel %vm5258, %v5257, %v5255
    %v5260 = vadd.s32 %v5242, 4294967256
    %v5261 = vperm.slane %v5210, %v5260
    %vm5262 = vcmask 392512
    %v5263 = vsel %vm5262, %v5261, %v5259
    %v5264 = vadd.s32 %v5242, 4294967248
    %v5265 = vperm.slane %v5213, %v5264
    %vm5266 = vcmask 458112
    %v5267 = vsel %vm5266, %v5265, %v5263
    %v5268 = vadd.s32 %v5242, 4294967240
    %v5269 = vperm.slane %v5216, %v5268
    %vm5270 = vcmask 523712
    %v5271 = vsel %vm5270, %v5269, %v5267
    %v5272 = vadd.s32 %v5242, 4294967232
    %v5273 = vperm.slane %v5219, %v5272
    %vm5274 = vcmask 589312
    %v5275 = vsel %vm5274, %v5273, %v5271
    %v5276 = vadd.s32 %v5242, 4294967224
    %v5277 = vperm.slane %v5222, %v5276
    %vm5278 = vcmask 654912
    %v5279 = vsel %vm5278, %v5277, %v5275
    %v5280 = vadd.s32 %v5242, 4294967216
    %v5281 = vperm.slane %v5225, %v5280
    %vm5282 = vcmask 720512
    %v5283 = vsel %vm5282, %v5281, %v5279
    %v5284 = vadd.s32 %v5242, 4294967208
    %v5285 = vperm.slane %v5228, %v5284
    %vm5286 = vcmask 786112
    %v5287 = vsel %vm5286, %v5285, %v5283
    %v5288 = vadd.s32 %v5242, 4294967200
    %v5289 = vperm.slane %v5231, %v5288
    %vm5290 = vcmask 851712
    %v5291 = vsel %vm5290, %v5289, %v5287
    %v5292 = vadd.s32 %v5242, 4294967192
    %v5293 = vperm.slane %v5234, %v5292
    %vm5294 = vcmask 917312
    %v5295 = vsel %vm5294, %v5293, %v5291
    %v5296 = vadd.s32 %v5242, 4294967184
    %v5297 = vperm.slane %v5237, %v5296
    %vm5298 = vcmask 982912
    %v5299 = vsel %vm5298, %v5297, %v5295
    %v5300 = vadd.s32 %v5242, 4294967176
    %v5301 = vperm.slane %v5240, %v5300
    %vm5302 = vcmask 1048512
    %v5303 = vsel %vm5302, %v5301, %v5299
    %5305 = vst [vmem:[#allocation7] sm:$0x1] %v5303
    // Predicated region
    $region42: #{tpu_custom_call.1} parent=1 // pred_check
      _
    $region43: #{tpu_custom_call.1} parent=1 // pred_check_branch
      %5307 = sbr.rel (0) target = $region45
    $region44: #{tpu_custom_call.1} parent=1 // pred_region
      %5309 = vsyncadd [#allocation4], 0
      %s5311 = sshll.u32 [#allocation7], 4
      %s5312 = int_to_ptr.vmem [resolvable:$true] %s5311
      %s5313 = sshll.u32 %s8, 4
      %s5314 = int_to_ptr.hbm [resolvable:$true] %s5313
      %5316 = dma.vmem_to_hbm [thread:$0]  %s5312, 16, %s5314, [#allocation4]
    $region45: #{tpu_custom_call.1} parent=1 // pred_fallthru
      _
    // Predicated region
    $region46: #{tpu_custom_call.1} parent=1 // pred_check
      _
    $region47: #{tpu_custom_call.1} parent=1 // pred_check_branch
      %5318 = sbr.rel (0) target = $region49
    $region48: #{tpu_custom_call.1} parent=1 // pred_region
      %5320 = dma.done [#allocation4], 16
    $region49: #{tpu_custom_call.1} parent=1 // pred_fallthru
      _
    %5321 = vsyncpa [#allocation3], 1
    %5322 = vsyncpa [#allocation6], 1
    %5323 = vsyncpa [#allocation4], 1

</llo_original>
